<compile_context>
chip_gen: v7x
topology: tpu7x:2x2x1
jax: 0.10.0
libtpu: 0.0.40
codegen_flags: <defaults>
</compile_context>

<pallas_src>
import functools

import jax
import jax.numpy as jnp
from jax.experimental import pallas as pl
from jax.experimental.pallas import tpu as pltpu


# ----------------------------------------------------------------------------
# Fused forward kernel: one grid step == one image.
# ----------------------------------------------------------------------------
def _fused_forward_kernel(xp_ref, tgt_ref, w1t_ref, b1t_ref, w2_ref, b2_ref,
                          o_task_ref, o_dist_ref, featp_ref,
                          *, H, W, Cin, Cmid, Cout):
    # ---- in-kernel im2col of the (already zero-padded) NHWC input ----------
    xp = xp_ref[0]                                       # (H+2, W+2, Cin)
    taps = [xp[i:i + H, j:j + W, :].reshape(H * W, Cin)
            for i in range(3) for j in range(3)]
    patches = jnp.concatenate(taps, axis=1)              # (H*W, 9*Cin)

    # ---- conv1 (student) and teacher conv share the patches: their weights
    #      are concatenated along the output-channel axis -> one matmul ------
    fused = jnp.dot(patches, w1t_ref[...],
                    preferred_element_type=jnp.float32) + b1t_ref[...]
    fused = jnp.maximum(fused, 0.0)                      # ReLU on both halves
    feat1 = fused[:, :Cmid]                              # student feature
    teach = fused[:, Cmid:]                              # teacher feature

    # ---- distillation SSE fused into the epilogue ---------------------------
    dd = feat1 - teach
    o_dist_ref[...] = jnp.zeros_like(o_dist_ref) + jnp.sum(dd * dd)

    # ---- conv2 on the student feature: zero-pad halo in VMEM scratch --------
    featp_ref[...] = jnp.zeros_like(featp_ref)
    featp_ref[1:H + 1, 1:W + 1, :] = feat1.reshape(H, W, Cmid)
    fp = featp_ref[...]                                  # (H+2, W+2, Cmid)
    taps2 = [fp[i:i + H, j:j + W, :].reshape(H * W, Cmid)
             for i in range(3) for j in range(3)]
    patches2 = jnp.concatenate(taps2, axis=1)            # (H*W, 9*Cmid)
    out = jnp.dot(patches2, w2_ref[...],
                  preferred_element_type=jnp.float32) + b2_ref[...]   # (H*W, Cout)

    # ---- task SSE fused into the epilogue ------------------------------------
    td = out - tgt_ref[0].reshape(H * W, Cout)
    o_task_ref[...] = jnp.zeros_like(o_task_ref) + jnp.sum(td * td)


def fused_forward_sse(xp_nhwc, tgt_nhwc, w1t, b1t, w2, b2):
    """Returns per-image (task_sse, distill_sse), each shaped (N, 1, 1)."""
    N, Hp2, Wp2, Cin = xp_nhwc.shape
    H, W = Hp2 - 2, Wp2 - 2
    Cout = w2.shape[1]
    Cmid = w1t.shape[1] // 2
    kernel = functools.partial(_fused_forward_kernel,
                               H=H, W=W, Cin=Cin, Cmid=Cmid, Cout=Cout)
    return pl.pallas_call(
        kernel,
        out_shape=(jax.ShapeDtypeStruct((N, 1, 1), jnp.float32),
                   jax.ShapeDtypeStruct((N, 1, 1), jnp.float32)),
        grid_spec=pltpu.PrefetchScalarGridSpec(
            num_scalar_prefetch=0,
            grid=(N,),
            in_specs=[
                pl.BlockSpec((1, H + 2, W + 2, Cin), lambda n: (n, 0, 0, 0)),
                pl.BlockSpec((1, H, W, Cout), lambda n: (n, 0, 0, 0)),
                pl.BlockSpec((9 * Cin, 2 * Cmid), lambda n: (0, 0)),
                pl.BlockSpec((1, 2 * Cmid), lambda n: (0, 0)),
                pl.BlockSpec((9 * Cmid, Cout), lambda n: (0, 0)),
                pl.BlockSpec((1, Cout), lambda n: (0, 0)),
            ],
            out_specs=(
                pl.BlockSpec((1, 1, 1), lambda n: (n, 0, 0)),
                pl.BlockSpec((1, 1, 1), lambda n: (n, 0, 0)),
            ),
            scratch_shapes=[pltpu.VMEM((H + 2, W + 2, Cmid), jnp.float32)],
        ),
        compiler_params=pltpu.CompilerParams(
            dimension_semantics=("parallel",)),   # v7x: one image per TensorCore
    )(xp_nhwc, tgt_nhwc, w1t, b1t, w2, b2)


# ----------------------------------------------------------------------------
# Parameter handling
# ----------------------------------------------------------------------------
def init_params(key, cin=4, cmid=8, cout=4):
    ks = jax.random.split(key, 6)
    s = 0.1
    return {
        "conv1_w": s * jax.random.normal(ks[0], (cmid, cin, 3, 3), jnp.float32),
        "conv1_b": s * jax.random.normal(ks[1], (cmid,), jnp.float32),
        "conv2_w": s * jax.random.normal(ks[2], (cout, cmid, 3, 3), jnp.float32),
        "conv2_b": s * jax.random.normal(ks[3], (cout,), jnp.float32),
        # frozen teacher used by guidance_loss (distillation target)
        "teacher_w": s * jax.random.normal(ks[4], (cmid, cin, 3, 3), jnp.float32),
        "teacher_b": s * jax.random.normal(ks[5], (cmid,), jnp.float32),
    }


def _w_oihw_to_2d(w):
    """(O, I, 3, 3) PyTorch layout -> (9*I, O); row = (kh*3+kw)*I + i,
    matching the in-kernel tap/patch column order."""
    o, i = w.shape[0], w.shape[1]
    return jnp.transpose(w, (2, 3, 1, 0)).reshape(9 * i, o)


def _pack_params(params):
    cmid = params["conv1_w"].shape[0]
    cout = params["conv2_w"].shape[0]
    # student conv1 and teacher conv concatenated along the output-channel axis
    w1t = jnp.concatenate(
        [_w_oihw_to_2d(params["conv1_w"]), _w_oihw_to_2d(params["teacher_w"])],
        axis=1)                                            # (9*Cin, 2*Cmid)
    b1t = jnp.concatenate(
        [params["conv1_b"], params["teacher_b"]]).reshape(1, 2 * cmid)
    w2 = _w_oihw_to_2d(params["conv2_w"])                  # (9*Cmid, Cout)
    b2 = params["conv2_b"].reshape(1, cout)
    return w1t, b1t, w2, b2


# ----------------------------------------------------------------------------
# ModelWithLoss forward (mirrors ModelWithLoss.forward for one batch element)
# ----------------------------------------------------------------------------
@jax.jit
def model_with_loss_forward(params, batch_input, batch_target):
    N, Cin, H, W = batch_input.shape
    Cmid = params["conv1_w"].shape[0]
    Cout = params["conv2_w"].shape[0]

    w1t, b1t, w2, b2 = _pack_params(params)

    # NCHW (PyTorch API) -> NHWC once at the boundary; everything downstream
    # stays NHWC and never leaves VMEM except two scalars per image.
    x_nhwc = jnp.transpose(batch_input, (0, 2, 3, 1))
    t_nhwc = jnp.transpose(batch_target, (0, 2, 3, 1))
    xp = jnp.pad(x_nhwc, ((0, 0), (1, 1), (1, 1), (0, 0)))

    task_sse, dist_sse = fused_forward_sse(xp, t_nhwc, w1t, b1t, w2, b2)

    loss_task = jnp.sum(task_sse) / jnp.float32(N * H * W * Cout)
    loss_distill = jnp.sum(dist_sse) / jnp.float32(N * H * W * Cmid)
    scalar_status = {"task": loss_task, "distill": loss_distill}
    loss = loss_task + loss_distill
    return loss, scalar_status


# ----------------------------------------------------------------------------
# Pure-JAX reference (for correctness check only)
# ----------------------------------------------------------------------------
def _conv3x3_ref(x_nchw, w, b, relu):
    out = jax.lax.conv_general_dilated(
        x_nchw, w, window_strides=(1, 1), padding="SAME",
        dimension_numbers=("NCHW", "OIHW", "NCHW"),
        precision=jax.lax.Precision.HIGHEST)
    out = out + b.reshape(1, -1, 1, 1)
    return jnp.maximum(out, 0.0) if relu else out


def _forward_ref(params, x, tgt):
    f1 = _conv3x3_ref(x, params["conv1_w"], params["conv1_b"], True)
    out = _conv3x3_ref(f1, params["conv2_w"], params["conv2_b"], False)
    tf = _conv3x3_ref(x, params["teacher_w"], params["teacher_b"], True)
    lt = jnp.mean((out - tgt) ** 2)
    ld = jnp.mean((f1 - tf) ** 2)
    return lt + ld, {"task": lt, "distill": ld}


if __name__ == "__main__":
    key = jax.random.PRNGKey(0)
    k_params, k_in, k_tgt = jax.random.split(key, 3)

    # small shapes: batch=2, channels=4, spatial=16 (NCHW, PyTorch convention)
    x = jax.random.normal(k_in, (2, 4, 16, 16), jnp.float32)
    target = jax.random.normal(k_tgt, (2, 4, 16, 16), jnp.float32)
    params = init_params(k_params, cin=4, cmid=8, cout=4)

    loss, status = model_with_loss_forward(params, x, target)
    loss = jax.block_until_ready(loss)
    status = jax.tree_util.tree_map(jax.block_until_ready, status)

    loss_ref, status_ref = _forward_ref(params, x, target)

    assert loss.shape == () and jnp.isfinite(loss)
    assert set(status.keys()) == {"task", "distill"}
    assert jnp.allclose(loss, loss_ref, rtol=1e-2, atol=1e-5)
    assert jnp.allclose(status["task"], status_ref["task"], rtol=1e-2, atol=1e-5)
    assert jnp.allclose(status["distill"], status_ref["distill"], rtol=1e-2, atol=1e-5)
    print("KERNEL_OK")
</pallas_src>

<mosaic_0001>
module attributes {stable_mosaic.version = 11 : i64} {
  func.func @_fused_forward_kernel(%arg0: i32, %arg1: memref<1x18x18x4xf32, #tpu.memory_space<vmem>>, %arg2: memref<1x16x16x4xf32, #tpu.memory_space<vmem>>, %arg3: memref<36x16xf32, #tpu.memory_space<vmem>>, %arg4: memref<1x16xf32, #tpu.memory_space<vmem>>, %arg5: memref<72x4xf32, #tpu.memory_space<vmem>>, %arg6: memref<1x4xf32, #tpu.memory_space<vmem>>, %arg7: memref<1x1x1xf32, #tpu.memory_space<vmem>>, %arg8: memref<1x1x1xf32, #tpu.memory_space<vmem>>, %arg9: memref<18x18x8xf32, #tpu.memory_space<vmem>>) attributes {dimension_semantics = [#tpu.dimension_semantics<parallel>], iteration_bounds = array<i64: 2>, scalar_prefetch = 0 : i64, scratch_operands = 1 : i64, tpu.core_type = #tpu.core_type<tc>, window_params = [{transform_indices = @transform_0, window_bounds = array<i64: 1, 18, 18, 4>}, {transform_indices = @transform_1, window_bounds = array<i64: 1, 16, 16, 4>}, {pipeline_mode = #tpu.pipeline_mode<synchronous>, transform_indices = @transform_2, window_bounds = array<i64: 36, 16>}, {pipeline_mode = #tpu.pipeline_mode<synchronous>, transform_indices = @transform_3, window_bounds = array<i64: 1, 16>}, {pipeline_mode = #tpu.pipeline_mode<synchronous>, transform_indices = @transform_4, window_bounds = array<i64: 72, 4>}, {pipeline_mode = #tpu.pipeline_mode<synchronous>, transform_indices = @transform_5, window_bounds = array<i64: 1, 4>}, {transform_indices = @transform_6, window_bounds = array<i64: 1, 1, 1>}, {transform_indices = @transform_7, window_bounds = array<i64: 1, 1, 1>}]} {
    %c0 = arith.constant 0 : index
    %c0_0 = arith.constant 0 : index
    %c0_1 = arith.constant 0 : index
    %c0_2 = arith.constant 0 : index
    %0 = vector.load %arg1[%c0, %c0_0, %c0_1, %c0_2] : memref<1x18x18x4xf32, #tpu.memory_space<vmem>>, vector<1x18x18x4xf32>
    %1 = vector.shape_cast %0 : vector<1x18x18x4xf32> to vector<18x18x4xf32>
    %2 = vector.extract_strided_slice %1 {offsets = [0, 0, 0], sizes = [16, 16, 4], strides = [1, 1, 1]} : vector<18x18x4xf32> to vector<16x16x4xf32>
    %3 = vector.shape_cast %2 : vector<16x16x4xf32> to vector<256x4xf32>
    %4 = vector.extract_strided_slice %1 {offsets = [0, 1, 0], sizes = [16, 16, 4], strides = [1, 1, 1]} : vector<18x18x4xf32> to vector<16x16x4xf32>
    %5 = vector.shape_cast %4 : vector<16x16x4xf32> to vector<256x4xf32>
    %6 = vector.extract_strided_slice %1 {offsets = [0, 2, 0], sizes = [16, 16, 4], strides = [1, 1, 1]} : vector<18x18x4xf32> to vector<16x16x4xf32>
    %7 = vector.shape_cast %6 : vector<16x16x4xf32> to vector<256x4xf32>
    %8 = vector.extract_strided_slice %1 {offsets = [1, 0, 0], sizes = [16, 16, 4], strides = [1, 1, 1]} : vector<18x18x4xf32> to vector<16x16x4xf32>
    %9 = vector.shape_cast %8 : vector<16x16x4xf32> to vector<256x4xf32>
    %10 = vector.extract_strided_slice %1 {offsets = [1, 1, 0], sizes = [16, 16, 4], strides = [1, 1, 1]} : vector<18x18x4xf32> to vector<16x16x4xf32>
    %11 = vector.shape_cast %10 : vector<16x16x4xf32> to vector<256x4xf32>
    %12 = vector.extract_strided_slice %1 {offsets = [1, 2, 0], sizes = [16, 16, 4], strides = [1, 1, 1]} : vector<18x18x4xf32> to vector<16x16x4xf32>
    %13 = vector.shape_cast %12 : vector<16x16x4xf32> to vector<256x4xf32>
    %14 = vector.extract_strided_slice %1 {offsets = [2, 0, 0], sizes = [16, 16, 4], strides = [1, 1, 1]} : vector<18x18x4xf32> to vector<16x16x4xf32>
    %15 = vector.shape_cast %14 : vector<16x16x4xf32> to vector<256x4xf32>
    %16 = vector.extract_strided_slice %1 {offsets = [2, 1, 0], sizes = [16, 16, 4], strides = [1, 1, 1]} : vector<18x18x4xf32> to vector<16x16x4xf32>
    %17 = vector.shape_cast %16 : vector<16x16x4xf32> to vector<256x4xf32>
    %18 = vector.extract_strided_slice %1 {offsets = [2, 2, 0], sizes = [16, 16, 4], strides = [1, 1, 1]} : vector<18x18x4xf32> to vector<16x16x4xf32>
    %19 = vector.shape_cast %18 : vector<16x16x4xf32> to vector<256x4xf32>
    %20 = tpu.concatenate %3, %5, %7, %9, %11, %13, %15, %17, %19 in 1 : vector<256x4xf32>, vector<256x4xf32>, vector<256x4xf32>, vector<256x4xf32>, vector<256x4xf32>, vector<256x4xf32>, vector<256x4xf32>, vector<256x4xf32>, vector<256x4xf32> -> vector<256x36xf32>
    %c0_3 = arith.constant 0 : index
    %c0_4 = arith.constant 0 : index
    %21 = vector.load %arg3[%c0_3, %c0_4] : memref<36x16xf32, #tpu.memory_space<vmem>>, vector<36x16xf32>
    %cst = arith.constant dense<0.000000e+00> : vector<256x16xf32>
    %22 = tpu.matmul %20, %21, %cst {dimension_numbers = #tpu.dot_dimension_numbers<[1], [0], [0], [1], [0, 0, 1, 1], [], []>} : vector<256x36xf32>, vector<36x16xf32>, vector<256x16xf32> -> vector<256x16xf32>
    %c0_5 = arith.constant 0 : index
    %c0_6 = arith.constant 0 : index
    %23 = vector.load %arg4[%c0_5, %c0_6] : memref<1x16xf32, #tpu.memory_space<vmem>>, vector<1x16xf32>
    %24 = vector.broadcast %23 : vector<1x16xf32> to vector<256x16xf32>
    %25 = arith.addf %22, %24 : vector<256x16xf32>
    %cst_7 = arith.constant 0.000000e+00 : f32
    %26 = vector.broadcast %cst_7 : f32 to vector<256x16xf32>
    %27 = arith.maximumf %25, %26 : vector<256x16xf32>
    %28 = vector.extract_strided_slice %27 {offsets = [0, 0], sizes = [256, 8], strides = [1, 1]} : vector<256x16xf32> to vector<256x8xf32>
    %29 = vector.extract_strided_slice %27 {offsets = [0, 8], sizes = [256, 8], strides = [1, 1]} : vector<256x16xf32> to vector<256x8xf32>
    %30 = arith.subf %28, %29 : vector<256x8xf32>
    %cst_8 = arith.constant 0.000000e+00 : f32
    %31 = vector.broadcast %cst_8 : f32 to vector<1x1x1xf32>
    %32 = arith.mulf %30, %30 : vector<256x8xf32>
    %33 = vector.shape_cast %32 : vector<256x8xf32> to vector<1x256x8xf32>
    %cst_9 = arith.constant dense<0.000000e+00> : vector<1xf32>
    %34 = vector.multi_reduction <add>, %33, %cst_9 [1, 2] : vector<1x256x8xf32> to vector<1xf32>
    %35 = vector.shape_cast %34 : vector<1xf32> to vector<1x1x1xf32>
    %36 = vector.extract %35[0, 0, 0] : f32 from vector<1x1x1xf32>
    %37 = vector.broadcast %36 : f32 to vector<1x1x1xf32>
    %38 = arith.addf %31, %37 : vector<1x1x1xf32>
    %c0_10 = arith.constant 0 : index
    %c0_11 = arith.constant 0 : index
    %c0_12 = arith.constant 0 : index
    %39 = vector.load %arg8[%c0_10, %c0_11, %c0_12] : memref<1x1x1xf32, #tpu.memory_space<vmem>>, vector<1x1x1xf32>
    tpu.vector_store %arg8[%c0_10, %c0_11, %c0_12], %38 {strides = array<i32>} : memref<1x1x1xf32, #tpu.memory_space<vmem>>, vector<1x1x1xf32>,
    %cst_13 = arith.constant 0.000000e+00 : f32
    %40 = vector.broadcast %cst_13 : f32 to vector<18x18x8xf32>
    %c0_14 = arith.constant 0 : index
    %c0_15 = arith.constant 0 : index
    %c0_16 = arith.constant 0 : index
    %41 = vector.load %arg9[%c0_14, %c0_15, %c0_16] : memref<18x18x8xf32, #tpu.memory_space<vmem>>, vector<18x18x8xf32>
    tpu.vector_store %arg9[%c0_14, %c0_15, %c0_16], %40 {strides = array<i32>} : memref<18x18x8xf32, #tpu.memory_space<vmem>>, vector<18x18x8xf32>,
    %42 = vector.shape_cast %28 : vector<256x8xf32> to vector<16x16x8xf32>
    %c1 = arith.constant 1 : index
    %c1_17 = arith.constant 1 : index
    %c0_18 = arith.constant 0 : index
    %43 = vector.load %arg9[%c1, %c1_17, %c0_18] : memref<18x18x8xf32, #tpu.memory_space<vmem>>, vector<16x16x8xf32>
    tpu.vector_store %arg9[%c1, %c1_17, %c0_18], %42 {strides = array<i32>} : memref<18x18x8xf32, #tpu.memory_space<vmem>>, vector<16x16x8xf32>,
    %c0_19 = arith.constant 0 : index
    %c0_20 = arith.constant 0 : index
    %c0_21 = arith.constant 0 : index
    %44 = vector.load %arg9[%c0_19, %c0_20, %c0_21] : memref<18x18x8xf32, #tpu.memory_space<vmem>>, vector<18x18x8xf32>
    %45 = vector.extract_strided_slice %44 {offsets = [0, 0, 0], sizes = [16, 16, 8], strides = [1, 1, 1]} : vector<18x18x8xf32> to vector<16x16x8xf32>
    %46 = vector.shape_cast %45 : vector<16x16x8xf32> to vector<256x8xf32>
    %47 = vector.extract_strided_slice %44 {offsets = [0, 1, 0], sizes = [16, 16, 8], strides = [1, 1, 1]} : vector<18x18x8xf32> to vector<16x16x8xf32>
    %48 = vector.shape_cast %47 : vector<16x16x8xf32> to vector<256x8xf32>
    %49 = vector.extract_strided_slice %44 {offsets = [0, 2, 0], sizes = [16, 16, 8], strides = [1, 1, 1]} : vector<18x18x8xf32> to vector<16x16x8xf32>
    %50 = vector.shape_cast %49 : vector<16x16x8xf32> to vector<256x8xf32>
    %51 = vector.extract_strided_slice %44 {offsets = [1, 0, 0], sizes = [16, 16, 8], strides = [1, 1, 1]} : vector<18x18x8xf32> to vector<16x16x8xf32>
    %52 = vector.shape_cast %51 : vector<16x16x8xf32> to vector<256x8xf32>
    %53 = vector.extract_strided_slice %44 {offsets = [1, 1, 0], sizes = [16, 16, 8], strides = [1, 1, 1]} : vector<18x18x8xf32> to vector<16x16x8xf32>
    %54 = vector.shape_cast %53 : vector<16x16x8xf32> to vector<256x8xf32>
    %55 = vector.extract_strided_slice %44 {offsets = [1, 2, 0], sizes = [16, 16, 8], strides = [1, 1, 1]} : vector<18x18x8xf32> to vector<16x16x8xf32>
    %56 = vector.shape_cast %55 : vector<16x16x8xf32> to vector<256x8xf32>
    %57 = vector.extract_strided_slice %44 {offsets = [2, 0, 0], sizes = [16, 16, 8], strides = [1, 1, 1]} : vector<18x18x8xf32> to vector<16x16x8xf32>
    %58 = vector.shape_cast %57 : vector<16x16x8xf32> to vector<256x8xf32>
    %59 = vector.extract_strided_slice %44 {offsets = [2, 1, 0], sizes = [16, 16, 8], strides = [1, 1, 1]} : vector<18x18x8xf32> to vector<16x16x8xf32>
    %60 = vector.shape_cast %59 : vector<16x16x8xf32> to vector<256x8xf32>
    %61 = vector.extract_strided_slice %44 {offsets = [2, 2, 0], sizes = [16, 16, 8], strides = [1, 1, 1]} : vector<18x18x8xf32> to vector<16x16x8xf32>
    %62 = vector.shape_cast %61 : vector<16x16x8xf32> to vector<256x8xf32>
    %63 = tpu.concatenate %46, %48, %50, %52, %54, %56, %58, %60, %62 in 1 : vector<256x8xf32>, vector<256x8xf32>, vector<256x8xf32>, vector<256x8xf32>, vector<256x8xf32>, vector<256x8xf32>, vector<256x8xf32>, vector<256x8xf32>, vector<256x8xf32> -> vector<256x72xf32>
    %c0_22 = arith.constant 0 : index
    %c0_23 = arith.constant 0 : index
    %64 = vector.load %arg5[%c0_22, %c0_23] : memref<72x4xf32, #tpu.memory_space<vmem>>, vector<72x4xf32>
    %cst_24 = arith.constant dense<0.000000e+00> : vector<256x4xf32>
    %65 = tpu.matmul %63, %64, %cst_24 {dimension_numbers = #tpu.dot_dimension_numbers<[1], [0], [0], [1], [0, 0, 1, 1], [], []>} : vector<256x72xf32>, vector<72x4xf32>, vector<256x4xf32> -> vector<256x4xf32>
    %c0_25 = arith.constant 0 : index
    %c0_26 = arith.constant 0 : index
    %66 = vector.load %arg6[%c0_25, %c0_26] : memref<1x4xf32, #tpu.memory_space<vmem>>, vector<1x4xf32>
    %67 = vector.broadcast %66 : vector<1x4xf32> to vector<256x4xf32>
    %68 = arith.addf %65, %67 : vector<256x4xf32>
    %c0_27 = arith.constant 0 : index
    %c0_28 = arith.constant 0 : index
    %c0_29 = arith.constant 0 : index
    %c0_30 = arith.constant 0 : index
    %69 = vector.load %arg2[%c0_27, %c0_28, %c0_29, %c0_30] : memref<1x16x16x4xf32, #tpu.memory_space<vmem>>, vector<1x16x16x4xf32>
    %70 = vector.shape_cast %69 : vector<1x16x16x4xf32> to vector<16x16x4xf32>
    %71 = vector.shape_cast %70 : vector<16x16x4xf32> to vector<256x4xf32>
    %72 = arith.subf %68, %71 : vector<256x4xf32>
    %cst_31 = arith.constant 0.000000e+00 : f32
    %73 = vector.broadcast %cst_31 : f32 to vector<1x1x1xf32>
    %74 = arith.mulf %72, %72 : vector<256x4xf32>
    %75 = vector.shape_cast %74 : vector<256x4xf32> to vector<1x256x4xf32>
    %cst_32 = arith.constant dense<0.000000e+00> : vector<1xf32>
    %76 = vector.multi_reduction <add>, %75, %cst_32 [1, 2] : vector<1x256x4xf32> to vector<1xf32>
    %77 = vector.shape_cast %76 : vector<1xf32> to vector<1x1x1xf32>
    %78 = vector.extract %77[0, 0, 0] : f32 from vector<1x1x1xf32>
    %79 = vector.broadcast %78 : f32 to vector<1x1x1xf32>
    %80 = arith.addf %73, %79 : vector<1x1x1xf32>
    %c0_33 = arith.constant 0 : index
    %c0_34 = arith.constant 0 : index
    %c0_35 = arith.constant 0 : index
    %81 = vector.load %arg7[%c0_33, %c0_34, %c0_35] : memref<1x1x1xf32, #tpu.memory_space<vmem>>, vector<1x1x1xf32>
    tpu.vector_store %arg7[%c0_33, %c0_34, %c0_35], %80 {strides = array<i32>} : memref<1x1x1xf32, #tpu.memory_space<vmem>>, vector<1x1x1xf32>,
    return
  }
  func.func @transform_0(%arg0: i32) -> (i32, i32, i32, i32) {
    %c0_i32 = arith.constant 0 : i32
    %c0_i32_0 = arith.constant 0 : i32
    %c0_i32_1 = arith.constant 0 : i32
    %c0_i32_2 = arith.constant 0 : i32
    return %arg0, %c0_i32, %c0_i32_0, %c0_i32_1 : i32, i32, i32, i32
  }
  func.func @transform_1(%arg0: i32) -> (i32, i32, i32, i32) {
    %c0_i32 = arith.constant 0 : i32
    %c0_i32_0 = arith.constant 0 : i32
    %c0_i32_1 = arith.constant 0 : i32
    %c0_i32_2 = arith.constant 0 : i32
    return %arg0, %c0_i32, %c0_i32_0, %c0_i32_1 : i32, i32, i32, i32
  }
  func.func @transform_2(%arg0: i32) -> (i32, i32) {
    %c0_i32 = arith.constant 0 : i32
    %c0_i32_0 = arith.constant 0 : i32
    %c0_i32_1 = arith.constant 0 : i32
    return %c0_i32, %c0_i32_0 : i32, i32
  }
  func.func @transform_3(%arg0: i32) -> (i32, i32) {
    %c0_i32 = arith.constant 0 : i32
    %c0_i32_0 = arith.constant 0 : i32
    %c0_i32_1 = arith.constant 0 : i32
    return %c0_i32, %c0_i32_0 : i32, i32
  }
  func.func @transform_4(%arg0: i32) -> (i32, i32) {
    %c0_i32 = arith.constant 0 : i32
    %c0_i32_0 = arith.constant 0 : i32
    %c0_i32_1 = arith.constant 0 : i32
    return %c0_i32, %c0_i32_0 : i32, i32
  }
  func.func @transform_5(%arg0: i32) -> (i32, i32) {
    %c0_i32 = arith.constant 0 : i32
    %c0_i32_0 = arith.constant 0 : i32
    %c0_i32_1 = arith.constant 0 : i32
    return %c0_i32, %c0_i32_0 : i32, i32
  }
  func.func @transform_6(%arg0: i32) -> (i32, i32, i32) {
    %c0_i32 = arith.constant 0 : i32
    %c0_i32_0 = arith.constant 0 : i32
    %c0_i32_1 = arith.constant 0 : i32
    return %arg0, %c0_i32, %c0_i32_0 : i32, i32, i32
  }
  func.func @transform_7(%arg0: i32) -> (i32, i32, i32) {
    %c0_i32 = arith.constant 0 : i32
    %c0_i32_0 = arith.constant 0 : i32
    %c0_i32_1 = arith.constant 0 : i32
    return %arg0, %c0_i32, %c0_i32_0 : i32, i32, i32
  }
}

</mosaic_0001>

<llo_original>
// kernel: model_with_loss_forward.1
$region0: #{model_with_loss_forward.1}
  #allocation0 [shape = 'u32[]', space=smem, size = 0x4, offset = 0x4, fixed_abs, tag = 'smem constant byte address 0x4 - core index']
  #allocation1 [shape = 'u32[144,128]{1,0:T(1,128)}', space=vmem, size = 0x12000, scoped, tag = 'internal scratch']
  #allocation2 [shape = 'f32[18,18,8]{2,1,0:T(8,128)}', space=vmem, size = 0x36000, scoped, tag = 'scratch operand']
  %s0 = inlined_call_operand.vmem [shape: f32[2,18,18,4], index: 0, kind: input, shape index: {}]
  %s1 = inlined_call_operand.vmem [shape: f32[2,16,16,4], index: 1, kind: input, shape index: {}]
  %s2 = inlined_call_operand.vmem [shape: f32[36,16], index: 2, kind: input, shape index: {}]
  %s3 = inlined_call_operand.vmem [shape: f32[1,16], index: 3, kind: input, shape index: {}]
  %s4 = inlined_call_operand.vmem [shape: f32[72,4], index: 4, kind: input, shape index: {}]
  %s5 = inlined_call_operand.vmem [shape: f32[1,4], index: 5, kind: input, shape index: {}]
  %s6 = inlined_call_operand.vmem [shape: f32[2,1,1], index: 6, kind: output, shape index: {0}]
  %s7 = inlined_call_operand.vmem [shape: f32[2,1,1], index: 7, kind: output, shape index: {1}]
  %8 = xla_tuple %s6, %s7
  %s9 = sld [smem:[#allocation0]]
  $region65: #{model_with_loss_forward.1} parent=0
    _
  %s11 = ssub.s32 1, %s9
  %s12 = scalar_select 0, %s11, %s9
  loop: start=0, step=1, limit=4
  $region2: #{model_with_loss_forward.1} parent=0 // loop_pre_header
    _
  $region3: #{model_with_loss_forward.1} parent=0 // loop_header
    %s14 = sphi 0, %s18
    %p15 = scmp.ge.s32.totalorder %s14, 4
    %s24 = sphi 0, %s26
    %s27 = sphi 0, %s24
    %s28 = sphi 0, %s27
    %s44 = sphi 0, %s28
    %s50 = sphi 0, %s52
    %s53 = sphi 0, %s50
    %s54 = sphi 0, %s53
    %s70 = sphi 0, %s54
    %s74 = sphi 0, %s74
    %s76 = sphi 0, %s74
    %s77 = sphi 0, %s76
    %s91 = sphi 0, %s77
    %s95 = sphi 0, %s95
    %s97 = sphi 0, %s95
    %s98 = sphi 0, %s97
    %s112 = sphi 0, %s98
    %s116 = sphi 0, %s116
    %s118 = sphi 0, %s116
    %s119 = sphi 0, %s118
    %s133 = sphi 0, %s119
    %s137 = sphi 0, %s137
    %s139 = sphi 0, %s137
    %s140 = sphi 0, %s139
    %s154 = sphi 0, %s140
    %s160 = sphi 0, %s162
    %s163 = sphi 0, %s160
    %s164 = sphi 0, %s163
    %s180 = sphi 0, %s164
    %s186 = sphi 0, %s188
    %s189 = sphi 0, %s186
    %s190 = sphi 0, %s189
    %s206 = sphi 0, %s190
  $region4: #{model_with_loss_forward.1} parent=0 // loop_header_branch
    %17 = sbr.rel (%p15) target = $region8
  $region5: #{model_with_loss_forward.1} parent=0 // loop_body
    %s19 = ssub.s32 %s14, 1
    %s20 = ssub.s32 %s14, 2
    %s21 = sadd.s32 %s14, 1
    %s22 = ssub.s32 %s14, %s21
    %p23 = scmp.eq.s32.totalorder %s22, 0
    %s25 = sadd.s32 %s24, 1
    %s26 = scalar_select %p23, %s24, %s25
    %p29 = pneg %p23
    %p30 = scmp.eq.s32.totalorder %s14, 1
    %p31 = por %p29, %p30
    %p32 = scmp.ne.s32.totalorder %s24, %s27
    %p33 = scmp.eq.s32.totalorder %s14, 0
    %p34 = por %p32, %p33
    %p35 = scmp.ne.s32.totalorder %s24, %s27
    %p36 = scmp.eq.s32.totalorder %s19, 1
    %p37 = por %p35, %p36
    %p38 = scmp.ne.s32.totalorder %s27, %s28
    %p39 = scmp.eq.s32.totalorder %s19, 0
    %p40 = por %p38, %p39
    %p41 = scmp.ne.s32.totalorder %s27, %s28
    %p42 = scmp.eq.s32.totalorder %s20, 1
    %p43 = por %p41, %p42
    %p45 = scmp.ne.s32.totalorder %s28, %s44
    %p46 = scmp.eq.s32.totalorder %s20, 0
    %p47 = por %p45, %p46
    %s48 = ssub.s32 %s14, %s21
    %p49 = scmp.eq.s32.totalorder %s48, 0
    %s51 = sadd.s32 %s50, 1
    %s52 = scalar_select %p49, %s50, %s51
    %p55 = pneg %p49
    %p56 = scmp.eq.s32.totalorder %s14, 1
    %p57 = por %p55, %p56
    %p58 = scmp.ne.s32.totalorder %s50, %s53
    %p59 = scmp.eq.s32.totalorder %s14, 0
    %p60 = por %p58, %p59
    %p61 = scmp.ne.s32.totalorder %s50, %s53
    %p62 = scmp.eq.s32.totalorder %s19, 1
    %p63 = por %p61, %p62
    %p64 = scmp.ne.s32.totalorder %s53, %s54
    %p65 = scmp.eq.s32.totalorder %s19, 0
    %p66 = por %p64, %p65
    %p67 = scmp.ne.s32.totalorder %s53, %s54
    %p68 = scmp.eq.s32.totalorder %s20, 1
    %p69 = por %p67, %p68
    %p71 = scmp.ne.s32.totalorder %s54, %s70
    %p72 = scmp.eq.s32.totalorder %s20, 0
    %p73 = por %p71, %p72
    %s75 = sadd.s32 %s74, 1
    %p78 = scmp.eq.s32.totalorder %s14, 1
    %p79 = scmp.ne.s32.totalorder %s74, %s76
    %p80 = scmp.eq.s32.totalorder %s14, 0
    %p81 = por %p79, %p80
    %p82 = scmp.ne.s32.totalorder %s74, %s76
    %p83 = scmp.eq.s32.totalorder %s19, 1
    %p84 = por %p82, %p83
    %p85 = scmp.ne.s32.totalorder %s76, %s77
    %p86 = scmp.eq.s32.totalorder %s19, 0
    %p87 = por %p85, %p86
    %p88 = scmp.ne.s32.totalorder %s76, %s77
    %p89 = scmp.eq.s32.totalorder %s20, 1
    %p90 = por %p88, %p89
    %p92 = scmp.ne.s32.totalorder %s77, %s91
    %p93 = scmp.eq.s32.totalorder %s20, 0
    %p94 = por %p92, %p93
    %s96 = sadd.s32 %s95, 1
    %p99 = scmp.eq.s32.totalorder %s14, 1
    %p100 = scmp.ne.s32.totalorder %s95, %s97
    %p101 = scmp.eq.s32.totalorder %s14, 0
    %p102 = por %p100, %p101
    %p103 = scmp.ne.s32.totalorder %s95, %s97
    %p104 = scmp.eq.s32.totalorder %s19, 1
    %p105 = por %p103, %p104
    %p106 = scmp.ne.s32.totalorder %s97, %s98
    %p107 = scmp.eq.s32.totalorder %s19, 0
    %p108 = por %p106, %p107
    %p109 = scmp.ne.s32.totalorder %s97, %s98
    %p110 = scmp.eq.s32.totalorder %s20, 1
    %p111 = por %p109, %p110
    %p113 = scmp.ne.s32.totalorder %s98, %s112
    %p114 = scmp.eq.s32.totalorder %s20, 0
    %p115 = por %p113, %p114
    %s117 = sadd.s32 %s116, 1
    %p120 = scmp.eq.s32.totalorder %s14, 1
    %p121 = scmp.ne.s32.totalorder %s116, %s118
    %p122 = scmp.eq.s32.totalorder %s14, 0
    %p123 = por %p121, %p122
    %p124 = scmp.ne.s32.totalorder %s116, %s118
    %p125 = scmp.eq.s32.totalorder %s19, 1
    %p126 = por %p124, %p125
    %p127 = scmp.ne.s32.totalorder %s118, %s119
    %p128 = scmp.eq.s32.totalorder %s19, 0
    %p129 = por %p127, %p128
    %p130 = scmp.ne.s32.totalorder %s118, %s119
    %p131 = scmp.eq.s32.totalorder %s20, 1
    %p132 = por %p130, %p131
    %p134 = scmp.ne.s32.totalorder %s119, %s133
    %p135 = scmp.eq.s32.totalorder %s20, 0
    %p136 = por %p134, %p135
    %s138 = sadd.s32 %s137, 1
    %p141 = scmp.eq.s32.totalorder %s14, 1
    %p142 = scmp.ne.s32.totalorder %s137, %s139
    %p143 = scmp.eq.s32.totalorder %s14, 0
    %p144 = por %p142, %p143
    %p145 = scmp.ne.s32.totalorder %s137, %s139
    %p146 = scmp.eq.s32.totalorder %s19, 1
    %p147 = por %p145, %p146
    %p148 = scmp.ne.s32.totalorder %s139, %s140
    %p149 = scmp.eq.s32.totalorder %s19, 0
    %p150 = por %p148, %p149
    %p151 = scmp.ne.s32.totalorder %s139, %s140
    %p152 = scmp.eq.s32.totalorder %s20, 1
    %p153 = por %p151, %p152
    %p155 = scmp.ne.s32.totalorder %s140, %s154
    %p156 = scmp.eq.s32.totalorder %s20, 0
    %p157 = por %p155, %p156
    %s158 = ssub.s32 %s14, %s21
    %p159 = scmp.eq.s32.totalorder %s158, 0
    %s161 = sadd.s32 %s160, 1
    %s162 = scalar_select %p159, %s160, %s161
    %p165 = pneg %p159
    %p166 = scmp.eq.s32.totalorder %s14, 1
    %p167 = por %p165, %p166
    %p168 = scmp.ne.s32.totalorder %s160, %s163
    %p169 = scmp.eq.s32.totalorder %s14, 0
    %p170 = por %p168, %p169
    %p171 = scmp.ne.s32.totalorder %s160, %s163
    %p172 = scmp.eq.s32.totalorder %s19, 1
    %p173 = por %p171, %p172
    %p174 = scmp.ne.s32.totalorder %s163, %s164
    %p175 = scmp.eq.s32.totalorder %s19, 0
    %p176 = por %p174, %p175
    %p177 = scmp.ne.s32.totalorder %s163, %s164
    %p178 = scmp.eq.s32.totalorder %s20, 1
    %p179 = por %p177, %p178
    %p181 = scmp.ne.s32.totalorder %s164, %s180
    %p182 = scmp.eq.s32.totalorder %s20, 0
    %p183 = por %p181, %p182
    %s184 = ssub.s32 %s14, %s21
    %p185 = scmp.eq.s32.totalorder %s184, 0
    %s187 = sadd.s32 %s186, 1
    %s188 = scalar_select %p185, %s186, %s187
    %p191 = pneg %p185
    %p192 = scmp.eq.s32.totalorder %s14, 1
    %p193 = por %p191, %p192
    %p194 = scmp.ne.s32.totalorder %s186, %s189
    %p195 = scmp.eq.s32.totalorder %s14, 0
    %p196 = por %p194, %p195
    %p197 = scmp.ne.s32.totalorder %s186, %s189
    %p198 = scmp.eq.s32.totalorder %s19, 1
    %p199 = por %p197, %p198
    %p200 = scmp.ne.s32.totalorder %s189, %s190
    %p201 = scmp.eq.s32.totalorder %s19, 0
    %p202 = por %p200, %p201
    %p203 = scmp.ne.s32.totalorder %s189, %s190
    %p204 = scmp.eq.s32.totalorder %s20, 1
    %p205 = por %p203, %p204
    %p207 = scmp.ne.s32.totalorder %s190, %s206
    %p208 = scmp.eq.s32.totalorder %s20, 0
    %p209 = por %p207, %p208
    %p210 = scmp.le.s32.totalorder 1, %s14
    %p211 = scmp.lt.s32.totalorder %s14, 3
    %p212 = pnand %p210, %p211
    %p213 = pneg %p212
    // Predicated region
    $region9: #{model_with_loss_forward.1} parent=5 // pred_check
      _
    $region10: #{model_with_loss_forward.1} parent=5 // pred_check_branch
      %215 = sbr.rel (%p212) target = $region12
    $region11: #{model_with_loss_forward.1} parent=5 // pred_region
      %s216 = ssub.s32 %s14, 1
      // Predicated region
      $region13: #{model_with_loss_forward.1} parent=11 // pred_check
        %p217 = pneg %p87
      $region14: #{model_with_loss_forward.1} parent=11 // pred_check_branch
        %219 = sbr.rel (%p217) target = $region16
      $region15: #{model_with_loss_forward.1} parent=11 // pred_region
        _
      $region16: #{model_with_loss_forward.1} parent=11 // pred_fallthru
        _
      // Predicated region
      $region17: #{model_with_loss_forward.1} parent=11 // pred_check
        %p220 = pneg %p108
      $region18: #{model_with_loss_forward.1} parent=11 // pred_check_branch
        %222 = sbr.rel (%p220) target = $region20
      $region19: #{model_with_loss_forward.1} parent=11 // pred_region
        _
      $region20: #{model_with_loss_forward.1} parent=11 // pred_fallthru
        _
      // Predicated region
      $region21: #{model_with_loss_forward.1} parent=11 // pred_check
        %p223 = pneg %p129
      $region22: #{model_with_loss_forward.1} parent=11 // pred_check_branch
        %225 = sbr.rel (%p223) target = $region24
      $region23: #{model_with_loss_forward.1} parent=11 // pred_region
        _
      $region24: #{model_with_loss_forward.1} parent=11 // pred_fallthru
        _
      // Predicated region
      $region25: #{model_with_loss_forward.1} parent=11 // pred_check
        %p226 = pneg %p150
      $region26: #{model_with_loss_forward.1} parent=11 // pred_check_branch
        %228 = sbr.rel (%p226) target = $region28
      $region27: #{model_with_loss_forward.1} parent=11 // pred_region
        _
      $region28: #{model_with_loss_forward.1} parent=11 // pred_fallthru
        _
    $region12: #{model_with_loss_forward.1} parent=5 // pred_fallthru
      _
    %p229 = scmp.lt.s32.totalorder %s14, 2
    // Predicated region
    $region29: #{model_with_loss_forward.1} parent=5 // pred_check
      %p230 = pneg %p229
    $region30: #{model_with_loss_forward.1} parent=5 // pred_check_branch
      %232 = sbr.rel (%p230) target = $region32
    $region31: #{model_with_loss_forward.1} parent=5 // pred_region
      // Predicated region
      $region33: #{model_with_loss_forward.1} parent=31 // pred_check
        %p233 = pneg %p34
      $region34: #{model_with_loss_forward.1} parent=31 // pred_check_branch
        %235 = sbr.rel (%p233) target = $region36
      $region35: #{model_with_loss_forward.1} parent=31 // pred_region
        %p236 = scmp.lt.s32.totalorder %s14, 1
        %s237 = scalar_select %p236, %s14, 1
        %s238 = smul.addr %s237, 54
        %s239 = smul.addr %s238, 8
        %s240 = scalar_lea.vmem %s0, %s239
      $region36: #{model_with_loss_forward.1} parent=31 // pred_fallthru
        _
      // Predicated region
      $region37: #{model_with_loss_forward.1} parent=31 // pred_check
        %p241 = pneg %p60
      $region38: #{model_with_loss_forward.1} parent=31 // pred_check_branch
        %243 = sbr.rel (%p241) target = $region40
      $region39: #{model_with_loss_forward.1} parent=31 // pred_region
        %p244 = scmp.lt.s32.totalorder %s14, 1
        %s245 = scalar_select %p244, %s14, 1
        %s246 = smul.addr %s245, 32
        %s247 = smul.addr %s246, 8
        %s248 = scalar_lea.vmem %s1, %s247
      $region40: #{model_with_loss_forward.1} parent=31 // pred_fallthru
        _
    $region32: #{model_with_loss_forward.1} parent=5 // pred_fallthru
      _
    %p249 = scmp.le.s32.totalorder 1, %s14
    %p250 = scmp.lt.s32.totalorder %s14, 3
    %p251 = pnand %p249, %p250
    %p252 = pneg %p251
    // Predicated region
    $region41: #{model_with_loss_forward.1} parent=5 // pred_check
      _
    $region42: #{model_with_loss_forward.1} parent=5 // pred_check_branch
      %254 = sbr.rel (%p251) target = $region44
    $region43: #{model_with_loss_forward.1} parent=5 // pred_region
      %s255 = ssub.s32 %s14, 1
      %p256 = scmp.lt.s32.totalorder %s19, 1
      %s257 = scalar_select %p256, %s19, 1
      %s258 = smul.addr %s257, 54
      %s259 = smul.addr %s258, 8
      %s260 = scalar_lea.vmem %s0, %s259
      %p261 = pneg %p40
      %p262 = pneg %p37
      %p263 = scmp.lt.s32.totalorder %s19, 1
      %s264 = scalar_select %p263, %s19, 1
      %s265 = smul.addr %s264, 32
      %s266 = smul.addr %s265, 8
      %s267 = scalar_lea.vmem %s1, %s266
      %p268 = pneg %p66
      %p269 = pneg %p63
      %p270 = pneg %p87
      %p271 = pneg %p84
      %p272 = pneg %p108
      %p273 = pneg %p105
      %p274 = pneg %p129
      %p275 = pneg %p126
      %p276 = pneg %p150
      %p277 = pneg %p147
      %p278 = pneg %p176
      %p279 = pneg %p173
      %p280 = scmp.lt.s32.totalorder %s19, 1
      %s281 = scalar_select %p280, %s19, 1
      %s282 = scalar_lea.vmem %s6, %s281
      %p283 = pneg %p202
      %p284 = pneg %p199
      %p285 = scmp.lt.s32.totalorder %s19, 1
      %s286 = scalar_select %p285, %s19, 1
      %s287 = scalar_lea.vmem %s7, %s286
      %p288 = scmp.lt.s32.totalorder %s19, 1
      %s289 = scalar_select %p288, %s19, 1
      %s290 = smul.addr %s289, 54
      %s291 = smul.addr %s290, 8
      %s292 = scalar_lea.vmem %s0, %s291
      %p293 = scmp.lt.s32.totalorder %s19, 1
      %s294 = scalar_select %p293, %s19, 1
      %s295 = smul.addr %s294, 32
      %s296 = smul.addr %s295, 8
      %s297 = scalar_lea.vmem %s1, %s296
      %p298 = scmp.lt.s32.totalorder %s19, 1
      %s299 = scalar_select %p298, %s19, 1
      %s300 = scalar_lea.vmem %s6, %s299
      %p301 = scmp.lt.s32.totalorder %s19, 1
      %s302 = scalar_select %p301, %s19, 1
      %s303 = scalar_lea.vmem %s7, %s302
      %v304 = vld [vmem:[%s292] sm:$0xff]
      %v305 = vld [vmem:[%s292 + $0x8] sm:$0xff]
      %v306 = vld [vmem:[%s292 + $0x10] sm:$0x3]
      %v307 = vld [vmem:[%s292 + $0x18] sm:$0xff]
      %v308 = vld [vmem:[%s292 + $0x20] sm:$0xff]
      %v309 = vld [vmem:[%s292 + $0x28] sm:$0x3]
      %v310 = vld [vmem:[%s292 + $0x30] sm:$0xff]
      %v311 = vld [vmem:[%s292 + $0x38] sm:$0xff]
      %v312 = vld [vmem:[%s292 + $0x40] sm:$0x3]
      %v313 = vld [vmem:[%s292 + $0x48] sm:$0xff]
      %v314 = vld [vmem:[%s292 + $0x50] sm:$0xff]
      %v315 = vld [vmem:[%s292 + $0x58] sm:$0x3]
      %v316 = vld [vmem:[%s292 + $0x60] sm:$0xff]
      %v317 = vld [vmem:[%s292 + $0x68] sm:$0xff]
      %v318 = vld [vmem:[%s292 + $0x70] sm:$0x3]
      %v319 = vld [vmem:[%s292 + $0x78] sm:$0xff]
      %v320 = vld [vmem:[%s292 + $0x80] sm:$0xff]
      %v321 = vld [vmem:[%s292 + $0x88] sm:$0x3]
      %v322 = vld [vmem:[%s292 + $0x90] sm:$0xff]
      %v323 = vld [vmem:[%s292 + $0x98] sm:$0xff]
      %v324 = vld [vmem:[%s292 + $0xa0] sm:$0x3]
      %v325 = vld [vmem:[%s292 + $0xa8] sm:$0xff]
      %v326 = vld [vmem:[%s292 + $0xb0] sm:$0xff]
      %v327 = vld [vmem:[%s292 + $0xb8] sm:$0x3]
      %v328 = vld [vmem:[%s292 + $0xc0] sm:$0xff]
      %v329 = vld [vmem:[%s292 + $0xc8] sm:$0xff]
      %v330 = vld [vmem:[%s292 + $0xd0] sm:$0x3]
      %v331 = vld [vmem:[%s292 + $0xd8] sm:$0xff]
      %v332 = vld [vmem:[%s292 + $0xe0] sm:$0xff]
      %v333 = vld [vmem:[%s292 + $0xe8] sm:$0x3]
      %v334 = vld [vmem:[%s292 + $0xf0] sm:$0xff]
      %v335 = vld [vmem:[%s292 + $0xf8] sm:$0xff]
      %v336 = vld [vmem:[%s292 + $0x100] sm:$0x3]
      %v337 = vld [vmem:[%s292 + $0x108] sm:$0xff]
      %v338 = vld [vmem:[%s292 + $0x110] sm:$0xff]
      %v339 = vld [vmem:[%s292 + $0x118] sm:$0x3]
      %v340 = vld [vmem:[%s292 + $0x120] sm:$0xff]
      %v341 = vld [vmem:[%s292 + $0x128] sm:$0xff]
      %v342 = vld [vmem:[%s292 + $0x130] sm:$0x3]
      %v343 = vld [vmem:[%s292 + $0x138] sm:$0xff]
      %v344 = vld [vmem:[%s292 + $0x140] sm:$0xff]
      %v345 = vld [vmem:[%s292 + $0x148] sm:$0x3]
      %v346 = vld [vmem:[%s292 + $0x150] sm:$0xff]
      %v347 = vld [vmem:[%s292 + $0x158] sm:$0xff]
      %v348 = vld [vmem:[%s292 + $0x160] sm:$0x3]
      %v349 = vld [vmem:[%s292 + $0x168] sm:$0xff]
      %v350 = vld [vmem:[%s292 + $0x170] sm:$0xff]
      %v351 = vld [vmem:[%s292 + $0x178] sm:$0x3]
      %v352 = vld [vmem:[%s292 + $0x180] sm:$0xff]
      %v353 = vld [vmem:[%s292 + $0x188] sm:$0xff]
      %v354 = vld [vmem:[%s292 + $0x190] sm:$0x3]
      %v355 = vld [vmem:[%s292 + $0x198] sm:$0xff]
      %v356 = vld [vmem:[%s292 + $0x1a0] sm:$0xff]
      %v357 = vld [vmem:[%s292 + $0x1a8] sm:$0x3]
      %vm406 = vcmask 1046528
      %v407 = vrot.slane %v304, 1
      %v408 = vrot.slane %v305, 1
      %v409 = vsel %vm406, %v407, %v408
      %v410 = vrot.slane %v306, 1
      %v411 = vsel %vm406, %v408, %v410
      %v412 = vrot.slane %v307, 1
      %v413 = vrot.slane %v308, 1
      %v414 = vsel %vm406, %v412, %v413
      %v415 = vrot.slane %v309, 1
      %v416 = vsel %vm406, %v413, %v415
      %v417 = vrot.slane %v310, 1
      %v418 = vrot.slane %v311, 1
      %v419 = vsel %vm406, %v417, %v418
      %v420 = vrot.slane %v312, 1
      %v421 = vsel %vm406, %v418, %v420
      %v422 = vrot.slane %v313, 1
      %v423 = vrot.slane %v314, 1
      %v424 = vsel %vm406, %v422, %v423
      %v425 = vrot.slane %v315, 1
      %v426 = vsel %vm406, %v423, %v425
      %v427 = vrot.slane %v316, 1
      %v428 = vrot.slane %v317, 1
      %v429 = vsel %vm406, %v427, %v428
      %v430 = vrot.slane %v318, 1
      %v431 = vsel %vm406, %v428, %v430
      %v432 = vrot.slane %v319, 1
      %v433 = vrot.slane %v320, 1
      %v434 = vsel %vm406, %v432, %v433
      %v435 = vrot.slane %v321, 1
      %v436 = vsel %vm406, %v433, %v435
      %v437 = vrot.slane %v322, 1
      %v438 = vrot.slane %v323, 1
      %v439 = vsel %vm406, %v437, %v438
      %v440 = vrot.slane %v324, 1
      %v441 = vsel %vm406, %v438, %v440
      %v442 = vrot.slane %v325, 1
      %v443 = vrot.slane %v326, 1
      %v444 = vsel %vm406, %v442, %v443
      %v445 = vrot.slane %v327, 1
      %v446 = vsel %vm406, %v443, %v445
      %v447 = vrot.slane %v328, 1
      %v448 = vrot.slane %v329, 1
      %v449 = vsel %vm406, %v447, %v448
      %v450 = vrot.slane %v330, 1
      %v451 = vsel %vm406, %v448, %v450
      %v452 = vrot.slane %v331, 1
      %v453 = vrot.slane %v332, 1
      %v454 = vsel %vm406, %v452, %v453
      %v455 = vrot.slane %v333, 1
      %v456 = vsel %vm406, %v453, %v455
      %v457 = vrot.slane %v334, 1
      %v458 = vrot.slane %v335, 1
      %v459 = vsel %vm406, %v457, %v458
      %v460 = vrot.slane %v336, 1
      %v461 = vsel %vm406, %v458, %v460
      %v462 = vrot.slane %v337, 1
      %v463 = vrot.slane %v338, 1
      %v464 = vsel %vm406, %v462, %v463
      %v465 = vrot.slane %v339, 1
      %v466 = vsel %vm406, %v463, %v465
      %v467 = vrot.slane %v340, 1
      %v468 = vrot.slane %v341, 1
      %v469 = vsel %vm406, %v467, %v468
      %v470 = vrot.slane %v342, 1
      %v471 = vsel %vm406, %v468, %v470
      %v472 = vrot.slane %v343, 1
      %v473 = vrot.slane %v344, 1
      %v474 = vsel %vm406, %v472, %v473
      %v475 = vrot.slane %v345, 1
      %v476 = vsel %vm406, %v473, %v475
      %v477 = vrot.slane %v346, 1
      %v478 = vrot.slane %v347, 1
      %v479 = vsel %vm406, %v477, %v478
      %v480 = vrot.slane %v348, 1
      %v481 = vsel %vm406, %v478, %v480
      %v482 = vrot.slane %v349, 1
      %v483 = vrot.slane %v350, 1
      %v484 = vsel %vm406, %v482, %v483
      %v485 = vrot.slane %v351, 1
      %v486 = vsel %vm406, %v483, %v485
      %vm487 = vcmask 1045504
      %v488 = vrot.slane %v304, 2
      %v489 = vrot.slane %v305, 2
      %v490 = vsel %vm487, %v488, %v489
      %v491 = vrot.slane %v306, 2
      %v492 = vsel %vm487, %v489, %v491
      %v493 = vrot.slane %v307, 2
      %v494 = vrot.slane %v308, 2
      %v495 = vsel %vm487, %v493, %v494
      %v496 = vrot.slane %v309, 2
      %v497 = vsel %vm487, %v494, %v496
      %v498 = vrot.slane %v310, 2
      %v499 = vrot.slane %v311, 2
      %v500 = vsel %vm487, %v498, %v499
      %v501 = vrot.slane %v312, 2
      %v502 = vsel %vm487, %v499, %v501
      %v503 = vrot.slane %v313, 2
      %v504 = vrot.slane %v314, 2
      %v505 = vsel %vm487, %v503, %v504
      %v506 = vrot.slane %v315, 2
      %v507 = vsel %vm487, %v504, %v506
      %v508 = vrot.slane %v316, 2
      %v509 = vrot.slane %v317, 2
      %v510 = vsel %vm487, %v508, %v509
      %v511 = vrot.slane %v318, 2
      %v512 = vsel %vm487, %v509, %v511
      %v513 = vrot.slane %v319, 2
      %v514 = vrot.slane %v320, 2
      %v515 = vsel %vm487, %v513, %v514
      %v516 = vrot.slane %v321, 2
      %v517 = vsel %vm487, %v514, %v516
      %v518 = vrot.slane %v322, 2
      %v519 = vrot.slane %v323, 2
      %v520 = vsel %vm487, %v518, %v519
      %v521 = vrot.slane %v324, 2
      %v522 = vsel %vm487, %v519, %v521
      %v523 = vrot.slane %v325, 2
      %v524 = vrot.slane %v326, 2
      %v525 = vsel %vm487, %v523, %v524
      %v526 = vrot.slane %v327, 2
      %v527 = vsel %vm487, %v524, %v526
      %v528 = vrot.slane %v328, 2
      %v529 = vrot.slane %v329, 2
      %v530 = vsel %vm487, %v528, %v529
      %v531 = vrot.slane %v330, 2
      %v532 = vsel %vm487, %v529, %v531
      %v533 = vrot.slane %v331, 2
      %v534 = vrot.slane %v332, 2
      %v535 = vsel %vm487, %v533, %v534
      %v536 = vrot.slane %v333, 2
      %v537 = vsel %vm487, %v534, %v536
      %v538 = vrot.slane %v334, 2
      %v539 = vrot.slane %v335, 2
      %v540 = vsel %vm487, %v538, %v539
      %v541 = vrot.slane %v336, 2
      %v542 = vsel %vm487, %v539, %v541
      %v543 = vrot.slane %v337, 2
      %v544 = vrot.slane %v338, 2
      %v545 = vsel %vm487, %v543, %v544
      %v546 = vrot.slane %v339, 2
      %v547 = vsel %vm487, %v544, %v546
      %v548 = vrot.slane %v340, 2
      %v549 = vrot.slane %v341, 2
      %v550 = vsel %vm487, %v548, %v549
      %v551 = vrot.slane %v342, 2
      %v552 = vsel %vm487, %v549, %v551
      %v553 = vrot.slane %v343, 2
      %v554 = vrot.slane %v344, 2
      %v555 = vsel %vm487, %v553, %v554
      %v556 = vrot.slane %v345, 2
      %v557 = vsel %vm487, %v554, %v556
      %v558 = vrot.slane %v346, 2
      %v559 = vrot.slane %v347, 2
      %v560 = vsel %vm487, %v558, %v559
      %v561 = vrot.slane %v348, 2
      %v562 = vsel %vm487, %v559, %v561
      %v563 = vrot.slane %v349, 2
      %v564 = vrot.slane %v350, 2
      %v565 = vsel %vm487, %v563, %v564
      %v566 = vrot.slane %v351, 2
      %v567 = vsel %vm487, %v564, %v566
      %v571 = vrot.slane %v352, 1
      %v572 = vrot.slane %v353, 1
      %v573 = vsel %vm406, %v571, %v572
      %v574 = vrot.slane %v354, 1
      %v575 = vsel %vm406, %v572, %v574
      %v576 = vrot.slane %v352, 2
      %v577 = vrot.slane %v353, 2
      %v578 = vsel %vm487, %v576, %v577
      %v579 = vrot.slane %v354, 2
      %v580 = vsel %vm487, %v577, %v579
      %v584 = vrot.slane %v355, 1
      %v585 = vrot.slane %v356, 1
      %v586 = vsel %vm406, %v584, %v585
      %v587 = vrot.slane %v357, 1
      %v588 = vsel %vm406, %v585, %v587
      %v589 = vrot.slane %v355, 2
      %v590 = vrot.slane %v356, 2
      %v591 = vsel %vm487, %v589, %v590
      %v592 = vrot.slane %v357, 2
      %v593 = vsel %vm487, %v590, %v592
      %594 = vrot.lane.b32.xlu0 %v409, 4
      %v595 = vpop.permute.xlu0 %594
      %596 = vrot.lane.b32.xlu0 %v411, 4
      %v597 = vpop.permute.xlu0 %596
      %598 = vrot.lane.b32.xlu0 %v414, 4
      %v599 = vpop.permute.xlu0 %598
      %600 = vrot.lane.b32.xlu0 %v416, 4
      %v601 = vpop.permute.xlu0 %600
      %602 = vrot.lane.b32.xlu0 %v419, 4
      %v603 = vpop.permute.xlu0 %602
      %604 = vrot.lane.b32.xlu0 %v421, 4
      %v605 = vpop.permute.xlu0 %604
      %606 = vrot.lane.b32.xlu0 %v424, 4
      %v607 = vpop.permute.xlu0 %606
      %608 = vrot.lane.b32.xlu0 %v426, 4
      %v609 = vpop.permute.xlu0 %608
      %610 = vrot.lane.b32.xlu0 %v429, 4
      %v611 = vpop.permute.xlu0 %610
      %612 = vrot.lane.b32.xlu0 %v431, 4
      %v613 = vpop.permute.xlu0 %612
      %614 = vrot.lane.b32.xlu0 %v434, 4
      %v615 = vpop.permute.xlu0 %614
      %616 = vrot.lane.b32.xlu0 %v436, 4
      %v617 = vpop.permute.xlu0 %616
      %618 = vrot.lane.b32.xlu0 %v439, 4
      %v619 = vpop.permute.xlu0 %618
      %620 = vrot.lane.b32.xlu0 %v441, 4
      %v621 = vpop.permute.xlu0 %620
      %622 = vrot.lane.b32.xlu0 %v444, 4
      %v623 = vpop.permute.xlu0 %622
      %624 = vrot.lane.b32.xlu0 %v446, 4
      %v625 = vpop.permute.xlu0 %624
      %626 = vrot.lane.b32.xlu0 %v449, 4
      %v627 = vpop.permute.xlu0 %626
      %628 = vrot.lane.b32.xlu0 %v451, 4
      %v629 = vpop.permute.xlu0 %628
      %630 = vrot.lane.b32.xlu0 %v454, 4
      %v631 = vpop.permute.xlu0 %630
      %632 = vrot.lane.b32.xlu0 %v456, 4
      %v633 = vpop.permute.xlu0 %632
      %634 = vrot.lane.b32.xlu0 %v459, 4
      %v635 = vpop.permute.xlu0 %634
      %636 = vrot.lane.b32.xlu0 %v461, 4
      %v637 = vpop.permute.xlu0 %636
      %638 = vrot.lane.b32.xlu0 %v464, 4
      %v639 = vpop.permute.xlu0 %638
      %640 = vrot.lane.b32.xlu0 %v466, 4
      %v641 = vpop.permute.xlu0 %640
      %642 = vrot.lane.b32.xlu0 %v469, 4
      %v643 = vpop.permute.xlu0 %642
      %644 = vrot.lane.b32.xlu0 %v471, 4
      %v645 = vpop.permute.xlu0 %644
      %646 = vrot.lane.b32.xlu0 %v474, 4
      %v647 = vpop.permute.xlu0 %646
      %648 = vrot.lane.b32.xlu0 %v476, 4
      %v649 = vpop.permute.xlu0 %648
      %650 = vrot.lane.b32.xlu0 %v479, 4
      %v651 = vpop.permute.xlu0 %650
      %652 = vrot.lane.b32.xlu0 %v481, 4
      %v653 = vpop.permute.xlu0 %652
      %654 = vrot.lane.b32.xlu0 %v484, 4
      %v655 = vpop.permute.xlu0 %654
      %656 = vrot.lane.b32.xlu0 %v486, 4
      %v657 = vpop.permute.xlu0 %656
      %690 = vrot.lane.b32.xlu0 %v490, 8
      %v691 = vpop.permute.xlu0 %690
      %692 = vrot.lane.b32.xlu0 %v492, 8
      %v693 = vpop.permute.xlu0 %692
      %694 = vrot.lane.b32.xlu0 %v495, 8
      %v695 = vpop.permute.xlu0 %694
      %696 = vrot.lane.b32.xlu0 %v497, 8
      %v697 = vpop.permute.xlu0 %696
      %698 = vrot.lane.b32.xlu0 %v500, 8
      %v699 = vpop.permute.xlu0 %698
      %700 = vrot.lane.b32.xlu0 %v502, 8
      %v701 = vpop.permute.xlu0 %700
      %702 = vrot.lane.b32.xlu0 %v505, 8
      %v703 = vpop.permute.xlu0 %702
      %704 = vrot.lane.b32.xlu0 %v507, 8
      %v705 = vpop.permute.xlu0 %704
      %706 = vrot.lane.b32.xlu0 %v510, 8
      %v707 = vpop.permute.xlu0 %706
      %708 = vrot.lane.b32.xlu0 %v512, 8
      %v709 = vpop.permute.xlu0 %708
      %710 = vrot.lane.b32.xlu0 %v515, 8
      %v711 = vpop.permute.xlu0 %710
      %712 = vrot.lane.b32.xlu0 %v517, 8
      %v713 = vpop.permute.xlu0 %712
      %714 = vrot.lane.b32.xlu0 %v520, 8
      %v715 = vpop.permute.xlu0 %714
      %716 = vrot.lane.b32.xlu0 %v522, 8
      %v717 = vpop.permute.xlu0 %716
      %718 = vrot.lane.b32.xlu0 %v525, 8
      %v719 = vpop.permute.xlu0 %718
      %720 = vrot.lane.b32.xlu0 %v527, 8
      %v721 = vpop.permute.xlu0 %720
      %722 = vrot.lane.b32.xlu0 %v530, 8
      %v723 = vpop.permute.xlu0 %722
      %724 = vrot.lane.b32.xlu0 %v532, 8
      %v725 = vpop.permute.xlu0 %724
      %726 = vrot.lane.b32.xlu0 %v535, 8
      %v727 = vpop.permute.xlu0 %726
      %728 = vrot.lane.b32.xlu0 %v537, 8
      %v729 = vpop.permute.xlu0 %728
      %730 = vrot.lane.b32.xlu0 %v540, 8
      %v731 = vpop.permute.xlu0 %730
      %732 = vrot.lane.b32.xlu0 %v542, 8
      %v733 = vpop.permute.xlu0 %732
      %734 = vrot.lane.b32.xlu0 %v545, 8
      %v735 = vpop.permute.xlu0 %734
      %736 = vrot.lane.b32.xlu0 %v547, 8
      %v737 = vpop.permute.xlu0 %736
      %738 = vrot.lane.b32.xlu0 %v550, 8
      %v739 = vpop.permute.xlu0 %738
      %740 = vrot.lane.b32.xlu0 %v552, 8
      %v741 = vpop.permute.xlu0 %740
      %742 = vrot.lane.b32.xlu0 %v555, 8
      %v743 = vpop.permute.xlu0 %742
      %744 = vrot.lane.b32.xlu0 %v557, 8
      %v745 = vpop.permute.xlu0 %744
      %746 = vrot.lane.b32.xlu0 %v560, 8
      %v747 = vpop.permute.xlu0 %746
      %748 = vrot.lane.b32.xlu0 %v562, 8
      %v749 = vpop.permute.xlu0 %748
      %750 = vrot.lane.b32.xlu0 %v565, 8
      %v751 = vpop.permute.xlu0 %750
      %752 = vrot.lane.b32.xlu0 %v567, 8
      %v753 = vpop.permute.xlu0 %752
      %786 = vrot.lane.b32.xlu0 %v307, 12
      %v787 = vpop.permute.xlu0 %786
      %788 = vrot.lane.b32.xlu0 %v308, 12
      %v789 = vpop.permute.xlu0 %788
      %790 = vrot.lane.b32.xlu0 %v310, 12
      %v791 = vpop.permute.xlu0 %790
      %792 = vrot.lane.b32.xlu0 %v311, 12
      %v793 = vpop.permute.xlu0 %792
      %794 = vrot.lane.b32.xlu0 %v313, 12
      %v795 = vpop.permute.xlu0 %794
      %796 = vrot.lane.b32.xlu0 %v314, 12
      %v797 = vpop.permute.xlu0 %796
      %798 = vrot.lane.b32.xlu0 %v316, 12
      %v799 = vpop.permute.xlu0 %798
      %800 = vrot.lane.b32.xlu0 %v317, 12
      %v801 = vpop.permute.xlu0 %800
      %802 = vrot.lane.b32.xlu0 %v319, 12
      %v803 = vpop.permute.xlu0 %802
      %804 = vrot.lane.b32.xlu0 %v320, 12
      %v805 = vpop.permute.xlu0 %804
      %806 = vrot.lane.b32.xlu0 %v322, 12
      %v807 = vpop.permute.xlu0 %806
      %808 = vrot.lane.b32.xlu0 %v323, 12
      %v809 = vpop.permute.xlu0 %808
      %810 = vrot.lane.b32.xlu0 %v325, 12
      %v811 = vpop.permute.xlu0 %810
      %812 = vrot.lane.b32.xlu0 %v326, 12
      %v813 = vpop.permute.xlu0 %812
      %814 = vrot.lane.b32.xlu0 %v328, 12
      %v815 = vpop.permute.xlu0 %814
      %816 = vrot.lane.b32.xlu0 %v329, 12
      %v817 = vpop.permute.xlu0 %816
      %818 = vrot.lane.b32.xlu0 %v331, 12
      %v819 = vpop.permute.xlu0 %818
      %820 = vrot.lane.b32.xlu0 %v332, 12
      %v821 = vpop.permute.xlu0 %820
      %822 = vrot.lane.b32.xlu0 %v334, 12
      %v823 = vpop.permute.xlu0 %822
      %824 = vrot.lane.b32.xlu0 %v335, 12
      %v825 = vpop.permute.xlu0 %824
      %826 = vrot.lane.b32.xlu0 %v337, 12
      %v827 = vpop.permute.xlu0 %826
      %828 = vrot.lane.b32.xlu0 %v338, 12
      %v829 = vpop.permute.xlu0 %828
      %830 = vrot.lane.b32.xlu0 %v340, 12
      %v831 = vpop.permute.xlu0 %830
      %832 = vrot.lane.b32.xlu0 %v341, 12
      %v833 = vpop.permute.xlu0 %832
      %834 = vrot.lane.b32.xlu0 %v343, 12
      %v835 = vpop.permute.xlu0 %834
      %836 = vrot.lane.b32.xlu0 %v344, 12
      %v837 = vpop.permute.xlu0 %836
      %838 = vrot.lane.b32.xlu0 %v346, 12
      %v839 = vpop.permute.xlu0 %838
      %840 = vrot.lane.b32.xlu0 %v347, 12
      %v841 = vpop.permute.xlu0 %840
      %842 = vrot.lane.b32.xlu0 %v349, 12
      %v843 = vpop.permute.xlu0 %842
      %844 = vrot.lane.b32.xlu0 %v350, 12
      %v845 = vpop.permute.xlu0 %844
      %846 = vrot.lane.b32.xlu0 %v352, 12
      %v847 = vpop.permute.xlu0 %846
      %848 = vrot.lane.b32.xlu0 %v353, 12
      %v849 = vpop.permute.xlu0 %848
      %882 = vrot.lane.b32.xlu0 %v414, 16
      %v883 = vpop.permute.xlu0 %882
      %884 = vrot.lane.b32.xlu0 %v416, 16
      %v885 = vpop.permute.xlu0 %884
      %886 = vrot.lane.b32.xlu0 %v419, 16
      %v887 = vpop.permute.xlu0 %886
      %888 = vrot.lane.b32.xlu0 %v421, 16
      %v889 = vpop.permute.xlu0 %888
      %890 = vrot.lane.b32.xlu0 %v424, 16
      %v891 = vpop.permute.xlu0 %890
      %892 = vrot.lane.b32.xlu0 %v426, 16
      %v893 = vpop.permute.xlu0 %892
      %894 = vrot.lane.b32.xlu0 %v429, 16
      %v895 = vpop.permute.xlu0 %894
      %896 = vrot.lane.b32.xlu0 %v431, 16
      %v897 = vpop.permute.xlu0 %896
      %898 = vrot.lane.b32.xlu0 %v434, 16
      %v899 = vpop.permute.xlu0 %898
      %900 = vrot.lane.b32.xlu0 %v436, 16
      %v901 = vpop.permute.xlu0 %900
      %902 = vrot.lane.b32.xlu0 %v439, 16
      %v903 = vpop.permute.xlu0 %902
      %904 = vrot.lane.b32.xlu0 %v441, 16
      %v905 = vpop.permute.xlu0 %904
      %906 = vrot.lane.b32.xlu0 %v444, 16
      %v907 = vpop.permute.xlu0 %906
      %908 = vrot.lane.b32.xlu0 %v446, 16
      %v909 = vpop.permute.xlu0 %908
      %910 = vrot.lane.b32.xlu0 %v449, 16
      %v911 = vpop.permute.xlu0 %910
      %912 = vrot.lane.b32.xlu0 %v451, 16
      %v913 = vpop.permute.xlu0 %912
      %914 = vrot.lane.b32.xlu0 %v454, 16
      %v915 = vpop.permute.xlu0 %914
      %916 = vrot.lane.b32.xlu0 %v456, 16
      %v917 = vpop.permute.xlu0 %916
      %918 = vrot.lane.b32.xlu0 %v459, 16
      %v919 = vpop.permute.xlu0 %918
      %920 = vrot.lane.b32.xlu0 %v461, 16
      %v921 = vpop.permute.xlu0 %920
      %922 = vrot.lane.b32.xlu0 %v464, 16
      %v923 = vpop.permute.xlu0 %922
      %924 = vrot.lane.b32.xlu0 %v466, 16
      %v925 = vpop.permute.xlu0 %924
      %926 = vrot.lane.b32.xlu0 %v469, 16
      %v927 = vpop.permute.xlu0 %926
      %928 = vrot.lane.b32.xlu0 %v471, 16
      %v929 = vpop.permute.xlu0 %928
      %930 = vrot.lane.b32.xlu0 %v474, 16
      %v931 = vpop.permute.xlu0 %930
      %932 = vrot.lane.b32.xlu0 %v476, 16
      %v933 = vpop.permute.xlu0 %932
      %934 = vrot.lane.b32.xlu0 %v479, 16
      %v935 = vpop.permute.xlu0 %934
      %936 = vrot.lane.b32.xlu0 %v481, 16
      %v937 = vpop.permute.xlu0 %936
      %938 = vrot.lane.b32.xlu0 %v484, 16
      %v939 = vpop.permute.xlu0 %938
      %940 = vrot.lane.b32.xlu0 %v486, 16
      %v941 = vpop.permute.xlu0 %940
      %942 = vrot.lane.b32.xlu0 %v573, 16
      %v943 = vpop.permute.xlu0 %942
      %944 = vrot.lane.b32.xlu0 %v575, 16
      %v945 = vpop.permute.xlu0 %944
      %978 = vrot.lane.b32.xlu0 %v495, 20
      %v979 = vpop.permute.xlu0 %978
      %980 = vrot.lane.b32.xlu0 %v497, 20
      %v981 = vpop.permute.xlu0 %980
      %982 = vrot.lane.b32.xlu0 %v500, 20
      %v983 = vpop.permute.xlu0 %982
      %984 = vrot.lane.b32.xlu0 %v502, 20
      %v985 = vpop.permute.xlu0 %984
      %986 = vrot.lane.b32.xlu0 %v505, 20
      %v987 = vpop.permute.xlu0 %986
      %988 = vrot.lane.b32.xlu0 %v507, 20
      %v989 = vpop.permute.xlu0 %988
      %990 = vrot.lane.b32.xlu0 %v510, 20
      %v991 = vpop.permute.xlu0 %990
      %992 = vrot.lane.b32.xlu0 %v512, 20
      %v993 = vpop.permute.xlu0 %992
      %994 = vrot.lane.b32.xlu0 %v515, 20
      %v995 = vpop.permute.xlu0 %994
      %996 = vrot.lane.b32.xlu0 %v517, 20
      %v997 = vpop.permute.xlu0 %996
      %998 = vrot.lane.b32.xlu0 %v520, 20
      %v999 = vpop.permute.xlu0 %998
      %1000 = vrot.lane.b32.xlu0 %v522, 20
      %v1001 = vpop.permute.xlu0 %1000
      %1002 = vrot.lane.b32.xlu0 %v525, 20
      %v1003 = vpop.permute.xlu0 %1002
      %1004 = vrot.lane.b32.xlu0 %v527, 20
      %v1005 = vpop.permute.xlu0 %1004
      %1006 = vrot.lane.b32.xlu0 %v530, 20
      %v1007 = vpop.permute.xlu0 %1006
      %1008 = vrot.lane.b32.xlu0 %v532, 20
      %v1009 = vpop.permute.xlu0 %1008
      %1010 = vrot.lane.b32.xlu0 %v535, 20
      %v1011 = vpop.permute.xlu0 %1010
      %1012 = vrot.lane.b32.xlu0 %v537, 20
      %v1013 = vpop.permute.xlu0 %1012
      %1014 = vrot.lane.b32.xlu0 %v540, 20
      %v1015 = vpop.permute.xlu0 %1014
      %1016 = vrot.lane.b32.xlu0 %v542, 20
      %v1017 = vpop.permute.xlu0 %1016
      %1018 = vrot.lane.b32.xlu0 %v545, 20
      %v1019 = vpop.permute.xlu0 %1018
      %1020 = vrot.lane.b32.xlu0 %v547, 20
      %v1021 = vpop.permute.xlu0 %1020
      %1022 = vrot.lane.b32.xlu0 %v550, 20
      %v1023 = vpop.permute.xlu0 %1022
      %1024 = vrot.lane.b32.xlu0 %v552, 20
      %v1025 = vpop.permute.xlu0 %1024
      %1026 = vrot.lane.b32.xlu0 %v555, 20
      %v1027 = vpop.permute.xlu0 %1026
      %1028 = vrot.lane.b32.xlu0 %v557, 20
      %v1029 = vpop.permute.xlu0 %1028
      %1030 = vrot.lane.b32.xlu0 %v560, 20
      %v1031 = vpop.permute.xlu0 %1030
      %1032 = vrot.lane.b32.xlu0 %v562, 20
      %v1033 = vpop.permute.xlu0 %1032
      %1034 = vrot.lane.b32.xlu0 %v565, 20
      %v1035 = vpop.permute.xlu0 %1034
      %1036 = vrot.lane.b32.xlu0 %v567, 20
      %v1037 = vpop.permute.xlu0 %1036
      %1038 = vrot.lane.b32.xlu0 %v578, 20
      %v1039 = vpop.permute.xlu0 %1038
      %1040 = vrot.lane.b32.xlu0 %v580, 20
      %v1041 = vpop.permute.xlu0 %1040
      %1074 = vrot.lane.b32.xlu0 %v310, 24
      %v1075 = vpop.permute.xlu0 %1074
      %1076 = vrot.lane.b32.xlu0 %v311, 24
      %v1077 = vpop.permute.xlu0 %1076
      %1078 = vrot.lane.b32.xlu0 %v313, 24
      %v1079 = vpop.permute.xlu0 %1078
      %1080 = vrot.lane.b32.xlu0 %v314, 24
      %v1081 = vpop.permute.xlu0 %1080
      %1082 = vrot.lane.b32.xlu0 %v316, 24
      %v1083 = vpop.permute.xlu0 %1082
      %1084 = vrot.lane.b32.xlu0 %v317, 24
      %v1085 = vpop.permute.xlu0 %1084
      %1086 = vrot.lane.b32.xlu0 %v319, 24
      %v1087 = vpop.permute.xlu0 %1086
      %1088 = vrot.lane.b32.xlu0 %v320, 24
      %v1089 = vpop.permute.xlu0 %1088
      %1090 = vrot.lane.b32.xlu0 %v322, 24
      %v1091 = vpop.permute.xlu0 %1090
      %1092 = vrot.lane.b32.xlu0 %v323, 24
      %v1093 = vpop.permute.xlu0 %1092
      %1094 = vrot.lane.b32.xlu0 %v325, 24
      %v1095 = vpop.permute.xlu0 %1094
      %1096 = vrot.lane.b32.xlu0 %v326, 24
      %v1097 = vpop.permute.xlu0 %1096
      %1098 = vrot.lane.b32.xlu0 %v328, 24
      %v1099 = vpop.permute.xlu0 %1098
      %1100 = vrot.lane.b32.xlu0 %v329, 24
      %v1101 = vpop.permute.xlu0 %1100
      %1102 = vrot.lane.b32.xlu0 %v331, 24
      %v1103 = vpop.permute.xlu0 %1102
      %1104 = vrot.lane.b32.xlu0 %v332, 24
      %v1105 = vpop.permute.xlu0 %1104
      %1106 = vrot.lane.b32.xlu0 %v334, 24
      %v1107 = vpop.permute.xlu0 %1106
      %1108 = vrot.lane.b32.xlu0 %v335, 24
      %v1109 = vpop.permute.xlu0 %1108
      %1110 = vrot.lane.b32.xlu0 %v337, 24
      %v1111 = vpop.permute.xlu0 %1110
      %1112 = vrot.lane.b32.xlu0 %v338, 24
      %v1113 = vpop.permute.xlu0 %1112
      %1114 = vrot.lane.b32.xlu0 %v340, 24
      %v1115 = vpop.permute.xlu0 %1114
      %1116 = vrot.lane.b32.xlu0 %v341, 24
      %v1117 = vpop.permute.xlu0 %1116
      %1118 = vrot.lane.b32.xlu0 %v343, 24
      %v1119 = vpop.permute.xlu0 %1118
      %1120 = vrot.lane.b32.xlu0 %v344, 24
      %v1121 = vpop.permute.xlu0 %1120
      %1122 = vrot.lane.b32.xlu0 %v346, 24
      %v1123 = vpop.permute.xlu0 %1122
      %1124 = vrot.lane.b32.xlu0 %v347, 24
      %v1125 = vpop.permute.xlu0 %1124
      %1126 = vrot.lane.b32.xlu0 %v349, 24
      %v1127 = vpop.permute.xlu0 %1126
      %1128 = vrot.lane.b32.xlu0 %v350, 24
      %v1129 = vpop.permute.xlu0 %1128
      %1130 = vrot.lane.b32.xlu0 %v352, 24
      %v1131 = vpop.permute.xlu0 %1130
      %1132 = vrot.lane.b32.xlu0 %v353, 24
      %v1133 = vpop.permute.xlu0 %1132
      %1134 = vrot.lane.b32.xlu0 %v355, 24
      %v1135 = vpop.permute.xlu0 %1134
      %1136 = vrot.lane.b32.xlu0 %v356, 24
      %v1137 = vpop.permute.xlu0 %1136
      %1170 = vrot.lane.b32.xlu0 %v419, 28
      %v1171 = vpop.permute.xlu0 %1170
      %1172 = vrot.lane.b32.xlu0 %v421, 28
      %v1173 = vpop.permute.xlu0 %1172
      %1174 = vrot.lane.b32.xlu0 %v424, 28
      %v1175 = vpop.permute.xlu0 %1174
      %1176 = vrot.lane.b32.xlu0 %v426, 28
      %v1177 = vpop.permute.xlu0 %1176
      %1178 = vrot.lane.b32.xlu0 %v429, 28
      %v1179 = vpop.permute.xlu0 %1178
      %1180 = vrot.lane.b32.xlu0 %v431, 28
      %v1181 = vpop.permute.xlu0 %1180
      %1182 = vrot.lane.b32.xlu0 %v434, 28
      %v1183 = vpop.permute.xlu0 %1182
      %1184 = vrot.lane.b32.xlu0 %v436, 28
      %v1185 = vpop.permute.xlu0 %1184
      %1186 = vrot.lane.b32.xlu0 %v439, 28
      %v1187 = vpop.permute.xlu0 %1186
      %1188 = vrot.lane.b32.xlu0 %v441, 28
      %v1189 = vpop.permute.xlu0 %1188
      %1190 = vrot.lane.b32.xlu0 %v444, 28
      %v1191 = vpop.permute.xlu0 %1190
      %1192 = vrot.lane.b32.xlu0 %v446, 28
      %v1193 = vpop.permute.xlu0 %1192
      %1194 = vrot.lane.b32.xlu0 %v449, 28
      %v1195 = vpop.permute.xlu0 %1194
      %1196 = vrot.lane.b32.xlu0 %v451, 28
      %v1197 = vpop.permute.xlu0 %1196
      %1198 = vrot.lane.b32.xlu0 %v454, 28
      %v1199 = vpop.permute.xlu0 %1198
      %1200 = vrot.lane.b32.xlu0 %v456, 28
      %v1201 = vpop.permute.xlu0 %1200
      %1202 = vrot.lane.b32.xlu0 %v459, 28
      %v1203 = vpop.permute.xlu0 %1202
      %1204 = vrot.lane.b32.xlu0 %v461, 28
      %v1205 = vpop.permute.xlu0 %1204
      %1206 = vrot.lane.b32.xlu0 %v464, 28
      %v1207 = vpop.permute.xlu0 %1206
      %1208 = vrot.lane.b32.xlu0 %v466, 28
      %v1209 = vpop.permute.xlu0 %1208
      %1210 = vrot.lane.b32.xlu0 %v469, 28
      %v1211 = vpop.permute.xlu0 %1210
      %1212 = vrot.lane.b32.xlu0 %v471, 28
      %v1213 = vpop.permute.xlu0 %1212
      %1214 = vrot.lane.b32.xlu0 %v474, 28
      %v1215 = vpop.permute.xlu0 %1214
      %1216 = vrot.lane.b32.xlu0 %v476, 28
      %v1217 = vpop.permute.xlu0 %1216
      %1218 = vrot.lane.b32.xlu0 %v479, 28
      %v1219 = vpop.permute.xlu0 %1218
      %1220 = vrot.lane.b32.xlu0 %v481, 28
      %v1221 = vpop.permute.xlu0 %1220
      %1222 = vrot.lane.b32.xlu0 %v484, 28
      %v1223 = vpop.permute.xlu0 %1222
      %1224 = vrot.lane.b32.xlu0 %v486, 28
      %v1225 = vpop.permute.xlu0 %1224
      %1226 = vrot.lane.b32.xlu0 %v573, 28
      %v1227 = vpop.permute.xlu0 %1226
      %1228 = vrot.lane.b32.xlu0 %v575, 28
      %v1229 = vpop.permute.xlu0 %1228
      %1230 = vrot.lane.b32.xlu0 %v586, 28
      %v1231 = vpop.permute.xlu0 %1230
      %1232 = vrot.lane.b32.xlu0 %v588, 28
      %v1233 = vpop.permute.xlu0 %1232
      %1266 = vrot.lane.b32.xlu0 %v500, 32
      %v1267 = vpop.permute.xlu0 %1266
      %1268 = vrot.lane.b32.xlu0 %v502, 32
      %v1269 = vpop.permute.xlu0 %1268
      %1270 = vrot.lane.b32.xlu0 %v505, 32
      %v1271 = vpop.permute.xlu0 %1270
      %1272 = vrot.lane.b32.xlu0 %v507, 32
      %v1273 = vpop.permute.xlu0 %1272
      %1274 = vrot.lane.b32.xlu0 %v510, 32
      %v1275 = vpop.permute.xlu0 %1274
      %1276 = vrot.lane.b32.xlu0 %v512, 32
      %v1277 = vpop.permute.xlu0 %1276
      %1278 = vrot.lane.b32.xlu0 %v515, 32
      %v1279 = vpop.permute.xlu0 %1278
      %1280 = vrot.lane.b32.xlu0 %v517, 32
      %v1281 = vpop.permute.xlu0 %1280
      %1282 = vrot.lane.b32.xlu0 %v520, 32
      %v1283 = vpop.permute.xlu0 %1282
      %1284 = vrot.lane.b32.xlu0 %v522, 32
      %v1285 = vpop.permute.xlu0 %1284
      %1286 = vrot.lane.b32.xlu0 %v525, 32
      %v1287 = vpop.permute.xlu0 %1286
      %1288 = vrot.lane.b32.xlu0 %v527, 32
      %v1289 = vpop.permute.xlu0 %1288
      %1290 = vrot.lane.b32.xlu0 %v530, 32
      %v1291 = vpop.permute.xlu0 %1290
      %1292 = vrot.lane.b32.xlu0 %v532, 32
      %v1293 = vpop.permute.xlu0 %1292
      %1294 = vrot.lane.b32.xlu0 %v535, 32
      %v1295 = vpop.permute.xlu0 %1294
      %1296 = vrot.lane.b32.xlu0 %v537, 32
      %v1297 = vpop.permute.xlu0 %1296
      %1298 = vrot.lane.b32.xlu0 %v540, 32
      %v1299 = vpop.permute.xlu0 %1298
      %1300 = vrot.lane.b32.xlu0 %v542, 32
      %v1301 = vpop.permute.xlu0 %1300
      %1302 = vrot.lane.b32.xlu0 %v545, 32
      %v1303 = vpop.permute.xlu0 %1302
      %1304 = vrot.lane.b32.xlu0 %v547, 32
      %v1305 = vpop.permute.xlu0 %1304
      %1306 = vrot.lane.b32.xlu0 %v550, 32
      %v1307 = vpop.permute.xlu0 %1306
      %1308 = vrot.lane.b32.xlu0 %v552, 32
      %v1309 = vpop.permute.xlu0 %1308
      %1310 = vrot.lane.b32.xlu0 %v555, 32
      %v1311 = vpop.permute.xlu0 %1310
      %1312 = vrot.lane.b32.xlu0 %v557, 32
      %v1313 = vpop.permute.xlu0 %1312
      %1314 = vrot.lane.b32.xlu0 %v560, 32
      %v1315 = vpop.permute.xlu0 %1314
      %1316 = vrot.lane.b32.xlu0 %v562, 32
      %v1317 = vpop.permute.xlu0 %1316
      %1318 = vrot.lane.b32.xlu0 %v565, 32
      %v1319 = vpop.permute.xlu0 %1318
      %1320 = vrot.lane.b32.xlu0 %v567, 32
      %v1321 = vpop.permute.xlu0 %1320
      %1322 = vrot.lane.b32.xlu0 %v578, 32
      %v1323 = vpop.permute.xlu0 %1322
      %1324 = vrot.lane.b32.xlu0 %v580, 32
      %v1325 = vpop.permute.xlu0 %1324
      %1326 = vrot.lane.b32.xlu0 %v591, 32
      %v1327 = vpop.permute.xlu0 %1326
      %1328 = vrot.lane.b32.xlu0 %v593, 32
      %v1329 = vpop.permute.xlu0 %1328
      %vm1362 = vcmask 31744
      %v1363 = vsel %vm1362, %v304, %v595
      %v1364 = vsel %vm1362, %v305, %v597
      %v1365 = vsel %vm1362, %v307, %v599
      %v1366 = vsel %vm1362, %v308, %v601
      %v1367 = vsel %vm1362, %v310, %v603
      %v1368 = vsel %vm1362, %v311, %v605
      %v1369 = vsel %vm1362, %v313, %v607
      %v1370 = vsel %vm1362, %v314, %v609
      %v1371 = vsel %vm1362, %v316, %v611
      %v1372 = vsel %vm1362, %v317, %v613
      %v1373 = vsel %vm1362, %v319, %v615
      %v1374 = vsel %vm1362, %v320, %v617
      %v1375 = vsel %vm1362, %v322, %v619
      %v1376 = vsel %vm1362, %v323, %v621
      %v1377 = vsel %vm1362, %v325, %v623
      %v1378 = vsel %vm1362, %v326, %v625
      %v1379 = vsel %vm1362, %v328, %v627
      %v1380 = vsel %vm1362, %v329, %v629
      %v1381 = vsel %vm1362, %v331, %v631
      %v1382 = vsel %vm1362, %v332, %v633
      %v1383 = vsel %vm1362, %v334, %v635
      %v1384 = vsel %vm1362, %v335, %v637
      %v1385 = vsel %vm1362, %v337, %v639
      %v1386 = vsel %vm1362, %v338, %v641
      %v1387 = vsel %vm1362, %v340, %v643
      %v1388 = vsel %vm1362, %v341, %v645
      %v1389 = vsel %vm1362, %v343, %v647
      %v1390 = vsel %vm1362, %v344, %v649
      %v1391 = vsel %vm1362, %v346, %v651
      %v1392 = vsel %vm1362, %v347, %v653
      %v1393 = vsel %vm1362, %v349, %v655
      %v1394 = vsel %vm1362, %v350, %v657
      %vm1395 = vcmask 64512
      %v1396 = vsel %vm1395, %v1363, %v691
      %v1397 = vsel %vm1395, %v1364, %v693
      %v1398 = vsel %vm1395, %v1365, %v695
      %v1399 = vsel %vm1395, %v1366, %v697
      %v1400 = vsel %vm1395, %v1367, %v699
      %v1401 = vsel %vm1395, %v1368, %v701
      %v1402 = vsel %vm1395, %v1369, %v703
      %v1403 = vsel %vm1395, %v1370, %v705
      %v1404 = vsel %vm1395, %v1371, %v707
      %v1405 = vsel %vm1395, %v1372, %v709
      %v1406 = vsel %vm1395, %v1373, %v711
      %v1407 = vsel %vm1395, %v1374, %v713
      %v1408 = vsel %vm1395, %v1375, %v715
      %v1409 = vsel %vm1395, %v1376, %v717
      %v1410 = vsel %vm1395, %v1377, %v719
      %v1411 = vsel %vm1395, %v1378, %v721
      %v1412 = vsel %vm1395, %v1379, %v723
      %v1413 = vsel %vm1395, %v1380, %v725
      %v1414 = vsel %vm1395, %v1381, %v727
      %v1415 = vsel %vm1395, %v1382, %v729
      %v1416 = vsel %vm1395, %v1383, %v731
      %v1417 = vsel %vm1395, %v1384, %v733
      %v1418 = vsel %vm1395, %v1385, %v735
      %v1419 = vsel %vm1395, %v1386, %v737
      %v1420 = vsel %vm1395, %v1387, %v739
      %v1421 = vsel %vm1395, %v1388, %v741
      %v1422 = vsel %vm1395, %v1389, %v743
      %v1423 = vsel %vm1395, %v1390, %v745
      %v1424 = vsel %vm1395, %v1391, %v747
      %v1425 = vsel %vm1395, %v1392, %v749
      %v1426 = vsel %vm1395, %v1393, %v751
      %v1427 = vsel %vm1395, %v1394, %v753
      %vm1428 = vcmask 97280
      %v1429 = vsel %vm1428, %v1396, %v787
      %v1430 = vsel %vm1428, %v1397, %v789
      %v1431 = vsel %vm1428, %v1398, %v791
      %v1432 = vsel %vm1428, %v1399, %v793
      %v1433 = vsel %vm1428, %v1400, %v795
      %v1434 = vsel %vm1428, %v1401, %v797
      %v1435 = vsel %vm1428, %v1402, %v799
      %v1436 = vsel %vm1428, %v1403, %v801
      %v1437 = vsel %vm1428, %v1404, %v803
      %v1438 = vsel %vm1428, %v1405, %v805
      %v1439 = vsel %vm1428, %v1406, %v807
      %v1440 = vsel %vm1428, %v1407, %v809
      %v1441 = vsel %vm1428, %v1408, %v811
      %v1442 = vsel %vm1428, %v1409, %v813
      %v1443 = vsel %vm1428, %v1410, %v815
      %v1444 = vsel %vm1428, %v1411, %v817
      %v1445 = vsel %vm1428, %v1412, %v819
      %v1446 = vsel %vm1428, %v1413, %v821
      %v1447 = vsel %vm1428, %v1414, %v823
      %v1448 = vsel %vm1428, %v1415, %v825
      %v1449 = vsel %vm1428, %v1416, %v827
      %v1450 = vsel %vm1428, %v1417, %v829
      %v1451 = vsel %vm1428, %v1418, %v831
      %v1452 = vsel %vm1428, %v1419, %v833
      %v1453 = vsel %vm1428, %v1420, %v835
      %v1454 = vsel %vm1428, %v1421, %v837
      %v1455 = vsel %vm1428, %v1422, %v839
      %v1456 = vsel %vm1428, %v1423, %v841
      %v1457 = vsel %vm1428, %v1424, %v843
      %v1458 = vsel %vm1428, %v1425, %v845
      %v1459 = vsel %vm1428, %v1426, %v847
      %v1460 = vsel %vm1428, %v1427, %v849
      %vm1461 = vcmask 130048
      %v1462 = vsel %vm1461, %v1429, %v883
      %v1463 = vsel %vm1461, %v1430, %v885
      %v1464 = vsel %vm1461, %v1431, %v887
      %v1465 = vsel %vm1461, %v1432, %v889
      %v1466 = vsel %vm1461, %v1433, %v891
      %v1467 = vsel %vm1461, %v1434, %v893
      %v1468 = vsel %vm1461, %v1435, %v895
      %v1469 = vsel %vm1461, %v1436, %v897
      %v1470 = vsel %vm1461, %v1437, %v899
      %v1471 = vsel %vm1461, %v1438, %v901
      %v1472 = vsel %vm1461, %v1439, %v903
      %v1473 = vsel %vm1461, %v1440, %v905
      %v1474 = vsel %vm1461, %v1441, %v907
      %v1475 = vsel %vm1461, %v1442, %v909
      %v1476 = vsel %vm1461, %v1443, %v911
      %v1477 = vsel %vm1461, %v1444, %v913
      %v1478 = vsel %vm1461, %v1445, %v915
      %v1479 = vsel %vm1461, %v1446, %v917
      %v1480 = vsel %vm1461, %v1447, %v919
      %v1481 = vsel %vm1461, %v1448, %v921
      %v1482 = vsel %vm1461, %v1449, %v923
      %v1483 = vsel %vm1461, %v1450, %v925
      %v1484 = vsel %vm1461, %v1451, %v927
      %v1485 = vsel %vm1461, %v1452, %v929
      %v1486 = vsel %vm1461, %v1453, %v931
      %v1487 = vsel %vm1461, %v1454, %v933
      %v1488 = vsel %vm1461, %v1455, %v935
      %v1489 = vsel %vm1461, %v1456, %v937
      %v1490 = vsel %vm1461, %v1457, %v939
      %v1491 = vsel %vm1461, %v1458, %v941
      %v1492 = vsel %vm1461, %v1459, %v943
      %v1493 = vsel %vm1461, %v1460, %v945
      %vm1494 = vcmask 162816
      %v1495 = vsel %vm1494, %v1462, %v979
      %v1496 = vsel %vm1494, %v1463, %v981
      %v1497 = vsel %vm1494, %v1464, %v983
      %v1498 = vsel %vm1494, %v1465, %v985
      %v1499 = vsel %vm1494, %v1466, %v987
      %v1500 = vsel %vm1494, %v1467, %v989
      %v1501 = vsel %vm1494, %v1468, %v991
      %v1502 = vsel %vm1494, %v1469, %v993
      %v1503 = vsel %vm1494, %v1470, %v995
      %v1504 = vsel %vm1494, %v1471, %v997
      %v1505 = vsel %vm1494, %v1472, %v999
      %v1506 = vsel %vm1494, %v1473, %v1001
      %v1507 = vsel %vm1494, %v1474, %v1003
      %v1508 = vsel %vm1494, %v1475, %v1005
      %v1509 = vsel %vm1494, %v1476, %v1007
      %v1510 = vsel %vm1494, %v1477, %v1009
      %v1511 = vsel %vm1494, %v1478, %v1011
      %v1512 = vsel %vm1494, %v1479, %v1013
      %v1513 = vsel %vm1494, %v1480, %v1015
      %v1514 = vsel %vm1494, %v1481, %v1017
      %v1515 = vsel %vm1494, %v1482, %v1019
      %v1516 = vsel %vm1494, %v1483, %v1021
      %v1517 = vsel %vm1494, %v1484, %v1023
      %v1518 = vsel %vm1494, %v1485, %v1025
      %v1519 = vsel %vm1494, %v1486, %v1027
      %v1520 = vsel %vm1494, %v1487, %v1029
      %v1521 = vsel %vm1494, %v1488, %v1031
      %v1522 = vsel %vm1494, %v1489, %v1033
      %v1523 = vsel %vm1494, %v1490, %v1035
      %v1524 = vsel %vm1494, %v1491, %v1037
      %v1525 = vsel %vm1494, %v1492, %v1039
      %v1526 = vsel %vm1494, %v1493, %v1041
      %vm1527 = vcmask 195584
      %v1528 = vsel %vm1527, %v1495, %v1075
      %v1529 = vsel %vm1527, %v1496, %v1077
      %v1530 = vsel %vm1527, %v1497, %v1079
      %v1531 = vsel %vm1527, %v1498, %v1081
      %v1532 = vsel %vm1527, %v1499, %v1083
      %v1533 = vsel %vm1527, %v1500, %v1085
      %v1534 = vsel %vm1527, %v1501, %v1087
      %v1535 = vsel %vm1527, %v1502, %v1089
      %v1536 = vsel %vm1527, %v1503, %v1091
      %v1537 = vsel %vm1527, %v1504, %v1093
      %v1538 = vsel %vm1527, %v1505, %v1095
      %v1539 = vsel %vm1527, %v1506, %v1097
      %v1540 = vsel %vm1527, %v1507, %v1099
      %v1541 = vsel %vm1527, %v1508, %v1101
      %v1542 = vsel %vm1527, %v1509, %v1103
      %v1543 = vsel %vm1527, %v1510, %v1105
      %v1544 = vsel %vm1527, %v1511, %v1107
      %v1545 = vsel %vm1527, %v1512, %v1109
      %v1546 = vsel %vm1527, %v1513, %v1111
      %v1547 = vsel %vm1527, %v1514, %v1113
      %v1548 = vsel %vm1527, %v1515, %v1115
      %v1549 = vsel %vm1527, %v1516, %v1117
      %v1550 = vsel %vm1527, %v1517, %v1119
      %v1551 = vsel %vm1527, %v1518, %v1121
      %v1552 = vsel %vm1527, %v1519, %v1123
      %v1553 = vsel %vm1527, %v1520, %v1125
      %v1554 = vsel %vm1527, %v1521, %v1127
      %v1555 = vsel %vm1527, %v1522, %v1129
      %v1556 = vsel %vm1527, %v1523, %v1131
      %v1557 = vsel %vm1527, %v1524, %v1133
      %v1558 = vsel %vm1527, %v1525, %v1135
      %v1559 = vsel %vm1527, %v1526, %v1137
      %vm1560 = vcmask 228352
      %v1561 = vsel %vm1560, %v1528, %v1171
      %v1562 = vsel %vm1560, %v1529, %v1173
      %v1563 = vsel %vm1560, %v1530, %v1175
      %v1564 = vsel %vm1560, %v1531, %v1177
      %v1565 = vsel %vm1560, %v1532, %v1179
      %v1566 = vsel %vm1560, %v1533, %v1181
      %v1567 = vsel %vm1560, %v1534, %v1183
      %v1568 = vsel %vm1560, %v1535, %v1185
      %v1569 = vsel %vm1560, %v1536, %v1187
      %v1570 = vsel %vm1560, %v1537, %v1189
      %v1571 = vsel %vm1560, %v1538, %v1191
      %v1572 = vsel %vm1560, %v1539, %v1193
      %v1573 = vsel %vm1560, %v1540, %v1195
      %v1574 = vsel %vm1560, %v1541, %v1197
      %v1575 = vsel %vm1560, %v1542, %v1199
      %v1576 = vsel %vm1560, %v1543, %v1201
      %v1577 = vsel %vm1560, %v1544, %v1203
      %v1578 = vsel %vm1560, %v1545, %v1205
      %v1579 = vsel %vm1560, %v1546, %v1207
      %v1580 = vsel %vm1560, %v1547, %v1209
      %v1581 = vsel %vm1560, %v1548, %v1211
      %v1582 = vsel %vm1560, %v1549, %v1213
      %v1583 = vsel %vm1560, %v1550, %v1215
      %v1584 = vsel %vm1560, %v1551, %v1217
      %v1585 = vsel %vm1560, %v1552, %v1219
      %v1586 = vsel %vm1560, %v1553, %v1221
      %v1587 = vsel %vm1560, %v1554, %v1223
      %v1588 = vsel %vm1560, %v1555, %v1225
      %v1589 = vsel %vm1560, %v1556, %v1227
      %v1590 = vsel %vm1560, %v1557, %v1229
      %v1591 = vsel %vm1560, %v1558, %v1231
      %v1592 = vsel %vm1560, %v1559, %v1233
      %vm1593 = vcmask 261120
      %v1594 = vsel %vm1593, %v1561, %v1267
      %v1595 = vsel %vm1593, %v1562, %v1269
      %v1596 = vsel %vm1593, %v1563, %v1271
      %v1597 = vsel %vm1593, %v1564, %v1273
      %v1598 = vsel %vm1593, %v1565, %v1275
      %v1599 = vsel %vm1593, %v1566, %v1277
      %v1600 = vsel %vm1593, %v1567, %v1279
      %v1601 = vsel %vm1593, %v1568, %v1281
      %v1602 = vsel %vm1593, %v1569, %v1283
      %v1603 = vsel %vm1593, %v1570, %v1285
      %v1604 = vsel %vm1593, %v1571, %v1287
      %v1605 = vsel %vm1593, %v1572, %v1289
      %v1606 = vsel %vm1593, %v1573, %v1291
      %v1607 = vsel %vm1593, %v1574, %v1293
      %v1608 = vsel %vm1593, %v1575, %v1295
      %v1609 = vsel %vm1593, %v1576, %v1297
      %v1610 = vsel %vm1593, %v1577, %v1299
      %v1611 = vsel %vm1593, %v1578, %v1301
      %v1612 = vsel %vm1593, %v1579, %v1303
      %v1613 = vsel %vm1593, %v1580, %v1305
      %v1614 = vsel %vm1593, %v1581, %v1307
      %v1615 = vsel %vm1593, %v1582, %v1309
      %v1616 = vsel %vm1593, %v1583, %v1311
      %v1617 = vsel %vm1593, %v1584, %v1313
      %v1618 = vsel %vm1593, %v1585, %v1315
      %v1619 = vsel %vm1593, %v1586, %v1317
      %v1620 = vsel %vm1593, %v1587, %v1319
      %v1621 = vsel %vm1593, %v1588, %v1321
      %v1622 = vsel %vm1593, %v1589, %v1323
      %v1623 = vsel %vm1593, %v1590, %v1325
      %v1624 = vsel %vm1593, %v1591, %v1327
      %v1625 = vsel %vm1593, %v1592, %v1329
      %v1626 = vld [vmem:[%s2] sm:$0xff]
      %v1627 = vld [vmem:[%s2 + $0x8] sm:$0xff]
      %v1628 = vld [vmem:[%s2 + $0x10] sm:$0xff]
      %v1629 = vld [vmem:[%s2 + $0x18] sm:$0xff]
      %v1630 = vld [vmem:[%s2 + $0x20] sm:$0xf]
      %v1631 = vld [vmem:[%s3] sm:$0x1]
      %v1633 = vlaneseq
      %v1634 = vshrl.u32 %v1633, 7
      %v1635 = vsub.s32 0, %v1634
      %v1636 = vrot.slane %v1631, %v1635
      %vm1638 = vcmask 293888
      %v1640 = vsel %vm1638, %v1594, 0
      %v1643 = vsel %vm1638, %v1595, 0
      %v1646 = vsel %vm1638, %v1596, 0
      %v1649 = vsel %vm1638, %v1597, 0
      %v1652 = vsel %vm1638, %v1598, 0
      %v1655 = vsel %vm1638, %v1599, 0
      %v1658 = vsel %vm1638, %v1600, 0
      %v1661 = vsel %vm1638, %v1601, 0
      %v1664 = vsel %vm1638, %v1602, 0
      %v1667 = vsel %vm1638, %v1603, 0
      %v1670 = vsel %vm1638, %v1604, 0
      %v1673 = vsel %vm1638, %v1605, 0
      %v1676 = vsel %vm1638, %v1606, 0
      %v1679 = vsel %vm1638, %v1607, 0
      %v1682 = vsel %vm1638, %v1608, 0
      %v1685 = vsel %vm1638, %v1609, 0
      %v1688 = vsel %vm1638, %v1610, 0
      %v1691 = vsel %vm1638, %v1611, 0
      %v1694 = vsel %vm1638, %v1612, 0
      %v1697 = vsel %vm1638, %v1613, 0
      %v1700 = vsel %vm1638, %v1614, 0
      %v1703 = vsel %vm1638, %v1615, 0
      %v1706 = vsel %vm1638, %v1616, 0
      %v1709 = vsel %vm1638, %v1617, 0
      %v1712 = vsel %vm1638, %v1618, 0
      %v1715 = vsel %vm1638, %v1619, 0
      %v1718 = vsel %vm1638, %v1620, 0
      %v1721 = vsel %vm1638, %v1621, 0
      %v1724 = vsel %vm1638, %v1622, 0
      %v1727 = vsel %vm1638, %v1623, 0
      %v1730 = vsel %vm1638, %v1624, 0
      %v1733 = vsel %vm1638, %v1625, 0
      %vm1735 = vcmask 1043456
      %v1737 = vsel %vm1735, %v1630, 0
      %1739 = vmatprep.subr.mxu0 0.0
      %1740 = vmatpush1.msra.mxu0 %v1626
      %1741 = vmatprep.subr.mxu0 0.0
      %1742 = vmatpush1.msra.mxu0 %v1627
      %1743 = vmatprep.subr.mxu0 0.0
      %1744 = vmatpush1.msra.mxu0 %v1628
      %1745 = vmatprep.subr.mxu0 0.0
      %1746 = vmatpush1.msra.mxu0 %v1629
      %1747 = vmatprep.subr.mxu0 0.0
      %1748 = vmatpush1.msra.mxu0 %v1737
      %1749 = vmatprep.subr.mxu0 0.0
      %1750 = vmatpush1.msra.mxu0 0.0
      %1751 = vmatprep.subr.mxu0 0.0
      %1752 = vmatpush1.msra.mxu0 0.0
      %1753 = vmatprep.subr.mxu0 0.0
      %1754 = vmatpush1.msra.mxu0 0.0
      %1755 = vmatprep.subr.mxu0 0.0
      %1756 = vmatpush1.msra.mxu0 0.0
      %1757 = vmatprep.subr.mxu0 0.0
      %1758 = vmatpush1.msra.mxu0 0.0
      %1759 = vmatprep.subr.mxu0 0.0
      %1760 = vmatpush1.msra.mxu0 0.0
      %1761 = vmatprep.subr.mxu0 0.0
      %1762 = vmatpush1.msra.mxu0 0.0
      %1763 = vmatprep.subr.mxu0 0.0
      %1764 = vmatpush1.msra.mxu0 0.0
      %1765 = vmatprep.subr.mxu0 0.0
      %1766 = vmatpush1.msra.mxu0 0.0
      %1767 = vmatprep.subr.mxu0 0.0
      %1768 = vmatpush1.msra.mxu0 0.0
      %1769 = vmatprep.subr.mxu0 0.0
      %1770 = vmatpush1.msra.mxu0 0.0
      %1771 = vmatprep.subr.mxu0 0.0
      %1772 = vmatpush1.msra.mxu0 0.0
      %1773 = vmatprep.subr.mxu0 0.0
      %1774 = vmatpush1.msra.mxu0 0.0
      %1775 = vmatprep.subr.mxu0 0.0
      %1776 = vmatpush1.msra.mxu0 0.0
      %1777 = vmatprep.subr.mxu0 0.0
      %1778 = vmatpush1.msra.mxu0 0.0
      %1779 = vmatprep.subr.mxu0 0.0
      %1780 = vmatpush1.msra.mxu0 0.0
      %1781 = vmatprep.subr.mxu0 0.0
      %1782 = vmatpush1.msra.mxu0 0.0
      %1783 = vmatprep.subr.mxu0 0.0
      %1784 = vmatpush1.msra.mxu0 0.0
      %1785 = vmatprep.subr.mxu0 0.0
      %1786 = vmatpush1.msra.mxu0 0.0
      %1787 = vmatprep.subr.mxu0 0.0
      %1788 = vmatpush1.msra.mxu0 0.0
      %1789 = vmatprep.subr.mxu0 0.0
      %1790 = vmatpush1.msra.mxu0 0.0
      %1791 = vmatprep.subr.mxu0 0.0
      %1792 = vmatpush1.msra.mxu0 0.0
      %1793 = vmatprep.subr.mxu0 0.0
      %1794 = vmatpush1.msra.mxu0 0.0
      %1795 = vmatprep.subr.mxu0 0.0
      %1796 = vmatpush1.msra.mxu0 0.0
      %1797 = vmatprep.subr.mxu0 0.0
      %1798 = vmatpush1.msra.mxu0 0.0
      %1799 = vmatprep.subr.mxu0 0.0
      %1800 = vmatpush1.msra.mxu0 0.0
      %1801 = vmatprep.subr.mxu0 0.0
      %1802 = vmatpush1.msra.mxu0 0.0
      %1803 = vmatprep.mubr.f32.mxu0 0.0
      %1804 = vmatmul.mubr.f32.gmra.mrb[0].mxu0 %v1640
      %v1805 = vpop.f32.mrb[0].mxu0
      %v1806 = vadd.f32 %v1636, %v1805
      %v1807 = vpop.f32.mrb[0].mxu0
      %1808 = vmatprep.mubr.f32.mxu0 0.0
      %1809 = vmatmul.mubr.f32.gmra.mrb[0].mxu0 %v1643
      %v1810 = vpop.f32.mrb[0].mxu0
      %v1811 = vadd.f32 %v1636, %v1810
      %v1812 = vpop.f32.mrb[0].mxu0
      %1813 = vmatprep.mubr.f32.mxu0 0.0
      %1814 = vmatmul.mubr.f32.gmra.mrb[0].mxu0 %v1646
      %v1815 = vpop.f32.mrb[0].mxu0
      %v1816 = vadd.f32 %v1636, %v1815
      %v1817 = vpop.f32.mrb[0].mxu0
      %1818 = vmatprep.mubr.f32.mxu0 0.0
      %1819 = vmatmul.mubr.f32.gmra.mrb[0].mxu0 %v1649
      %v1820 = vpop.f32.mrb[0].mxu0
      %v1821 = vadd.f32 %v1636, %v1820
      %v1822 = vpop.f32.mrb[0].mxu0
      %1823 = vmatprep.mubr.f32.mxu0 0.0
      %1824 = vmatmul.mubr.f32.gmra.mrb[0].mxu0 %v1652
      %v1825 = vpop.f32.mrb[0].mxu0
      %v1826 = vadd.f32 %v1636, %v1825
      %v1827 = vpop.f32.mrb[0].mxu0
      %1828 = vmatprep.mubr.f32.mxu0 0.0
      %1829 = vmatmul.mubr.f32.gmra.mrb[0].mxu0 %v1655
      %v1830 = vpop.f32.mrb[0].mxu0
      %v1831 = vadd.f32 %v1636, %v1830
      %v1832 = vpop.f32.mrb[0].mxu0
      %1833 = vmatprep.mubr.f32.mxu0 0.0
      %1834 = vmatmul.mubr.f32.gmra.mrb[0].mxu0 %v1658
      %v1835 = vpop.f32.mrb[0].mxu0
      %v1836 = vadd.f32 %v1636, %v1835
      %v1837 = vpop.f32.mrb[0].mxu0
      %1838 = vmatprep.mubr.f32.mxu0 0.0
      %1839 = vmatmul.mubr.f32.gmra.mrb[0].mxu0 %v1661
      %v1840 = vpop.f32.mrb[0].mxu0
      %v1841 = vadd.f32 %v1636, %v1840
      %v1842 = vpop.f32.mrb[0].mxu0
      %1843 = vmatprep.mubr.f32.mxu0 0.0
      %1844 = vmatmul.mubr.f32.gmra.mrb[0].mxu0 %v1664
      %v1845 = vpop.f32.mrb[0].mxu0
      %v1846 = vadd.f32 %v1636, %v1845
      %v1847 = vpop.f32.mrb[0].mxu0
      %1848 = vmatprep.mubr.f32.mxu0 0.0
      %1849 = vmatmul.mubr.f32.gmra.mrb[0].mxu0 %v1667
      %v1850 = vpop.f32.mrb[0].mxu0
      %v1851 = vadd.f32 %v1636, %v1850
      %v1852 = vpop.f32.mrb[0].mxu0
      %1853 = vmatprep.mubr.f32.mxu0 0.0
      %1854 = vmatmul.mubr.f32.gmra.mrb[0].mxu0 %v1670
      %v1855 = vpop.f32.mrb[0].mxu0
      %v1856 = vadd.f32 %v1636, %v1855
      %v1857 = vpop.f32.mrb[0].mxu0
      %1858 = vmatprep.mubr.f32.mxu0 0.0
      %1859 = vmatmul.mubr.f32.gmra.mrb[0].mxu0 %v1673
      %v1860 = vpop.f32.mrb[0].mxu0
      %v1861 = vadd.f32 %v1636, %v1860
      %v1862 = vpop.f32.mrb[0].mxu0
      %1863 = vmatprep.mubr.f32.mxu0 0.0
      %1864 = vmatmul.mubr.f32.gmra.mrb[0].mxu0 %v1676
      %v1865 = vpop.f32.mrb[0].mxu0
      %v1866 = vadd.f32 %v1636, %v1865
      %v1867 = vpop.f32.mrb[0].mxu0
      %1868 = vmatprep.mubr.f32.mxu0 0.0
      %1869 = vmatmul.mubr.f32.gmra.mrb[0].mxu0 %v1679
      %v1870 = vpop.f32.mrb[0].mxu0
      %v1871 = vadd.f32 %v1636, %v1870
      %v1872 = vpop.f32.mrb[0].mxu0
      %1873 = vmatprep.mubr.f32.mxu0 0.0
      %1874 = vmatmul.mubr.f32.gmra.mrb[0].mxu0 %v1682
      %v1875 = vpop.f32.mrb[0].mxu0
      %v1876 = vadd.f32 %v1636, %v1875
      %v1877 = vpop.f32.mrb[0].mxu0
      %1878 = vmatprep.mubr.f32.mxu0 0.0
      %1879 = vmatmul.mubr.f32.gmra.mrb[0].mxu0 %v1685
      %v1880 = vpop.f32.mrb[0].mxu0
      %v1881 = vadd.f32 %v1636, %v1880
      %v1882 = vpop.f32.mrb[0].mxu0
      %1883 = vmatprep.mubr.f32.mxu0 0.0
      %1884 = vmatmul.mubr.f32.gmra.mrb[0].mxu0 %v1688
      %v1885 = vpop.f32.mrb[0].mxu0
      %v1886 = vadd.f32 %v1636, %v1885
      %v1887 = vpop.f32.mrb[0].mxu0
      %1888 = vmatprep.mubr.f32.mxu0 0.0
      %1889 = vmatmul.mubr.f32.gmra.mrb[0].mxu0 %v1691
      %v1890 = vpop.f32.mrb[0].mxu0
      %v1891 = vadd.f32 %v1636, %v1890
      %v1892 = vpop.f32.mrb[0].mxu0
      %1893 = vmatprep.mubr.f32.mxu0 0.0
      %1894 = vmatmul.mubr.f32.gmra.mrb[0].mxu0 %v1694
      %v1895 = vpop.f32.mrb[0].mxu0
      %v1896 = vadd.f32 %v1636, %v1895
      %v1897 = vpop.f32.mrb[0].mxu0
      %1898 = vmatprep.mubr.f32.mxu0 0.0
      %1899 = vmatmul.mubr.f32.gmra.mrb[0].mxu0 %v1697
      %v1900 = vpop.f32.mrb[0].mxu0
      %v1901 = vadd.f32 %v1636, %v1900
      %v1902 = vpop.f32.mrb[0].mxu0
      %1903 = vmatprep.mubr.f32.mxu0 0.0
      %1904 = vmatmul.mubr.f32.gmra.mrb[0].mxu0 %v1700
      %v1905 = vpop.f32.mrb[0].mxu0
      %v1906 = vadd.f32 %v1636, %v1905
      %v1907 = vpop.f32.mrb[0].mxu0
      %1908 = vmatprep.mubr.f32.mxu0 0.0
      %1909 = vmatmul.mubr.f32.gmra.mrb[0].mxu0 %v1703
      %v1910 = vpop.f32.mrb[0].mxu0
      %v1911 = vadd.f32 %v1636, %v1910
      %v1912 = vpop.f32.mrb[0].mxu0
      %1913 = vmatprep.mubr.f32.mxu0 0.0
      %1914 = vmatmul.mubr.f32.gmra.mrb[0].mxu0 %v1706
      %v1915 = vpop.f32.mrb[0].mxu0
      %v1916 = vadd.f32 %v1636, %v1915
      %v1917 = vpop.f32.mrb[0].mxu0
      %1918 = vmatprep.mubr.f32.mxu0 0.0
      %1919 = vmatmul.mubr.f32.gmra.mrb[0].mxu0 %v1709
      %v1920 = vpop.f32.mrb[0].mxu0
      %v1921 = vadd.f32 %v1636, %v1920
      %v1922 = vpop.f32.mrb[0].mxu0
      %1923 = vmatprep.mubr.f32.mxu0 0.0
      %1924 = vmatmul.mubr.f32.gmra.mrb[0].mxu0 %v1712
      %v1925 = vpop.f32.mrb[0].mxu0
      %v1926 = vadd.f32 %v1636, %v1925
      %v1927 = vpop.f32.mrb[0].mxu0
      %1928 = vmatprep.mubr.f32.mxu0 0.0
      %1929 = vmatmul.mubr.f32.gmra.mrb[0].mxu0 %v1715
      %v1930 = vpop.f32.mrb[0].mxu0
      %v1931 = vadd.f32 %v1636, %v1930
      %v1932 = vpop.f32.mrb[0].mxu0
      %1933 = vmatprep.mubr.f32.mxu0 0.0
      %1934 = vmatmul.mubr.f32.gmra.mrb[0].mxu0 %v1718
      %v1935 = vpop.f32.mrb[0].mxu0
      %v1936 = vadd.f32 %v1636, %v1935
      %v1937 = vpop.f32.mrb[0].mxu0
      %1938 = vmatprep.mubr.f32.mxu0 0.0
      %1939 = vmatmul.mubr.f32.gmra.mrb[0].mxu0 %v1721
      %v1940 = vpop.f32.mrb[0].mxu0
      %v1941 = vadd.f32 %v1636, %v1940
      %v1942 = vpop.f32.mrb[0].mxu0
      %1943 = vmatprep.mubr.f32.mxu0 0.0
      %1944 = vmatmul.mubr.f32.gmra.mrb[0].mxu0 %v1724
      %v1945 = vpop.f32.mrb[0].mxu0
      %v1946 = vadd.f32 %v1636, %v1945
      %v1947 = vpop.f32.mrb[0].mxu0
      %1948 = vmatprep.mubr.f32.mxu0 0.0
      %1949 = vmatmul.mubr.f32.gmra.mrb[0].mxu0 %v1727
      %v1950 = vpop.f32.mrb[0].mxu0
      %v1951 = vadd.f32 %v1636, %v1950
      %v1952 = vpop.f32.mrb[0].mxu0
      %1953 = vmatprep.mubr.f32.mxu0 0.0
      %1954 = vmatmul.mubr.f32.gmra.mrb[0].mxu0 %v1730
      %v1955 = vpop.f32.mrb[0].mxu0
      %v1956 = vadd.f32 %v1636, %v1955
      %v1957 = vpop.f32.mrb[0].mxu0
      %1958 = vmatprep.mubr.f32.mxu0 0.0
      %1959 = vmatmul.mubr.f32.gmra.mrb[0].mxu0 %v1733
      %v1960 = vpop.f32.mrb[0].mxu0
      %v1961 = vadd.f32 %v1636, %v1960
      %v1962 = vpop.f32.mrb[0].mxu0
      %1963 = vdwg.mxu0
      %v1964 = vmax.f32 %v1806, 0.0
      %v1965 = vmax.f32 %v1811, 0.0
      %v1966 = vmax.f32 %v1816, 0.0
      %v1967 = vmax.f32 %v1821, 0.0
      %v1968 = vmax.f32 %v1826, 0.0
      %v1969 = vmax.f32 %v1831, 0.0
      %v1970 = vmax.f32 %v1836, 0.0
      %v1971 = vmax.f32 %v1841, 0.0
      %v1972 = vmax.f32 %v1846, 0.0
      %v1973 = vmax.f32 %v1851, 0.0
      %v1974 = vmax.f32 %v1856, 0.0
      %v1975 = vmax.f32 %v1861, 0.0
      %v1976 = vmax.f32 %v1866, 0.0
      %v1977 = vmax.f32 %v1871, 0.0
      %v1978 = vmax.f32 %v1876, 0.0
      %v1979 = vmax.f32 %v1881, 0.0
      %v1980 = vmax.f32 %v1886, 0.0
      %v1981 = vmax.f32 %v1891, 0.0
      %v1982 = vmax.f32 %v1896, 0.0
      %v1983 = vmax.f32 %v1901, 0.0
      %v1984 = vmax.f32 %v1906, 0.0
      %v1985 = vmax.f32 %v1911, 0.0
      %v1986 = vmax.f32 %v1916, 0.0
      %v1987 = vmax.f32 %v1921, 0.0
      %v1988 = vmax.f32 %v1926, 0.0
      %v1989 = vmax.f32 %v1931, 0.0
      %v1990 = vmax.f32 %v1936, 0.0
      %v1991 = vmax.f32 %v1941, 0.0
      %v1992 = vmax.f32 %v1946, 0.0
      %v1993 = vmax.f32 %v1951, 0.0
      %v1994 = vmax.f32 %v1956, 0.0
      %v1995 = vmax.f32 %v1961, 0.0
      %2028 = vrot.lane.b32.xlu0 %v1964, 120
      %v2029 = vpop.permute.xlu0 %2028
      %2030 = vrot.lane.b32.xlu0 %v1965, 120
      %v2031 = vpop.permute.xlu0 %2030
      %2032 = vrot.lane.b32.xlu0 %v1966, 120
      %v2033 = vpop.permute.xlu0 %2032
      %2034 = vrot.lane.b32.xlu0 %v1967, 120
      %v2035 = vpop.permute.xlu0 %2034
      %2036 = vrot.lane.b32.xlu0 %v1968, 120
      %v2037 = vpop.permute.xlu0 %2036
      %2038 = vrot.lane.b32.xlu0 %v1969, 120
      %v2039 = vpop.permute.xlu0 %2038
      %2040 = vrot.lane.b32.xlu0 %v1970, 120
      %v2041 = vpop.permute.xlu0 %2040
      %2042 = vrot.lane.b32.xlu0 %v1971, 120
      %v2043 = vpop.permute.xlu0 %2042
      %2044 = vrot.lane.b32.xlu0 %v1972, 120
      %v2045 = vpop.permute.xlu0 %2044
      %2046 = vrot.lane.b32.xlu0 %v1973, 120
      %v2047 = vpop.permute.xlu0 %2046
      %2048 = vrot.lane.b32.xlu0 %v1974, 120
      %v2049 = vpop.permute.xlu0 %2048
      %2050 = vrot.lane.b32.xlu0 %v1975, 120
      %v2051 = vpop.permute.xlu0 %2050
      %2052 = vrot.lane.b32.xlu0 %v1976, 120
      %v2053 = vpop.permute.xlu0 %2052
      %2054 = vrot.lane.b32.xlu0 %v1977, 120
      %v2055 = vpop.permute.xlu0 %2054
      %2056 = vrot.lane.b32.xlu0 %v1978, 120
      %v2057 = vpop.permute.xlu0 %2056
      %2058 = vrot.lane.b32.xlu0 %v1979, 120
      %v2059 = vpop.permute.xlu0 %2058
      %2060 = vrot.lane.b32.xlu0 %v1980, 120
      %v2061 = vpop.permute.xlu0 %2060
      %2062 = vrot.lane.b32.xlu0 %v1981, 120
      %v2063 = vpop.permute.xlu0 %2062
      %2064 = vrot.lane.b32.xlu0 %v1982, 120
      %v2065 = vpop.permute.xlu0 %2064
      %2066 = vrot.lane.b32.xlu0 %v1983, 120
      %v2067 = vpop.permute.xlu0 %2066
      %2068 = vrot.lane.b32.xlu0 %v1984, 120
      %v2069 = vpop.permute.xlu0 %2068
      %2070 = vrot.lane.b32.xlu0 %v1985, 120
      %v2071 = vpop.permute.xlu0 %2070
      %2072 = vrot.lane.b32.xlu0 %v1986, 120
      %v2073 = vpop.permute.xlu0 %2072
      %2074 = vrot.lane.b32.xlu0 %v1987, 120
      %v2075 = vpop.permute.xlu0 %2074
      %2076 = vrot.lane.b32.xlu0 %v1988, 120
      %v2077 = vpop.permute.xlu0 %2076
      %2078 = vrot.lane.b32.xlu0 %v1989, 120
      %v2079 = vpop.permute.xlu0 %2078
      %2080 = vrot.lane.b32.xlu0 %v1990, 120
      %v2081 = vpop.permute.xlu0 %2080
      %2082 = vrot.lane.b32.xlu0 %v1991, 120
      %v2083 = vpop.permute.xlu0 %2082
      %2084 = vrot.lane.b32.xlu0 %v1992, 120
      %v2085 = vpop.permute.xlu0 %2084
      %2086 = vrot.lane.b32.xlu0 %v1993, 120
      %v2087 = vpop.permute.xlu0 %2086
      %2088 = vrot.lane.b32.xlu0 %v1994, 120
      %v2089 = vpop.permute.xlu0 %2088
      %2090 = vrot.lane.b32.xlu0 %v1995, 120
      %v2091 = vpop.permute.xlu0 %2090
      %v2124 = vsub.f32 %v1964, %v2029
      %v2125 = vsub.f32 %v1965, %v2031
      %v2126 = vsub.f32 %v1966, %v2033
      %v2127 = vsub.f32 %v1967, %v2035
      %v2128 = vsub.f32 %v1968, %v2037
      %v2129 = vsub.f32 %v1969, %v2039
      %v2130 = vsub.f32 %v1970, %v2041
      %v2131 = vsub.f32 %v1971, %v2043
      %v2132 = vsub.f32 %v1972, %v2045
      %v2133 = vsub.f32 %v1973, %v2047
      %v2134 = vsub.f32 %v1974, %v2049
      %v2135 = vsub.f32 %v1975, %v2051
      %v2136 = vsub.f32 %v1976, %v2053
      %v2137 = vsub.f32 %v1977, %v2055
      %v2138 = vsub.f32 %v1978, %v2057
      %v2139 = vsub.f32 %v1979, %v2059
      %v2140 = vsub.f32 %v1980, %v2061
      %v2141 = vsub.f32 %v1981, %v2063
      %v2142 = vsub.f32 %v1982, %v2065
      %v2143 = vsub.f32 %v1983, %v2067
      %v2144 = vsub.f32 %v1984, %v2069
      %v2145 = vsub.f32 %v1985, %v2071
      %v2146 = vsub.f32 %v1986, %v2073
      %v2147 = vsub.f32 %v1987, %v2075
      %v2148 = vsub.f32 %v1988, %v2077
      %v2149 = vsub.f32 %v1989, %v2079
      %v2150 = vsub.f32 %v1990, %v2081
      %v2151 = vsub.f32 %v1991, %v2083
      %v2152 = vsub.f32 %v1992, %v2085
      %v2153 = vsub.f32 %v1993, %v2087
      %v2154 = vsub.f32 %v1994, %v2089
      %v2155 = vsub.f32 %v1995, %v2091
      %v2156 = vmul.f32 %v2124, %v2124
      %v2157 = vmul.f32 %v2125, %v2125
      %v2158 = vmul.f32 %v2126, %v2126
      %v2159 = vmul.f32 %v2127, %v2127
      %v2160 = vmul.f32 %v2128, %v2128
      %v2161 = vmul.f32 %v2129, %v2129
      %v2162 = vmul.f32 %v2130, %v2130
      %v2163 = vmul.f32 %v2131, %v2131
      %v2164 = vmul.f32 %v2132, %v2132
      %v2165 = vmul.f32 %v2133, %v2133
      %v2166 = vmul.f32 %v2134, %v2134
      %v2167 = vmul.f32 %v2135, %v2135
      %v2168 = vmul.f32 %v2136, %v2136
      %v2169 = vmul.f32 %v2137, %v2137
      %v2170 = vmul.f32 %v2138, %v2138
      %v2171 = vmul.f32 %v2139, %v2139
      %v2172 = vmul.f32 %v2140, %v2140
      %v2173 = vmul.f32 %v2141, %v2141
      %v2174 = vmul.f32 %v2142, %v2142
      %v2175 = vmul.f32 %v2143, %v2143
      %v2176 = vmul.f32 %v2144, %v2144
      %v2177 = vmul.f32 %v2145, %v2145
      %v2178 = vmul.f32 %v2146, %v2146
      %v2179 = vmul.f32 %v2147, %v2147
      %v2180 = vmul.f32 %v2148, %v2148
      %v2181 = vmul.f32 %v2149, %v2149
      %v2182 = vmul.f32 %v2150, %v2150
      %v2183 = vmul.f32 %v2151, %v2151
      %v2184 = vmul.f32 %v2152, %v2152
      %v2185 = vmul.f32 %v2153, %v2153
      %v2186 = vmul.f32 %v2154, %v2154
      %v2187 = vmul.f32 %v2155, %v2155
      %v2188 = vsel %vm1395, %v2156, 0.0
      %v2189 = vsel %vm1395, %v2157, 0.0
      %v2190 = vadd.f32 %v2188, %v2189
      %v2191 = vsel %vm1395, %v2158, 0.0
      %v2192 = vadd.f32 %v2190, %v2191
      %v2193 = vsel %vm1395, %v2159, 0.0
      %v2194 = vadd.f32 %v2192, %v2193
      %v2195 = vsel %vm1395, %v2160, 0.0
      %v2196 = vadd.f32 %v2194, %v2195
      %v2197 = vsel %vm1395, %v2161, 0.0
      %v2198 = vadd.f32 %v2196, %v2197
      %v2199 = vsel %vm1395, %v2162, 0.0
      %v2200 = vadd.f32 %v2198, %v2199
      %v2201 = vsel %vm1395, %v2163, 0.0
      %v2202 = vadd.f32 %v2200, %v2201
      %v2203 = vsel %vm1395, %v2164, 0.0
      %v2204 = vadd.f32 %v2202, %v2203
      %v2205 = vsel %vm1395, %v2165, 0.0
      %v2206 = vadd.f32 %v2204, %v2205
      %v2207 = vsel %vm1395, %v2166, 0.0
      %v2208 = vadd.f32 %v2206, %v2207
      %v2209 = vsel %vm1395, %v2167, 0.0
      %v2210 = vadd.f32 %v2208, %v2209
      %v2211 = vsel %vm1395, %v2168, 0.0
      %v2212 = vadd.f32 %v2210, %v2211
      %v2213 = vsel %vm1395, %v2169, 0.0
      %v2214 = vadd.f32 %v2212, %v2213
      %v2215 = vsel %vm1395, %v2170, 0.0
      %v2216 = vadd.f32 %v2214, %v2215
      %v2217 = vsel %vm1395, %v2171, 0.0
      %v2218 = vadd.f32 %v2216, %v2217
      %v2219 = vsel %vm1395, %v2172, 0.0
      %v2220 = vadd.f32 %v2218, %v2219
      %v2221 = vsel %vm1395, %v2173, 0.0
      %v2222 = vadd.f32 %v2220, %v2221
      %v2223 = vsel %vm1395, %v2174, 0.0
      %v2224 = vadd.f32 %v2222, %v2223
      %v2225 = vsel %vm1395, %v2175, 0.0
      %v2226 = vadd.f32 %v2224, %v2225
      %v2227 = vsel %vm1395, %v2176, 0.0
      %v2228 = vadd.f32 %v2226, %v2227
      %v2229 = vsel %vm1395, %v2177, 0.0
      %v2230 = vadd.f32 %v2228, %v2229
      %v2231 = vsel %vm1395, %v2178, 0.0
      %v2232 = vadd.f32 %v2230, %v2231
      %v2233 = vsel %vm1395, %v2179, 0.0
      %v2234 = vadd.f32 %v2232, %v2233
      %v2235 = vsel %vm1395, %v2180, 0.0
      %v2236 = vadd.f32 %v2234, %v2235
      %v2237 = vsel %vm1395, %v2181, 0.0
      %v2238 = vadd.f32 %v2236, %v2237
      %v2239 = vsel %vm1395, %v2182, 0.0
      %v2240 = vadd.f32 %v2238, %v2239
      %v2241 = vsel %vm1395, %v2183, 0.0
      %v2242 = vadd.f32 %v2240, %v2241
      %v2243 = vsel %vm1395, %v2184, 0.0
      %v2244 = vadd.f32 %v2242, %v2243
      %v2245 = vsel %vm1395, %v2185, 0.0
      %v2246 = vadd.f32 %v2244, %v2245
      %v2247 = vsel %vm1395, %v2186, 0.0
      %v2248 = vadd.f32 %v2246, %v2247
      %v2249 = vsel %vm1395, %v2187, 0.0
      %v2250 = vadd.f32 %v2248, %v2249
      %2251 = vadd.xlane.f32.xlu0 %v2250
      %v2252 = vpop.xlane.xlu0 %2251
      %v2253 = vrot.slane %v2252, 4
      %v2254 = vadd.f32 %v2252, %v2253
      %v2255 = vrot.slane %v2254, 2
      %v2256 = vadd.f32 %v2254, %v2255
      %v2257 = vrot.slane %v2256, 1
      %v2258 = vadd.f32 %v2256, %v2257
      %s2259 = vtos %v2258
      %v2260 = vstv %s2259
      %v2261 = vadd.f32 %v2260, 0.0
      %vm2262 = vcmask 0
      %2263 = vst.msk [vmem:[%s303] sm:$0x1] %vm2262, %v2261
      %2264 = vst.msk [vmem:[#allocation2] sm:$0xff] %vm1395, 0.0
      %2265 = vst.msk [vmem:[#allocation2 + $0x8] sm:$0xff] %vm1395, 0.0
      %vm2266 = vcmask 58368
      %2267 = vst.msk [vmem:[#allocation2 + $0x10] sm:$0x3] %vm2266, 0.0
      %2268 = vst.msk [vmem:[#allocation2 + $0x18] sm:$0xff] %vm1395, 0.0
      %2269 = vst.msk [vmem:[#allocation2 + $0x20] sm:$0xff] %vm1395, 0.0
      %2270 = vst.msk [vmem:[#allocation2 + $0x28] sm:$0x3] %vm2266, 0.0
      %2271 = vst.msk [vmem:[#allocation2 + $0x30] sm:$0xff] %vm1395, 0.0
      %2272 = vst.msk [vmem:[#allocation2 + $0x38] sm:$0xff] %vm1395, 0.0
      %2273 = vst.msk [vmem:[#allocation2 + $0x40] sm:$0x3] %vm2266, 0.0
      %2274 = vst.msk [vmem:[#allocation2 + $0x48] sm:$0xff] %vm1395, 0.0
      %2275 = vst.msk [vmem:[#allocation2 + $0x50] sm:$0xff] %vm1395, 0.0
      %2276 = vst.msk [vmem:[#allocation2 + $0x58] sm:$0x3] %vm2266, 0.0
      %2277 = vst.msk [vmem:[#allocation2 + $0x60] sm:$0xff] %vm1395, 0.0
      %2278 = vst.msk [vmem:[#allocation2 + $0x68] sm:$0xff] %vm1395, 0.0
      %2279 = vst.msk [vmem:[#allocation2 + $0x70] sm:$0x3] %vm2266, 0.0
      %2280 = vst.msk [vmem:[#allocation2 + $0x78] sm:$0xff] %vm1395, 0.0
      %2281 = vst.msk [vmem:[#allocation2 + $0x80] sm:$0xff] %vm1395, 0.0
      %2282 = vst.msk [vmem:[#allocation2 + $0x88] sm:$0x3] %vm2266, 0.0
      %2283 = vst.msk [vmem:[#allocation2 + $0x90] sm:$0xff] %vm1395, 0.0
      %2284 = vst.msk [vmem:[#allocation2 + $0x98] sm:$0xff] %vm1395, 0.0
      %2285 = vst.msk [vmem:[#allocation2 + $0xa0] sm:$0x3] %vm2266, 0.0
      %2286 = vst.msk [vmem:[#allocation2 + $0xa8] sm:$0xff] %vm1395, 0.0
      %2287 = vst.msk [vmem:[#allocation2 + $0xb0] sm:$0xff] %vm1395, 0.0
      %2288 = vst.msk [vmem:[#allocation2 + $0xb8] sm:$0x3] %vm2266, 0.0
      %2289 = vst.msk [vmem:[#allocation2 + $0xc0] sm:$0xff] %vm1395, 0.0
      %2290 = vst.msk [vmem:[#allocation2 + $0xc8] sm:$0xff] %vm1395, 0.0
      %2291 = vst.msk [vmem:[#allocation2 + $0xd0] sm:$0x3] %vm2266, 0.0
      %2292 = vst.msk [vmem:[#allocation2 + $0xd8] sm:$0xff] %vm1395, 0.0
      %2293 = vst.msk [vmem:[#allocation2 + $0xe0] sm:$0xff] %vm1395, 0.0
      %2294 = vst.msk [vmem:[#allocation2 + $0xe8] sm:$0x3] %vm2266, 0.0
      %2295 = vst.msk [vmem:[#allocation2 + $0xf0] sm:$0xff] %vm1395, 0.0
      %2296 = vst.msk [vmem:[#allocation2 + $0xf8] sm:$0xff] %vm1395, 0.0
      %2297 = vst.msk [vmem:[#allocation2 + $0x100] sm:$0x3] %vm2266, 0.0
      %2298 = vst.msk [vmem:[#allocation2 + $0x108] sm:$0xff] %vm1395, 0.0
      %2299 = vst.msk [vmem:[#allocation2 + $0x110] sm:$0xff] %vm1395, 0.0
      %2300 = vst.msk [vmem:[#allocation2 + $0x118] sm:$0x3] %vm2266, 0.0
      %2301 = vst.msk [vmem:[#allocation2 + $0x120] sm:$0xff] %vm1395, 0.0
      %2302 = vst.msk [vmem:[#allocation2 + $0x128] sm:$0xff] %vm1395, 0.0
      %2303 = vst.msk [vmem:[#allocation2 + $0x130] sm:$0x3] %vm2266, 0.0
      %2304 = vst.msk [vmem:[#allocation2 + $0x138] sm:$0xff] %vm1395, 0.0
      %2305 = vst.msk [vmem:[#allocation2 + $0x140] sm:$0xff] %vm1395, 0.0
      %2306 = vst.msk [vmem:[#allocation2 + $0x148] sm:$0x3] %vm2266, 0.0
      %2307 = vst.msk [vmem:[#allocation2 + $0x150] sm:$0xff] %vm1395, 0.0
      %2308 = vst.msk [vmem:[#allocation2 + $0x158] sm:$0xff] %vm1395, 0.0
      %2309 = vst.msk [vmem:[#allocation2 + $0x160] sm:$0x3] %vm2266, 0.0
      %2310 = vst.msk [vmem:[#allocation2 + $0x168] sm:$0xff] %vm1395, 0.0
      %2311 = vst.msk [vmem:[#allocation2 + $0x170] sm:$0xff] %vm1395, 0.0
      %2312 = vst.msk [vmem:[#allocation2 + $0x178] sm:$0x3] %vm2266, 0.0
      %2313 = vst.msk [vmem:[#allocation2 + $0x180] sm:$0xff] %vm1395, 0.0
      %2314 = vst.msk [vmem:[#allocation2 + $0x188] sm:$0xff] %vm1395, 0.0
      %2315 = vst.msk [vmem:[#allocation2 + $0x190] sm:$0x3] %vm2266, 0.0
      %2316 = vst.msk [vmem:[#allocation2 + $0x198] sm:$0xff] %vm1395, 0.0
      %2317 = vst.msk [vmem:[#allocation2 + $0x1a0] sm:$0xff] %vm1395, 0.0
      %2318 = vst.msk [vmem:[#allocation2 + $0x1a8] sm:$0x3] %vm2266, 0.0
      %s2319 = scalar_lea.vmem [#allocation2], 24
      %2320 = vst.msk [vmem:[%s2319 + $0x1] sm:$0xff] %vm1395, %v1964
      %2321 = vst.msk [vmem:[%s2319 + $0x9] sm:$0xff] %vm1395, %v1965
      %2322 = vst.msk [vmem:[%s2319 + $0x19] sm:$0xff] %vm1395, %v1966
      %2323 = vst.msk [vmem:[%s2319 + $0x21] sm:$0xff] %vm1395, %v1967
      %2324 = vst.msk [vmem:[%s2319 + $0x31] sm:$0xff] %vm1395, %v1968
      %2325 = vst.msk [vmem:[%s2319 + $0x39] sm:$0xff] %vm1395, %v1969
      %2326 = vst.msk [vmem:[%s2319 + $0x49] sm:$0xff] %vm1395, %v1970
      %2327 = vst.msk [vmem:[%s2319 + $0x51] sm:$0xff] %vm1395, %v1971
      %2328 = vst.msk [vmem:[%s2319 + $0x61] sm:$0xff] %vm1395, %v1972
      %2329 = vst.msk [vmem:[%s2319 + $0x69] sm:$0xff] %vm1395, %v1973
      %2330 = vst.msk [vmem:[%s2319 + $0x79] sm:$0xff] %vm1395, %v1974
      %2331 = vst.msk [vmem:[%s2319 + $0x81] sm:$0xff] %vm1395, %v1975
      %2332 = vst.msk [vmem:[%s2319 + $0x91] sm:$0xff] %vm1395, %v1976
      %2333 = vst.msk [vmem:[%s2319 + $0x99] sm:$0xff] %vm1395, %v1977
      %2334 = vst.msk [vmem:[%s2319 + $0xa9] sm:$0xff] %vm1395, %v1978
      %2335 = vst.msk [vmem:[%s2319 + $0xb1] sm:$0xff] %vm1395, %v1979
      %2336 = vst.msk [vmem:[%s2319 + $0xc1] sm:$0xff] %vm1395, %v1980
      %2337 = vst.msk [vmem:[%s2319 + $0xc9] sm:$0xff] %vm1395, %v1981
      %2338 = vst.msk [vmem:[%s2319 + $0xd9] sm:$0xff] %vm1395, %v1982
      %2339 = vst.msk [vmem:[%s2319 + $0xe1] sm:$0xff] %vm1395, %v1983
      %2340 = vst.msk [vmem:[%s2319 + $0xf1] sm:$0xff] %vm1395, %v1984
      %2341 = vst.msk [vmem:[%s2319 + $0xf9] sm:$0xff] %vm1395, %v1985
      %2342 = vst.msk [vmem:[%s2319 + $0x109] sm:$0xff] %vm1395, %v1986
      %2343 = vst.msk [vmem:[%s2319 + $0x111] sm:$0xff] %vm1395, %v1987
      %2344 = vst.msk [vmem:[%s2319 + $0x121] sm:$0xff] %vm1395, %v1988
      %2345 = vst.msk [vmem:[%s2319 + $0x129] sm:$0xff] %vm1395, %v1989
      %2346 = vst.msk [vmem:[%s2319 + $0x139] sm:$0xff] %vm1395, %v1990
      %2347 = vst.msk [vmem:[%s2319 + $0x141] sm:$0xff] %vm1395, %v1991
      %2348 = vst.msk [vmem:[%s2319 + $0x151] sm:$0xff] %vm1395, %v1992
      %2349 = vst.msk [vmem:[%s2319 + $0x159] sm:$0xff] %vm1395, %v1993
      %2350 = vst.msk [vmem:[%s2319 + $0x169] sm:$0xff] %vm1395, %v1994
      %2351 = vst.msk [vmem:[%s2319 + $0x171] sm:$0xff] %vm1395, %v1995
      %v2352 = vld [vmem:[#allocation2] sm:$0xff]
      %v2353 = vld [vmem:[#allocation2 + $0x8] sm:$0xff]
      %v2354 = vld [vmem:[#allocation2 + $0x10] sm:$0x3]
      %v2355 = vld [vmem:[#allocation2 + $0x18] sm:$0xff]
      %v2356 = vld [vmem:[#allocation2 + $0x20] sm:$0xff]
      %v2357 = vld [vmem:[#allocation2 + $0x28] sm:$0x3]
      %v2358 = vld [vmem:[#allocation2 + $0x30] sm:$0xff]
      %v2359 = vld [vmem:[#allocation2 + $0x38] sm:$0xff]
      %v2360 = vld [vmem:[#allocation2 + $0x40] sm:$0x3]
      %v2361 = vld [vmem:[#allocation2 + $0x48] sm:$0xff]
      %v2362 = vld [vmem:[#allocation2 + $0x50] sm:$0xff]
      %v2363 = vld [vmem:[#allocation2 + $0x58] sm:$0x3]
      %v2364 = vld [vmem:[#allocation2 + $0x60] sm:$0xff]
      %v2365 = vld [vmem:[#allocation2 + $0x68] sm:$0xff]
      %v2366 = vld [vmem:[#allocation2 + $0x70] sm:$0x3]
      %v2367 = vld [vmem:[#allocation2 + $0x78] sm:$0xff]
      %v2368 = vld [vmem:[#allocation2 + $0x80] sm:$0xff]
      %v2369 = vld [vmem:[#allocation2 + $0x88] sm:$0x3]
      %v2370 = vld [vmem:[#allocation2 + $0x90] sm:$0xff]
      %v2371 = vld [vmem:[#allocation2 + $0x98] sm:$0xff]
      %v2372 = vld [vmem:[#allocation2 + $0xa0] sm:$0x3]
      %v2373 = vld [vmem:[#allocation2 + $0xa8] sm:$0xff]
      %v2374 = vld [vmem:[#allocation2 + $0xb0] sm:$0xff]
      %v2375 = vld [vmem:[#allocation2 + $0xb8] sm:$0x3]
      %v2376 = vld [vmem:[#allocation2 + $0xc0] sm:$0xff]
      %v2377 = vld [vmem:[#allocation2 + $0xc8] sm:$0xff]
      %v2378 = vld [vmem:[#allocation2 + $0xd0] sm:$0x3]
      %v2379 = vld [vmem:[#allocation2 + $0xd8] sm:$0xff]
      %v2380 = vld [vmem:[#allocation2 + $0xe0] sm:$0xff]
      %v2381 = vld [vmem:[#allocation2 + $0xe8] sm:$0x3]
      %v2382 = vld [vmem:[#allocation2 + $0xf0] sm:$0xff]
      %v2383 = vld [vmem:[#allocation2 + $0xf8] sm:$0xff]
      %v2384 = vld [vmem:[#allocation2 + $0x100] sm:$0x3]
      %v2385 = vld [vmem:[#allocation2 + $0x108] sm:$0xff]
      %v2386 = vld [vmem:[#allocation2 + $0x110] sm:$0xff]
      %v2387 = vld [vmem:[#allocation2 + $0x118] sm:$0x3]
      %v2388 = vld [vmem:[#allocation2 + $0x120] sm:$0xff]
      %v2389 = vld [vmem:[#allocation2 + $0x128] sm:$0xff]
      %v2390 = vld [vmem:[#allocation2 + $0x130] sm:$0x3]
      %v2391 = vld [vmem:[#allocation2 + $0x138] sm:$0xff]
      %v2392 = vld [vmem:[#allocation2 + $0x140] sm:$0xff]
      %v2393 = vld [vmem:[#allocation2 + $0x148] sm:$0x3]
      %v2394 = vld [vmem:[#allocation2 + $0x150] sm:$0xff]
      %v2395 = vld [vmem:[#allocation2 + $0x158] sm:$0xff]
      %v2396 = vld [vmem:[#allocation2 + $0x160] sm:$0x3]
      %v2397 = vld [vmem:[#allocation2 + $0x168] sm:$0xff]
      %v2398 = vld [vmem:[#allocation2 + $0x170] sm:$0xff]
      %v2399 = vld [vmem:[#allocation2 + $0x178] sm:$0x3]
      %v2400 = vld [vmem:[#allocation2 + $0x180] sm:$0xff]
      %v2401 = vld [vmem:[#allocation2 + $0x188] sm:$0xff]
      %v2402 = vld [vmem:[#allocation2 + $0x190] sm:$0x3]
      %v2403 = vld [vmem:[#allocation2 + $0x198] sm:$0xff]
      %v2404 = vld [vmem:[#allocation2 + $0x1a0] sm:$0xff]
      %v2405 = vld [vmem:[#allocation2 + $0x1a8] sm:$0x3]
      %v2454 = vrot.slane %v2352, 1
      %v2455 = vrot.slane %v2353, 1
      %v2456 = vsel %vm406, %v2454, %v2455
      %v2457 = vrot.slane %v2354, 1
      %v2458 = vsel %vm406, %v2455, %v2457
      %v2459 = vrot.slane %v2355, 1
      %v2460 = vrot.slane %v2356, 1
      %v2461 = vsel %vm406, %v2459, %v2460
      %v2462 = vrot.slane %v2357, 1
      %v2463 = vsel %vm406, %v2460, %v2462
      %v2464 = vrot.slane %v2358, 1
      %v2465 = vrot.slane %v2359, 1
      %v2466 = vsel %vm406, %v2464, %v2465
      %v2467 = vrot.slane %v2360, 1
      %v2468 = vsel %vm406, %v2465, %v2467
      %v2469 = vrot.slane %v2361, 1
      %v2470 = vrot.slane %v2362, 1
      %v2471 = vsel %vm406, %v2469, %v2470
      %v2472 = vrot.slane %v2363, 1
      %v2473 = vsel %vm406, %v2470, %v2472
      %v2474 = vrot.slane %v2364, 1
      %v2475 = vrot.slane %v2365, 1
      %v2476 = vsel %vm406, %v2474, %v2475
      %v2477 = vrot.slane %v2366, 1
      %v2478 = vsel %vm406, %v2475, %v2477
      %v2479 = vrot.slane %v2367, 1
      %v2480 = vrot.slane %v2368, 1
      %v2481 = vsel %vm406, %v2479, %v2480
      %v2482 = vrot.slane %v2369, 1
      %v2483 = vsel %vm406, %v2480, %v2482
      %v2484 = vrot.slane %v2370, 1
      %v2485 = vrot.slane %v2371, 1
      %v2486 = vsel %vm406, %v2484, %v2485
      %v2487 = vrot.slane %v2372, 1
      %v2488 = vsel %vm406, %v2485, %v2487
      %v2489 = vrot.slane %v2373, 1
      %v2490 = vrot.slane %v2374, 1
      %v2491 = vsel %vm406, %v2489, %v2490
      %v2492 = vrot.slane %v2375, 1
      %v2493 = vsel %vm406, %v2490, %v2492
      %v2494 = vrot.slane %v2376, 1
      %v2495 = vrot.slane %v2377, 1
      %v2496 = vsel %vm406, %v2494, %v2495
      %v2497 = vrot.slane %v2378, 1
      %v2498 = vsel %vm406, %v2495, %v2497
      %v2499 = vrot.slane %v2379, 1
      %v2500 = vrot.slane %v2380, 1
      %v2501 = vsel %vm406, %v2499, %v2500
      %v2502 = vrot.slane %v2381, 1
      %v2503 = vsel %vm406, %v2500, %v2502
      %v2504 = vrot.slane %v2382, 1
      %v2505 = vrot.slane %v2383, 1
      %v2506 = vsel %vm406, %v2504, %v2505
      %v2507 = vrot.slane %v2384, 1
      %v2508 = vsel %vm406, %v2505, %v2507
      %v2509 = vrot.slane %v2385, 1
      %v2510 = vrot.slane %v2386, 1
      %v2511 = vsel %vm406, %v2509, %v2510
      %v2512 = vrot.slane %v2387, 1
      %v2513 = vsel %vm406, %v2510, %v2512
      %v2514 = vrot.slane %v2388, 1
      %v2515 = vrot.slane %v2389, 1
      %v2516 = vsel %vm406, %v2514, %v2515
      %v2517 = vrot.slane %v2390, 1
      %v2518 = vsel %vm406, %v2515, %v2517
      %v2519 = vrot.slane %v2391, 1
      %v2520 = vrot.slane %v2392, 1
      %v2521 = vsel %vm406, %v2519, %v2520
      %v2522 = vrot.slane %v2393, 1
      %v2523 = vsel %vm406, %v2520, %v2522
      %v2524 = vrot.slane %v2394, 1
      %v2525 = vrot.slane %v2395, 1
      %v2526 = vsel %vm406, %v2524, %v2525
      %v2527 = vrot.slane %v2396, 1
      %v2528 = vsel %vm406, %v2525, %v2527
      %v2529 = vrot.slane %v2397, 1
      %v2530 = vrot.slane %v2398, 1
      %v2531 = vsel %vm406, %v2529, %v2530
      %v2532 = vrot.slane %v2399, 1
      %v2533 = vsel %vm406, %v2530, %v2532
      %v2534 = vrot.slane %v2352, 2
      %v2535 = vrot.slane %v2353, 2
      %v2536 = vsel %vm487, %v2534, %v2535
      %v2537 = vrot.slane %v2354, 2
      %v2538 = vsel %vm487, %v2535, %v2537
      %v2539 = vrot.slane %v2355, 2
      %v2540 = vrot.slane %v2356, 2
      %v2541 = vsel %vm487, %v2539, %v2540
      %v2542 = vrot.slane %v2357, 2
      %v2543 = vsel %vm487, %v2540, %v2542
      %v2544 = vrot.slane %v2358, 2
      %v2545 = vrot.slane %v2359, 2
      %v2546 = vsel %vm487, %v2544, %v2545
      %v2547 = vrot.slane %v2360, 2
      %v2548 = vsel %vm487, %v2545, %v2547
      %v2549 = vrot.slane %v2361, 2
      %v2550 = vrot.slane %v2362, 2
      %v2551 = vsel %vm487, %v2549, %v2550
      %v2552 = vrot.slane %v2363, 2
      %v2553 = vsel %vm487, %v2550, %v2552
      %v2554 = vrot.slane %v2364, 2
      %v2555 = vrot.slane %v2365, 2
      %v2556 = vsel %vm487, %v2554, %v2555
      %v2557 = vrot.slane %v2366, 2
      %v2558 = vsel %vm487, %v2555, %v2557
      %v2559 = vrot.slane %v2367, 2
      %v2560 = vrot.slane %v2368, 2
      %v2561 = vsel %vm487, %v2559, %v2560
      %v2562 = vrot.slane %v2369, 2
      %v2563 = vsel %vm487, %v2560, %v2562
      %v2564 = vrot.slane %v2370, 2
      %v2565 = vrot.slane %v2371, 2
      %v2566 = vsel %vm487, %v2564, %v2565
      %v2567 = vrot.slane %v2372, 2
      %v2568 = vsel %vm487, %v2565, %v2567
      %v2569 = vrot.slane %v2373, 2
      %v2570 = vrot.slane %v2374, 2
      %v2571 = vsel %vm487, %v2569, %v2570
      %v2572 = vrot.slane %v2375, 2
      %v2573 = vsel %vm487, %v2570, %v2572
      %v2574 = vrot.slane %v2376, 2
      %v2575 = vrot.slane %v2377, 2
      %v2576 = vsel %vm487, %v2574, %v2575
      %v2577 = vrot.slane %v2378, 2
      %v2578 = vsel %vm487, %v2575, %v2577
      %v2579 = vrot.slane %v2379, 2
      %v2580 = vrot.slane %v2380, 2
      %v2581 = vsel %vm487, %v2579, %v2580
      %v2582 = vrot.slane %v2381, 2
      %v2583 = vsel %vm487, %v2580, %v2582
      %v2584 = vrot.slane %v2382, 2
      %v2585 = vrot.slane %v2383, 2
      %v2586 = vsel %vm487, %v2584, %v2585
      %v2587 = vrot.slane %v2384, 2
      %v2588 = vsel %vm487, %v2585, %v2587
      %v2589 = vrot.slane %v2385, 2
      %v2590 = vrot.slane %v2386, 2
      %v2591 = vsel %vm487, %v2589, %v2590
      %v2592 = vrot.slane %v2387, 2
      %v2593 = vsel %vm487, %v2590, %v2592
      %v2594 = vrot.slane %v2388, 2
      %v2595 = vrot.slane %v2389, 2
      %v2596 = vsel %vm487, %v2594, %v2595
      %v2597 = vrot.slane %v2390, 2
      %v2598 = vsel %vm487, %v2595, %v2597
      %v2599 = vrot.slane %v2391, 2
      %v2600 = vrot.slane %v2392, 2
      %v2601 = vsel %vm487, %v2599, %v2600
      %v2602 = vrot.slane %v2393, 2
      %v2603 = vsel %vm487, %v2600, %v2602
      %v2604 = vrot.slane %v2394, 2
      %v2605 = vrot.slane %v2395, 2
      %v2606 = vsel %vm487, %v2604, %v2605
      %v2607 = vrot.slane %v2396, 2
      %v2608 = vsel %vm487, %v2605, %v2607
      %v2609 = vrot.slane %v2397, 2
      %v2610 = vrot.slane %v2398, 2
      %v2611 = vsel %vm487, %v2609, %v2610
      %v2612 = vrot.slane %v2399, 2
      %v2613 = vsel %vm487, %v2610, %v2612
      %v2617 = vrot.slane %v2400, 1
      %v2618 = vrot.slane %v2401, 1
      %v2619 = vsel %vm406, %v2617, %v2618
      %v2620 = vrot.slane %v2402, 1
      %v2621 = vsel %vm406, %v2618, %v2620
      %v2622 = vrot.slane %v2400, 2
      %v2623 = vrot.slane %v2401, 2
      %v2624 = vsel %vm487, %v2622, %v2623
      %v2625 = vrot.slane %v2402, 2
      %v2626 = vsel %vm487, %v2623, %v2625
      %v2630 = vrot.slane %v2403, 1
      %v2631 = vrot.slane %v2404, 1
      %v2632 = vsel %vm406, %v2630, %v2631
      %v2633 = vrot.slane %v2405, 1
      %v2634 = vsel %vm406, %v2631, %v2633
      %v2635 = vrot.slane %v2403, 2
      %v2636 = vrot.slane %v2404, 2
      %v2637 = vsel %vm487, %v2635, %v2636
      %v2638 = vrot.slane %v2405, 2
      %v2639 = vsel %vm487, %v2636, %v2638
      %2640 = vrot.lane.b32.xlu0 %v2456, 8
      %v2641 = vpop.permute.xlu0 %2640
      %2642 = vrot.lane.b32.xlu0 %v2458, 8
      %v2643 = vpop.permute.xlu0 %2642
      %2644 = vrot.lane.b32.xlu0 %v2461, 8
      %v2645 = vpop.permute.xlu0 %2644
      %2646 = vrot.lane.b32.xlu0 %v2463, 8
      %v2647 = vpop.permute.xlu0 %2646
      %2648 = vrot.lane.b32.xlu0 %v2466, 8
      %v2649 = vpop.permute.xlu0 %2648
      %2650 = vrot.lane.b32.xlu0 %v2468, 8
      %v2651 = vpop.permute.xlu0 %2650
      %2652 = vrot.lane.b32.xlu0 %v2471, 8
      %v2653 = vpop.permute.xlu0 %2652
      %2654 = vrot.lane.b32.xlu0 %v2473, 8
      %v2655 = vpop.permute.xlu0 %2654
      %2656 = vrot.lane.b32.xlu0 %v2476, 8
      %v2657 = vpop.permute.xlu0 %2656
      %2658 = vrot.lane.b32.xlu0 %v2478, 8
      %v2659 = vpop.permute.xlu0 %2658
      %2660 = vrot.lane.b32.xlu0 %v2481, 8
      %v2661 = vpop.permute.xlu0 %2660
      %2662 = vrot.lane.b32.xlu0 %v2483, 8
      %v2663 = vpop.permute.xlu0 %2662
      %2664 = vrot.lane.b32.xlu0 %v2486, 8
      %v2665 = vpop.permute.xlu0 %2664
      %2666 = vrot.lane.b32.xlu0 %v2488, 8
      %v2667 = vpop.permute.xlu0 %2666
      %2668 = vrot.lane.b32.xlu0 %v2491, 8
      %v2669 = vpop.permute.xlu0 %2668
      %2670 = vrot.lane.b32.xlu0 %v2493, 8
      %v2671 = vpop.permute.xlu0 %2670
      %2672 = vrot.lane.b32.xlu0 %v2496, 8
      %v2673 = vpop.permute.xlu0 %2672
      %2674 = vrot.lane.b32.xlu0 %v2498, 8
      %v2675 = vpop.permute.xlu0 %2674
      %2676 = vrot.lane.b32.xlu0 %v2501, 8
      %v2677 = vpop.permute.xlu0 %2676
      %2678 = vrot.lane.b32.xlu0 %v2503, 8
      %v2679 = vpop.permute.xlu0 %2678
      %2680 = vrot.lane.b32.xlu0 %v2506, 8
      %v2681 = vpop.permute.xlu0 %2680
      %2682 = vrot.lane.b32.xlu0 %v2508, 8
      %v2683 = vpop.permute.xlu0 %2682
      %2684 = vrot.lane.b32.xlu0 %v2511, 8
      %v2685 = vpop.permute.xlu0 %2684
      %2686 = vrot.lane.b32.xlu0 %v2513, 8
      %v2687 = vpop.permute.xlu0 %2686
      %2688 = vrot.lane.b32.xlu0 %v2516, 8
      %v2689 = vpop.permute.xlu0 %2688
      %2690 = vrot.lane.b32.xlu0 %v2518, 8
      %v2691 = vpop.permute.xlu0 %2690
      %2692 = vrot.lane.b32.xlu0 %v2521, 8
      %v2693 = vpop.permute.xlu0 %2692
      %2694 = vrot.lane.b32.xlu0 %v2523, 8
      %v2695 = vpop.permute.xlu0 %2694
      %2696 = vrot.lane.b32.xlu0 %v2526, 8
      %v2697 = vpop.permute.xlu0 %2696
      %2698 = vrot.lane.b32.xlu0 %v2528, 8
      %v2699 = vpop.permute.xlu0 %2698
      %2700 = vrot.lane.b32.xlu0 %v2531, 8
      %v2701 = vpop.permute.xlu0 %2700
      %2702 = vrot.lane.b32.xlu0 %v2533, 8
      %v2703 = vpop.permute.xlu0 %2702
      %2736 = vrot.lane.b32.xlu0 %v2536, 16
      %v2737 = vpop.permute.xlu0 %2736
      %2738 = vrot.lane.b32.xlu0 %v2538, 16
      %v2739 = vpop.permute.xlu0 %2738
      %2740 = vrot.lane.b32.xlu0 %v2541, 16
      %v2741 = vpop.permute.xlu0 %2740
      %2742 = vrot.lane.b32.xlu0 %v2543, 16
      %v2743 = vpop.permute.xlu0 %2742
      %2744 = vrot.lane.b32.xlu0 %v2546, 16
      %v2745 = vpop.permute.xlu0 %2744
      %2746 = vrot.lane.b32.xlu0 %v2548, 16
      %v2747 = vpop.permute.xlu0 %2746
      %2748 = vrot.lane.b32.xlu0 %v2551, 16
      %v2749 = vpop.permute.xlu0 %2748
      %2750 = vrot.lane.b32.xlu0 %v2553, 16
      %v2751 = vpop.permute.xlu0 %2750
      %2752 = vrot.lane.b32.xlu0 %v2556, 16
      %v2753 = vpop.permute.xlu0 %2752
      %2754 = vrot.lane.b32.xlu0 %v2558, 16
      %v2755 = vpop.permute.xlu0 %2754
      %2756 = vrot.lane.b32.xlu0 %v2561, 16
      %v2757 = vpop.permute.xlu0 %2756
      %2758 = vrot.lane.b32.xlu0 %v2563, 16
      %v2759 = vpop.permute.xlu0 %2758
      %2760 = vrot.lane.b32.xlu0 %v2566, 16
      %v2761 = vpop.permute.xlu0 %2760
      %2762 = vrot.lane.b32.xlu0 %v2568, 16
      %v2763 = vpop.permute.xlu0 %2762
      %2764 = vrot.lane.b32.xlu0 %v2571, 16
      %v2765 = vpop.permute.xlu0 %2764
      %2766 = vrot.lane.b32.xlu0 %v2573, 16
      %v2767 = vpop.permute.xlu0 %2766
      %2768 = vrot.lane.b32.xlu0 %v2576, 16
      %v2769 = vpop.permute.xlu0 %2768
      %2770 = vrot.lane.b32.xlu0 %v2578, 16
      %v2771 = vpop.permute.xlu0 %2770
      %2772 = vrot.lane.b32.xlu0 %v2581, 16
      %v2773 = vpop.permute.xlu0 %2772
      %2774 = vrot.lane.b32.xlu0 %v2583, 16
      %v2775 = vpop.permute.xlu0 %2774
      %2776 = vrot.lane.b32.xlu0 %v2586, 16
      %v2777 = vpop.permute.xlu0 %2776
      %2778 = vrot.lane.b32.xlu0 %v2588, 16
      %v2779 = vpop.permute.xlu0 %2778
      %2780 = vrot.lane.b32.xlu0 %v2591, 16
      %v2781 = vpop.permute.xlu0 %2780
      %2782 = vrot.lane.b32.xlu0 %v2593, 16
      %v2783 = vpop.permute.xlu0 %2782
      %2784 = vrot.lane.b32.xlu0 %v2596, 16
      %v2785 = vpop.permute.xlu0 %2784
      %2786 = vrot.lane.b32.xlu0 %v2598, 16
      %v2787 = vpop.permute.xlu0 %2786
      %2788 = vrot.lane.b32.xlu0 %v2601, 16
      %v2789 = vpop.permute.xlu0 %2788
      %2790 = vrot.lane.b32.xlu0 %v2603, 16
      %v2791 = vpop.permute.xlu0 %2790
      %2792 = vrot.lane.b32.xlu0 %v2606, 16
      %v2793 = vpop.permute.xlu0 %2792
      %2794 = vrot.lane.b32.xlu0 %v2608, 16
      %v2795 = vpop.permute.xlu0 %2794
      %2796 = vrot.lane.b32.xlu0 %v2611, 16
      %v2797 = vpop.permute.xlu0 %2796
      %2798 = vrot.lane.b32.xlu0 %v2613, 16
      %v2799 = vpop.permute.xlu0 %2798
      %2832 = vrot.lane.b32.xlu0 %v2355, 24
      %v2833 = vpop.permute.xlu0 %2832
      %2834 = vrot.lane.b32.xlu0 %v2356, 24
      %v2835 = vpop.permute.xlu0 %2834
      %2836 = vrot.lane.b32.xlu0 %v2358, 24
      %v2837 = vpop.permute.xlu0 %2836
      %2838 = vrot.lane.b32.xlu0 %v2359, 24
      %v2839 = vpop.permute.xlu0 %2838
      %2840 = vrot.lane.b32.xlu0 %v2361, 24
      %v2841 = vpop.permute.xlu0 %2840
      %2842 = vrot.lane.b32.xlu0 %v2362, 24
      %v2843 = vpop.permute.xlu0 %2842
      %2844 = vrot.lane.b32.xlu0 %v2364, 24
      %v2845 = vpop.permute.xlu0 %2844
      %2846 = vrot.lane.b32.xlu0 %v2365, 24
      %v2847 = vpop.permute.xlu0 %2846
      %2848 = vrot.lane.b32.xlu0 %v2367, 24
      %v2849 = vpop.permute.xlu0 %2848
      %2850 = vrot.lane.b32.xlu0 %v2368, 24
      %v2851 = vpop.permute.xlu0 %2850
      %2852 = vrot.lane.b32.xlu0 %v2370, 24
      %v2853 = vpop.permute.xlu0 %2852
      %2854 = vrot.lane.b32.xlu0 %v2371, 24
      %v2855 = vpop.permute.xlu0 %2854
      %2856 = vrot.lane.b32.xlu0 %v2373, 24
      %v2857 = vpop.permute.xlu0 %2856
      %2858 = vrot.lane.b32.xlu0 %v2374, 24
      %v2859 = vpop.permute.xlu0 %2858
      %2860 = vrot.lane.b32.xlu0 %v2376, 24
      %v2861 = vpop.permute.xlu0 %2860
      %2862 = vrot.lane.b32.xlu0 %v2377, 24
      %v2863 = vpop.permute.xlu0 %2862
      %2864 = vrot.lane.b32.xlu0 %v2379, 24
      %v2865 = vpop.permute.xlu0 %2864
      %2866 = vrot.lane.b32.xlu0 %v2380, 24
      %v2867 = vpop.permute.xlu0 %2866
      %2868 = vrot.lane.b32.xlu0 %v2382, 24
      %v2869 = vpop.permute.xlu0 %2868
      %2870 = vrot.lane.b32.xlu0 %v2383, 24
      %v2871 = vpop.permute.xlu0 %2870
      %2872 = vrot.lane.b32.xlu0 %v2385, 24
      %v2873 = vpop.permute.xlu0 %2872
      %2874 = vrot.lane.b32.xlu0 %v2386, 24
      %v2875 = vpop.permute.xlu0 %2874
      %2876 = vrot.lane.b32.xlu0 %v2388, 24
      %v2877 = vpop.permute.xlu0 %2876
      %2878 = vrot.lane.b32.xlu0 %v2389, 24
      %v2879 = vpop.permute.xlu0 %2878
      %2880 = vrot.lane.b32.xlu0 %v2391, 24
      %v2881 = vpop.permute.xlu0 %2880
      %2882 = vrot.lane.b32.xlu0 %v2392, 24
      %v2883 = vpop.permute.xlu0 %2882
      %2884 = vrot.lane.b32.xlu0 %v2394, 24
      %v2885 = vpop.permute.xlu0 %2884
      %2886 = vrot.lane.b32.xlu0 %v2395, 24
      %v2887 = vpop.permute.xlu0 %2886
      %2888 = vrot.lane.b32.xlu0 %v2397, 24
      %v2889 = vpop.permute.xlu0 %2888
      %2890 = vrot.lane.b32.xlu0 %v2398, 24
      %v2891 = vpop.permute.xlu0 %2890
      %2892 = vrot.lane.b32.xlu0 %v2400, 24
      %v2893 = vpop.permute.xlu0 %2892
      %2894 = vrot.lane.b32.xlu0 %v2401, 24
      %v2895 = vpop.permute.xlu0 %2894
      %2928 = vrot.lane.b32.xlu0 %v2461, 32
      %v2929 = vpop.permute.xlu0 %2928
      %2930 = vrot.lane.b32.xlu0 %v2463, 32
      %v2931 = vpop.permute.xlu0 %2930
      %2932 = vrot.lane.b32.xlu0 %v2466, 32
      %v2933 = vpop.permute.xlu0 %2932
      %2934 = vrot.lane.b32.xlu0 %v2468, 32
      %v2935 = vpop.permute.xlu0 %2934
      %2936 = vrot.lane.b32.xlu0 %v2471, 32
      %v2937 = vpop.permute.xlu0 %2936
      %2938 = vrot.lane.b32.xlu0 %v2473, 32
      %v2939 = vpop.permute.xlu0 %2938
      %2940 = vrot.lane.b32.xlu0 %v2476, 32
      %v2941 = vpop.permute.xlu0 %2940
      %2942 = vrot.lane.b32.xlu0 %v2478, 32
      %v2943 = vpop.permute.xlu0 %2942
      %2944 = vrot.lane.b32.xlu0 %v2481, 32
      %v2945 = vpop.permute.xlu0 %2944
      %2946 = vrot.lane.b32.xlu0 %v2483, 32
      %v2947 = vpop.permute.xlu0 %2946
      %2948 = vrot.lane.b32.xlu0 %v2486, 32
      %v2949 = vpop.permute.xlu0 %2948
      %2950 = vrot.lane.b32.xlu0 %v2488, 32
      %v2951 = vpop.permute.xlu0 %2950
      %2952 = vrot.lane.b32.xlu0 %v2491, 32
      %v2953 = vpop.permute.xlu0 %2952
      %2954 = vrot.lane.b32.xlu0 %v2493, 32
      %v2955 = vpop.permute.xlu0 %2954
      %2956 = vrot.lane.b32.xlu0 %v2496, 32
      %v2957 = vpop.permute.xlu0 %2956
      %2958 = vrot.lane.b32.xlu0 %v2498, 32
      %v2959 = vpop.permute.xlu0 %2958
      %2960 = vrot.lane.b32.xlu0 %v2501, 32
      %v2961 = vpop.permute.xlu0 %2960
      %2962 = vrot.lane.b32.xlu0 %v2503, 32
      %v2963 = vpop.permute.xlu0 %2962
      %2964 = vrot.lane.b32.xlu0 %v2506, 32
      %v2965 = vpop.permute.xlu0 %2964
      %2966 = vrot.lane.b32.xlu0 %v2508, 32
      %v2967 = vpop.permute.xlu0 %2966
      %2968 = vrot.lane.b32.xlu0 %v2511, 32
      %v2969 = vpop.permute.xlu0 %2968
      %2970 = vrot.lane.b32.xlu0 %v2513, 32
      %v2971 = vpop.permute.xlu0 %2970
      %2972 = vrot.lane.b32.xlu0 %v2516, 32
      %v2973 = vpop.permute.xlu0 %2972
      %2974 = vrot.lane.b32.xlu0 %v2518, 32
      %v2975 = vpop.permute.xlu0 %2974
      %2976 = vrot.lane.b32.xlu0 %v2521, 32
      %v2977 = vpop.permute.xlu0 %2976
      %2978 = vrot.lane.b32.xlu0 %v2523, 32
      %v2979 = vpop.permute.xlu0 %2978
      %2980 = vrot.lane.b32.xlu0 %v2526, 32
      %v2981 = vpop.permute.xlu0 %2980
      %2982 = vrot.lane.b32.xlu0 %v2528, 32
      %v2983 = vpop.permute.xlu0 %2982
      %2984 = vrot.lane.b32.xlu0 %v2531, 32
      %v2985 = vpop.permute.xlu0 %2984
      %2986 = vrot.lane.b32.xlu0 %v2533, 32
      %v2987 = vpop.permute.xlu0 %2986
      %2988 = vrot.lane.b32.xlu0 %v2619, 32
      %v2989 = vpop.permute.xlu0 %2988
      %2990 = vrot.lane.b32.xlu0 %v2621, 32
      %v2991 = vpop.permute.xlu0 %2990
      %3024 = vrot.lane.b32.xlu0 %v2541, 40
      %v3025 = vpop.permute.xlu0 %3024
      %3026 = vrot.lane.b32.xlu0 %v2543, 40
      %v3027 = vpop.permute.xlu0 %3026
      %3028 = vrot.lane.b32.xlu0 %v2546, 40
      %v3029 = vpop.permute.xlu0 %3028
      %3030 = vrot.lane.b32.xlu0 %v2548, 40
      %v3031 = vpop.permute.xlu0 %3030
      %3032 = vrot.lane.b32.xlu0 %v2551, 40
      %v3033 = vpop.permute.xlu0 %3032
      %3034 = vrot.lane.b32.xlu0 %v2553, 40
      %v3035 = vpop.permute.xlu0 %3034
      %3036 = vrot.lane.b32.xlu0 %v2556, 40
      %v3037 = vpop.permute.xlu0 %3036
      %3038 = vrot.lane.b32.xlu0 %v2558, 40
      %v3039 = vpop.permute.xlu0 %3038
      %3040 = vrot.lane.b32.xlu0 %v2561, 40
      %v3041 = vpop.permute.xlu0 %3040
      %3042 = vrot.lane.b32.xlu0 %v2563, 40
      %v3043 = vpop.permute.xlu0 %3042
      %3044 = vrot.lane.b32.xlu0 %v2566, 40
      %v3045 = vpop.permute.xlu0 %3044
      %3046 = vrot.lane.b32.xlu0 %v2568, 40
      %v3047 = vpop.permute.xlu0 %3046
      %3048 = vrot.lane.b32.xlu0 %v2571, 40
      %v3049 = vpop.permute.xlu0 %3048
      %3050 = vrot.lane.b32.xlu0 %v2573, 40
      %v3051 = vpop.permute.xlu0 %3050
      %3052 = vrot.lane.b32.xlu0 %v2576, 40
      %v3053 = vpop.permute.xlu0 %3052
      %3054 = vrot.lane.b32.xlu0 %v2578, 40
      %v3055 = vpop.permute.xlu0 %3054
      %3056 = vrot.lane.b32.xlu0 %v2581, 40
      %v3057 = vpop.permute.xlu0 %3056
      %3058 = vrot.lane.b32.xlu0 %v2583, 40
      %v3059 = vpop.permute.xlu0 %3058
      %3060 = vrot.lane.b32.xlu0 %v2586, 40
      %v3061 = vpop.permute.xlu0 %3060
      %3062 = vrot.lane.b32.xlu0 %v2588, 40
      %v3063 = vpop.permute.xlu0 %3062
      %3064 = vrot.lane.b32.xlu0 %v2591, 40
      %v3065 = vpop.permute.xlu0 %3064
      %3066 = vrot.lane.b32.xlu0 %v2593, 40
      %v3067 = vpop.permute.xlu0 %3066
      %3068 = vrot.lane.b32.xlu0 %v2596, 40
      %v3069 = vpop.permute.xlu0 %3068
      %3070 = vrot.lane.b32.xlu0 %v2598, 40
      %v3071 = vpop.permute.xlu0 %3070
      %3072 = vrot.lane.b32.xlu0 %v2601, 40
      %v3073 = vpop.permute.xlu0 %3072
      %3074 = vrot.lane.b32.xlu0 %v2603, 40
      %v3075 = vpop.permute.xlu0 %3074
      %3076 = vrot.lane.b32.xlu0 %v2606, 40
      %v3077 = vpop.permute.xlu0 %3076
      %3078 = vrot.lane.b32.xlu0 %v2608, 40
      %v3079 = vpop.permute.xlu0 %3078
      %3080 = vrot.lane.b32.xlu0 %v2611, 40
      %v3081 = vpop.permute.xlu0 %3080
      %3082 = vrot.lane.b32.xlu0 %v2613, 40
      %v3083 = vpop.permute.xlu0 %3082
      %3084 = vrot.lane.b32.xlu0 %v2624, 40
      %v3085 = vpop.permute.xlu0 %3084
      %3086 = vrot.lane.b32.xlu0 %v2626, 40
      %v3087 = vpop.permute.xlu0 %3086
      %3120 = vrot.lane.b32.xlu0 %v2358, 48
      %v3121 = vpop.permute.xlu0 %3120
      %3122 = vrot.lane.b32.xlu0 %v2359, 48
      %v3123 = vpop.permute.xlu0 %3122
      %3124 = vrot.lane.b32.xlu0 %v2361, 48
      %v3125 = vpop.permute.xlu0 %3124
      %3126 = vrot.lane.b32.xlu0 %v2362, 48
      %v3127 = vpop.permute.xlu0 %3126
      %3128 = vrot.lane.b32.xlu0 %v2364, 48
      %v3129 = vpop.permute.xlu0 %3128
      %3130 = vrot.lane.b32.xlu0 %v2365, 48
      %v3131 = vpop.permute.xlu0 %3130
      %3132 = vrot.lane.b32.xlu0 %v2367, 48
      %v3133 = vpop.permute.xlu0 %3132
      %3134 = vrot.lane.b32.xlu0 %v2368, 48
      %v3135 = vpop.permute.xlu0 %3134
      %3136 = vrot.lane.b32.xlu0 %v2370, 48
      %v3137 = vpop.permute.xlu0 %3136
      %3138 = vrot.lane.b32.xlu0 %v2371, 48
      %v3139 = vpop.permute.xlu0 %3138
      %3140 = vrot.lane.b32.xlu0 %v2373, 48
      %v3141 = vpop.permute.xlu0 %3140
      %3142 = vrot.lane.b32.xlu0 %v2374, 48
      %v3143 = vpop.permute.xlu0 %3142
      %3144 = vrot.lane.b32.xlu0 %v2376, 48
      %v3145 = vpop.permute.xlu0 %3144
      %3146 = vrot.lane.b32.xlu0 %v2377, 48
      %v3147 = vpop.permute.xlu0 %3146
      %3148 = vrot.lane.b32.xlu0 %v2379, 48
      %v3149 = vpop.permute.xlu0 %3148
      %3150 = vrot.lane.b32.xlu0 %v2380, 48
      %v3151 = vpop.permute.xlu0 %3150
      %3152 = vrot.lane.b32.xlu0 %v2382, 48
      %v3153 = vpop.permute.xlu0 %3152
      %3154 = vrot.lane.b32.xlu0 %v2383, 48
      %v3155 = vpop.permute.xlu0 %3154
      %3156 = vrot.lane.b32.xlu0 %v2385, 48
      %v3157 = vpop.permute.xlu0 %3156
      %3158 = vrot.lane.b32.xlu0 %v2386, 48
      %v3159 = vpop.permute.xlu0 %3158
      %3160 = vrot.lane.b32.xlu0 %v2388, 48
      %v3161 = vpop.permute.xlu0 %3160
      %3162 = vrot.lane.b32.xlu0 %v2389, 48
      %v3163 = vpop.permute.xlu0 %3162
      %3164 = vrot.lane.b32.xlu0 %v2391, 48
      %v3165 = vpop.permute.xlu0 %3164
      %3166 = vrot.lane.b32.xlu0 %v2392, 48
      %v3167 = vpop.permute.xlu0 %3166
      %3168 = vrot.lane.b32.xlu0 %v2394, 48
      %v3169 = vpop.permute.xlu0 %3168
      %3170 = vrot.lane.b32.xlu0 %v2395, 48
      %v3171 = vpop.permute.xlu0 %3170
      %3172 = vrot.lane.b32.xlu0 %v2397, 48
      %v3173 = vpop.permute.xlu0 %3172
      %3174 = vrot.lane.b32.xlu0 %v2398, 48
      %v3175 = vpop.permute.xlu0 %3174
      %3176 = vrot.lane.b32.xlu0 %v2400, 48
      %v3177 = vpop.permute.xlu0 %3176
      %3178 = vrot.lane.b32.xlu0 %v2401, 48
      %v3179 = vpop.permute.xlu0 %3178
      %3180 = vrot.lane.b32.xlu0 %v2403, 48
      %v3181 = vpop.permute.xlu0 %3180
      %3182 = vrot.lane.b32.xlu0 %v2404, 48
      %v3183 = vpop.permute.xlu0 %3182
      %3216 = vrot.lane.b32.xlu0 %v2466, 56
      %v3217 = vpop.permute.xlu0 %3216
      %3218 = vrot.lane.b32.xlu0 %v2468, 56
      %v3219 = vpop.permute.xlu0 %3218
      %3220 = vrot.lane.b32.xlu0 %v2471, 56
      %v3221 = vpop.permute.xlu0 %3220
      %3222 = vrot.lane.b32.xlu0 %v2473, 56
      %v3223 = vpop.permute.xlu0 %3222
      %3224 = vrot.lane.b32.xlu0 %v2476, 56
      %v3225 = vpop.permute.xlu0 %3224
      %3226 = vrot.lane.b32.xlu0 %v2478, 56
      %v3227 = vpop.permute.xlu0 %3226
      %3228 = vrot.lane.b32.xlu0 %v2481, 56
      %v3229 = vpop.permute.xlu0 %3228
      %3230 = vrot.lane.b32.xlu0 %v2483, 56
      %v3231 = vpop.permute.xlu0 %3230
      %3232 = vrot.lane.b32.xlu0 %v2486, 56
      %v3233 = vpop.permute.xlu0 %3232
      %3234 = vrot.lane.b32.xlu0 %v2488, 56
      %v3235 = vpop.permute.xlu0 %3234
      %3236 = vrot.lane.b32.xlu0 %v2491, 56
      %v3237 = vpop.permute.xlu0 %3236
      %3238 = vrot.lane.b32.xlu0 %v2493, 56
      %v3239 = vpop.permute.xlu0 %3238
      %3240 = vrot.lane.b32.xlu0 %v2496, 56
      %v3241 = vpop.permute.xlu0 %3240
      %3242 = vrot.lane.b32.xlu0 %v2498, 56
      %v3243 = vpop.permute.xlu0 %3242
      %3244 = vrot.lane.b32.xlu0 %v2501, 56
      %v3245 = vpop.permute.xlu0 %3244
      %3246 = vrot.lane.b32.xlu0 %v2503, 56
      %v3247 = vpop.permute.xlu0 %3246
      %3248 = vrot.lane.b32.xlu0 %v2506, 56
      %v3249 = vpop.permute.xlu0 %3248
      %3250 = vrot.lane.b32.xlu0 %v2508, 56
      %v3251 = vpop.permute.xlu0 %3250
      %3252 = vrot.lane.b32.xlu0 %v2511, 56
      %v3253 = vpop.permute.xlu0 %3252
      %3254 = vrot.lane.b32.xlu0 %v2513, 56
      %v3255 = vpop.permute.xlu0 %3254
      %3256 = vrot.lane.b32.xlu0 %v2516, 56
      %v3257 = vpop.permute.xlu0 %3256
      %3258 = vrot.lane.b32.xlu0 %v2518, 56
      %v3259 = vpop.permute.xlu0 %3258
      %3260 = vrot.lane.b32.xlu0 %v2521, 56
      %v3261 = vpop.permute.xlu0 %3260
      %3262 = vrot.lane.b32.xlu0 %v2523, 56
      %v3263 = vpop.permute.xlu0 %3262
      %3264 = vrot.lane.b32.xlu0 %v2526, 56
      %v3265 = vpop.permute.xlu0 %3264
      %3266 = vrot.lane.b32.xlu0 %v2528, 56
      %v3267 = vpop.permute.xlu0 %3266
      %3268 = vrot.lane.b32.xlu0 %v2531, 56
      %v3269 = vpop.permute.xlu0 %3268
      %3270 = vrot.lane.b32.xlu0 %v2533, 56
      %v3271 = vpop.permute.xlu0 %3270
      %3272 = vrot.lane.b32.xlu0 %v2619, 56
      %v3273 = vpop.permute.xlu0 %3272
      %3274 = vrot.lane.b32.xlu0 %v2621, 56
      %v3275 = vpop.permute.xlu0 %3274
      %3276 = vrot.lane.b32.xlu0 %v2632, 56
      %v3277 = vpop.permute.xlu0 %3276
      %3278 = vrot.lane.b32.xlu0 %v2634, 56
      %v3279 = vpop.permute.xlu0 %3278
      %3312 = vrot.lane.b32.xlu0 %v2546, 64
      %v3313 = vpop.permute.xlu0 %3312
      %3314 = vrot.lane.b32.xlu0 %v2548, 64
      %v3315 = vpop.permute.xlu0 %3314
      %3316 = vrot.lane.b32.xlu0 %v2551, 64
      %v3317 = vpop.permute.xlu0 %3316
      %3318 = vrot.lane.b32.xlu0 %v2553, 64
      %v3319 = vpop.permute.xlu0 %3318
      %3320 = vrot.lane.b32.xlu0 %v2556, 64
      %v3321 = vpop.permute.xlu0 %3320
      %3322 = vrot.lane.b32.xlu0 %v2558, 64
      %v3323 = vpop.permute.xlu0 %3322
      %3324 = vrot.lane.b32.xlu0 %v2561, 64
      %v3325 = vpop.permute.xlu0 %3324
      %3326 = vrot.lane.b32.xlu0 %v2563, 64
      %v3327 = vpop.permute.xlu0 %3326
      %3328 = vrot.lane.b32.xlu0 %v2566, 64
      %v3329 = vpop.permute.xlu0 %3328
      %3330 = vrot.lane.b32.xlu0 %v2568, 64
      %v3331 = vpop.permute.xlu0 %3330
      %3332 = vrot.lane.b32.xlu0 %v2571, 64
      %v3333 = vpop.permute.xlu0 %3332
      %3334 = vrot.lane.b32.xlu0 %v2573, 64
      %v3335 = vpop.permute.xlu0 %3334
      %3336 = vrot.lane.b32.xlu0 %v2576, 64
      %v3337 = vpop.permute.xlu0 %3336
      %3338 = vrot.lane.b32.xlu0 %v2578, 64
      %v3339 = vpop.permute.xlu0 %3338
      %3340 = vrot.lane.b32.xlu0 %v2581, 64
      %v3341 = vpop.permute.xlu0 %3340
      %3342 = vrot.lane.b32.xlu0 %v2583, 64
      %v3343 = vpop.permute.xlu0 %3342
      %3344 = vrot.lane.b32.xlu0 %v2586, 64
      %v3345 = vpop.permute.xlu0 %3344
      %3346 = vrot.lane.b32.xlu0 %v2588, 64
      %v3347 = vpop.permute.xlu0 %3346
      %3348 = vrot.lane.b32.xlu0 %v2591, 64
      %v3349 = vpop.permute.xlu0 %3348
      %3350 = vrot.lane.b32.xlu0 %v2593, 64
      %v3351 = vpop.permute.xlu0 %3350
      %3352 = vrot.lane.b32.xlu0 %v2596, 64
      %v3353 = vpop.permute.xlu0 %3352
      %3354 = vrot.lane.b32.xlu0 %v2598, 64
      %v3355 = vpop.permute.xlu0 %3354
      %3356 = vrot.lane.b32.xlu0 %v2601, 64
      %v3357 = vpop.permute.xlu0 %3356
      %3358 = vrot.lane.b32.xlu0 %v2603, 64
      %v3359 = vpop.permute.xlu0 %3358
      %3360 = vrot.lane.b32.xlu0 %v2606, 64
      %v3361 = vpop.permute.xlu0 %3360
      %3362 = vrot.lane.b32.xlu0 %v2608, 64
      %v3363 = vpop.permute.xlu0 %3362
      %3364 = vrot.lane.b32.xlu0 %v2611, 64
      %v3365 = vpop.permute.xlu0 %3364
      %3366 = vrot.lane.b32.xlu0 %v2613, 64
      %v3367 = vpop.permute.xlu0 %3366
      %3368 = vrot.lane.b32.xlu0 %v2624, 64
      %v3369 = vpop.permute.xlu0 %3368
      %3370 = vrot.lane.b32.xlu0 %v2626, 64
      %v3371 = vpop.permute.xlu0 %3370
      %3372 = vrot.lane.b32.xlu0 %v2637, 64
      %v3373 = vpop.permute.xlu0 %3372
      %3374 = vrot.lane.b32.xlu0 %v2639, 64
      %v3375 = vpop.permute.xlu0 %3374
      %v3408 = vsel %vm1395, %v2352, %v2641
      %v3409 = vsel %vm1395, %v2353, %v2643
      %v3410 = vsel %vm1395, %v2355, %v2645
      %v3411 = vsel %vm1395, %v2356, %v2647
      %v3412 = vsel %vm1395, %v2358, %v2649
      %v3413 = vsel %vm1395, %v2359, %v2651
      %v3414 = vsel %vm1395, %v2361, %v2653
      %v3415 = vsel %vm1395, %v2362, %v2655
      %v3416 = vsel %vm1395, %v2364, %v2657
      %v3417 = vsel %vm1395, %v2365, %v2659
      %v3418 = vsel %vm1395, %v2367, %v2661
      %v3419 = vsel %vm1395, %v2368, %v2663
      %v3420 = vsel %vm1395, %v2370, %v2665
      %v3421 = vsel %vm1395, %v2371, %v2667
      %v3422 = vsel %vm1395, %v2373, %v2669
      %v3423 = vsel %vm1395, %v2374, %v2671
      %v3424 = vsel %vm1395, %v2376, %v2673
      %v3425 = vsel %vm1395, %v2377, %v2675
      %v3426 = vsel %vm1395, %v2379, %v2677
      %v3427 = vsel %vm1395, %v2380, %v2679
      %v3428 = vsel %vm1395, %v2382, %v2681
      %v3429 = vsel %vm1395, %v2383, %v2683
      %v3430 = vsel %vm1395, %v2385, %v2685
      %v3431 = vsel %vm1395, %v2386, %v2687
      %v3432 = vsel %vm1395, %v2388, %v2689
      %v3433 = vsel %vm1395, %v2389, %v2691
      %v3434 = vsel %vm1395, %v2391, %v2693
      %v3435 = vsel %vm1395, %v2392, %v2695
      %v3436 = vsel %vm1395, %v2394, %v2697
      %v3437 = vsel %vm1395, %v2395, %v2699
      %v3438 = vsel %vm1395, %v2397, %v2701
      %v3439 = vsel %vm1395, %v2398, %v2703
      %v3440 = vsel %vm1461, %v3408, %v2737
      %v3441 = vsel %vm1461, %v3409, %v2739
      %v3442 = vsel %vm1461, %v3410, %v2741
      %v3443 = vsel %vm1461, %v3411, %v2743
      %v3444 = vsel %vm1461, %v3412, %v2745
      %v3445 = vsel %vm1461, %v3413, %v2747
      %v3446 = vsel %vm1461, %v3414, %v2749
      %v3447 = vsel %vm1461, %v3415, %v2751
      %v3448 = vsel %vm1461, %v3416, %v2753
      %v3449 = vsel %vm1461, %v3417, %v2755
      %v3450 = vsel %vm1461, %v3418, %v2757
      %v3451 = vsel %vm1461, %v3419, %v2759
      %v3452 = vsel %vm1461, %v3420, %v2761
      %v3453 = vsel %vm1461, %v3421, %v2763
      %v3454 = vsel %vm1461, %v3422, %v2765
      %v3455 = vsel %vm1461, %v3423, %v2767
      %v3456 = vsel %vm1461, %v3424, %v2769
      %v3457 = vsel %vm1461, %v3425, %v2771
      %v3458 = vsel %vm1461, %v3426, %v2773
      %v3459 = vsel %vm1461, %v3427, %v2775
      %v3460 = vsel %vm1461, %v3428, %v2777
      %v3461 = vsel %vm1461, %v3429, %v2779
      %v3462 = vsel %vm1461, %v3430, %v2781
      %v3463 = vsel %vm1461, %v3431, %v2783
      %v3464 = vsel %vm1461, %v3432, %v2785
      %v3465 = vsel %vm1461, %v3433, %v2787
      %v3466 = vsel %vm1461, %v3434, %v2789
      %v3467 = vsel %vm1461, %v3435, %v2791
      %v3468 = vsel %vm1461, %v3436, %v2793
      %v3469 = vsel %vm1461, %v3437, %v2795
      %v3470 = vsel %vm1461, %v3438, %v2797
      %v3471 = vsel %vm1461, %v3439, %v2799
      %v3472 = vsel %vm1527, %v3440, %v2833
      %v3473 = vsel %vm1527, %v3441, %v2835
      %v3474 = vsel %vm1527, %v3442, %v2837
      %v3475 = vsel %vm1527, %v3443, %v2839
      %v3476 = vsel %vm1527, %v3444, %v2841
      %v3477 = vsel %vm1527, %v3445, %v2843
      %v3478 = vsel %vm1527, %v3446, %v2845
      %v3479 = vsel %vm1527, %v3447, %v2847
      %v3480 = vsel %vm1527, %v3448, %v2849
      %v3481 = vsel %vm1527, %v3449, %v2851
      %v3482 = vsel %vm1527, %v3450, %v2853
      %v3483 = vsel %vm1527, %v3451, %v2855
      %v3484 = vsel %vm1527, %v3452, %v2857
      %v3485 = vsel %vm1527, %v3453, %v2859
      %v3486 = vsel %vm1527, %v3454, %v2861
      %v3487 = vsel %vm1527, %v3455, %v2863
      %v3488 = vsel %vm1527, %v3456, %v2865
      %v3489 = vsel %vm1527, %v3457, %v2867
      %v3490 = vsel %vm1527, %v3458, %v2869
      %v3491 = vsel %vm1527, %v3459, %v2871
      %v3492 = vsel %vm1527, %v3460, %v2873
      %v3493 = vsel %vm1527, %v3461, %v2875
      %v3494 = vsel %vm1527, %v3462, %v2877
      %v3495 = vsel %vm1527, %v3463, %v2879
      %v3496 = vsel %vm1527, %v3464, %v2881
      %v3497 = vsel %vm1527, %v3465, %v2883
      %v3498 = vsel %vm1527, %v3466, %v2885
      %v3499 = vsel %vm1527, %v3467, %v2887
      %v3500 = vsel %vm1527, %v3468, %v2889
      %v3501 = vsel %vm1527, %v3469, %v2891
      %v3502 = vsel %vm1527, %v3470, %v2893
      %v3503 = vsel %vm1527, %v3471, %v2895
      %v3504 = vsel %vm1593, %v3472, %v2929
      %v3505 = vsel %vm1593, %v3473, %v2931
      %v3506 = vsel %vm1593, %v3474, %v2933
      %v3507 = vsel %vm1593, %v3475, %v2935
      %v3508 = vsel %vm1593, %v3476, %v2937
      %v3509 = vsel %vm1593, %v3477, %v2939
      %v3510 = vsel %vm1593, %v3478, %v2941
      %v3511 = vsel %vm1593, %v3479, %v2943
      %v3512 = vsel %vm1593, %v3480, %v2945
      %v3513 = vsel %vm1593, %v3481, %v2947
      %v3514 = vsel %vm1593, %v3482, %v2949
      %v3515 = vsel %vm1593, %v3483, %v2951
      %v3516 = vsel %vm1593, %v3484, %v2953
      %v3517 = vsel %vm1593, %v3485, %v2955
      %v3518 = vsel %vm1593, %v3486, %v2957
      %v3519 = vsel %vm1593, %v3487, %v2959
      %v3520 = vsel %vm1593, %v3488, %v2961
      %v3521 = vsel %vm1593, %v3489, %v2963
      %v3522 = vsel %vm1593, %v3490, %v2965
      %v3523 = vsel %vm1593, %v3491, %v2967
      %v3524 = vsel %vm1593, %v3492, %v2969
      %v3525 = vsel %vm1593, %v3493, %v2971
      %v3526 = vsel %vm1593, %v3494, %v2973
      %v3527 = vsel %vm1593, %v3495, %v2975
      %v3528 = vsel %vm1593, %v3496, %v2977
      %v3529 = vsel %vm1593, %v3497, %v2979
      %v3530 = vsel %vm1593, %v3498, %v2981
      %v3531 = vsel %vm1593, %v3499, %v2983
      %v3532 = vsel %vm1593, %v3500, %v2985
      %v3533 = vsel %vm1593, %v3501, %v2987
      %v3534 = vsel %vm1593, %v3502, %v2989
      %v3535 = vsel %vm1593, %v3503, %v2991
      %vm3536 = vcmask 326656
      %v3537 = vsel %vm3536, %v3504, %v3025
      %v3538 = vsel %vm3536, %v3505, %v3027
      %v3539 = vsel %vm3536, %v3506, %v3029
      %v3540 = vsel %vm3536, %v3507, %v3031
      %v3541 = vsel %vm3536, %v3508, %v3033
      %v3542 = vsel %vm3536, %v3509, %v3035
      %v3543 = vsel %vm3536, %v3510, %v3037
      %v3544 = vsel %vm3536, %v3511, %v3039
      %v3545 = vsel %vm3536, %v3512, %v3041
      %v3546 = vsel %vm3536, %v3513, %v3043
      %v3547 = vsel %vm3536, %v3514, %v3045
      %v3548 = vsel %vm3536, %v3515, %v3047
      %v3549 = vsel %vm3536, %v3516, %v3049
      %v3550 = vsel %vm3536, %v3517, %v3051
      %v3551 = vsel %vm3536, %v3518, %v3053
      %v3552 = vsel %vm3536, %v3519, %v3055
      %v3553 = vsel %vm3536, %v3520, %v3057
      %v3554 = vsel %vm3536, %v3521, %v3059
      %v3555 = vsel %vm3536, %v3522, %v3061
      %v3556 = vsel %vm3536, %v3523, %v3063
      %v3557 = vsel %vm3536, %v3524, %v3065
      %v3558 = vsel %vm3536, %v3525, %v3067
      %v3559 = vsel %vm3536, %v3526, %v3069
      %v3560 = vsel %vm3536, %v3527, %v3071
      %v3561 = vsel %vm3536, %v3528, %v3073
      %v3562 = vsel %vm3536, %v3529, %v3075
      %v3563 = vsel %vm3536, %v3530, %v3077
      %v3564 = vsel %vm3536, %v3531, %v3079
      %v3565 = vsel %vm3536, %v3532, %v3081
      %v3566 = vsel %vm3536, %v3533, %v3083
      %v3567 = vsel %vm3536, %v3534, %v3085
      %v3568 = vsel %vm3536, %v3535, %v3087
      %vm3569 = vcmask 392192
      %v3570 = vsel %vm3569, %v3537, %v3121
      %v3571 = vsel %vm3569, %v3538, %v3123
      %v3572 = vsel %vm3569, %v3539, %v3125
      %v3573 = vsel %vm3569, %v3540, %v3127
      %v3574 = vsel %vm3569, %v3541, %v3129
      %v3575 = vsel %vm3569, %v3542, %v3131
      %v3576 = vsel %vm3569, %v3543, %v3133
      %v3577 = vsel %vm3569, %v3544, %v3135
      %v3578 = vsel %vm3569, %v3545, %v3137
      %v3579 = vsel %vm3569, %v3546, %v3139
      %v3580 = vsel %vm3569, %v3547, %v3141
      %v3581 = vsel %vm3569, %v3548, %v3143
      %v3582 = vsel %vm3569, %v3549, %v3145
      %v3583 = vsel %vm3569, %v3550, %v3147
      %v3584 = vsel %vm3569, %v3551, %v3149
      %v3585 = vsel %vm3569, %v3552, %v3151
      %v3586 = vsel %vm3569, %v3553, %v3153
      %v3587 = vsel %vm3569, %v3554, %v3155
      %v3588 = vsel %vm3569, %v3555, %v3157
      %v3589 = vsel %vm3569, %v3556, %v3159
      %v3590 = vsel %vm3569, %v3557, %v3161
      %v3591 = vsel %vm3569, %v3558, %v3163
      %v3592 = vsel %vm3569, %v3559, %v3165
      %v3593 = vsel %vm3569, %v3560, %v3167
      %v3594 = vsel %vm3569, %v3561, %v3169
      %v3595 = vsel %vm3569, %v3562, %v3171
      %v3596 = vsel %vm3569, %v3563, %v3173
      %v3597 = vsel %vm3569, %v3564, %v3175
      %v3598 = vsel %vm3569, %v3565, %v3177
      %v3599 = vsel %vm3569, %v3566, %v3179
      %v3600 = vsel %vm3569, %v3567, %v3181
      %v3601 = vsel %vm3569, %v3568, %v3183
      %vm3602 = vcmask 457728
      %v3603 = vsel %vm3602, %v3570, %v3217
      %v3604 = vsel %vm3602, %v3571, %v3219
      %v3605 = vsel %vm3602, %v3572, %v3221
      %v3606 = vsel %vm3602, %v3573, %v3223
      %v3607 = vsel %vm3602, %v3574, %v3225
      %v3608 = vsel %vm3602, %v3575, %v3227
      %v3609 = vsel %vm3602, %v3576, %v3229
      %v3610 = vsel %vm3602, %v3577, %v3231
      %v3611 = vsel %vm3602, %v3578, %v3233
      %v3612 = vsel %vm3602, %v3579, %v3235
      %v3613 = vsel %vm3602, %v3580, %v3237
      %v3614 = vsel %vm3602, %v3581, %v3239
      %v3615 = vsel %vm3602, %v3582, %v3241
      %v3616 = vsel %vm3602, %v3583, %v3243
      %v3617 = vsel %vm3602, %v3584, %v3245
      %v3618 = vsel %vm3602, %v3585, %v3247
      %v3619 = vsel %vm3602, %v3586, %v3249
      %v3620 = vsel %vm3602, %v3587, %v3251
      %v3621 = vsel %vm3602, %v3588, %v3253
      %v3622 = vsel %vm3602, %v3589, %v3255
      %v3623 = vsel %vm3602, %v3590, %v3257
      %v3624 = vsel %vm3602, %v3591, %v3259
      %v3625 = vsel %vm3602, %v3592, %v3261
      %v3626 = vsel %vm3602, %v3593, %v3263
      %v3627 = vsel %vm3602, %v3594, %v3265
      %v3628 = vsel %vm3602, %v3595, %v3267
      %v3629 = vsel %vm3602, %v3596, %v3269
      %v3630 = vsel %vm3602, %v3597, %v3271
      %v3631 = vsel %vm3602, %v3598, %v3273
      %v3632 = vsel %vm3602, %v3599, %v3275
      %v3633 = vsel %vm3602, %v3600, %v3277
      %v3634 = vsel %vm3602, %v3601, %v3279
      %vm3635 = vcmask 523264
      %v3636 = vsel %vm3635, %v3603, %v3313
      %v3637 = vsel %vm3635, %v3604, %v3315
      %v3638 = vsel %vm3635, %v3605, %v3317
      %v3639 = vsel %vm3635, %v3606, %v3319
      %v3640 = vsel %vm3635, %v3607, %v3321
      %v3641 = vsel %vm3635, %v3608, %v3323
      %v3642 = vsel %vm3635, %v3609, %v3325
      %v3643 = vsel %vm3635, %v3610, %v3327
      %v3644 = vsel %vm3635, %v3611, %v3329
      %v3645 = vsel %vm3635, %v3612, %v3331
      %v3646 = vsel %vm3635, %v3613, %v3333
      %v3647 = vsel %vm3635, %v3614, %v3335
      %v3648 = vsel %vm3635, %v3615, %v3337
      %v3649 = vsel %vm3635, %v3616, %v3339
      %v3650 = vsel %vm3635, %v3617, %v3341
      %v3651 = vsel %vm3635, %v3618, %v3343
      %v3652 = vsel %vm3635, %v3619, %v3345
      %v3653 = vsel %vm3635, %v3620, %v3347
      %v3654 = vsel %vm3635, %v3621, %v3349
      %v3655 = vsel %vm3635, %v3622, %v3351
      %v3656 = vsel %vm3635, %v3623, %v3353
      %v3657 = vsel %vm3635, %v3624, %v3355
      %v3658 = vsel %vm3635, %v3625, %v3357
      %v3659 = vsel %vm3635, %v3626, %v3359
      %v3660 = vsel %vm3635, %v3627, %v3361
      %v3661 = vsel %vm3635, %v3628, %v3363
      %v3662 = vsel %vm3635, %v3629, %v3365
      %v3663 = vsel %vm3635, %v3630, %v3367
      %v3664 = vsel %vm3635, %v3631, %v3369
      %v3665 = vsel %vm3635, %v3632, %v3371
      %v3666 = vsel %vm3635, %v3633, %v3373
      %v3667 = vsel %vm3635, %v3634, %v3375
      %v3668 = vld [vmem:[%s4] sm:$0xff]
      %v3669 = vld [vmem:[%s4 + $0x8] sm:$0xff]
      %v3670 = vld [vmem:[%s4 + $0x10] sm:$0xff]
      %v3671 = vld [vmem:[%s4 + $0x18] sm:$0xff]
      %v3672 = vld [vmem:[%s4 + $0x20] sm:$0xff]
      %v3673 = vld [vmem:[%s4 + $0x28] sm:$0xff]
      %v3674 = vld [vmem:[%s4 + $0x30] sm:$0xff]
      %v3675 = vld [vmem:[%s4 + $0x38] sm:$0xff]
      %v3676 = vld [vmem:[%s4 + $0x40] sm:$0xff]
      %v3677 = vld [vmem:[%s5] sm:$0x1]
      %v3679 = vlaneseq
      %v3680 = vshrl.u32 %v3679, 7
      %v3681 = vsub.s32 0, %v3680
      %v3682 = vrot.slane %v3677, %v3681
      %vm3684 = vcmask 588800
      %v3686 = vsel %vm3684, %v3636, 0
      %v3689 = vsel %vm3684, %v3637, 0
      %v3692 = vsel %vm3684, %v3638, 0
      %v3695 = vsel %vm3684, %v3639, 0
      %v3698 = vsel %vm3684, %v3640, 0
      %v3701 = vsel %vm3684, %v3641, 0
      %v3704 = vsel %vm3684, %v3642, 0
      %v3707 = vsel %vm3684, %v3643, 0
      %v3710 = vsel %vm3684, %v3644, 0
      %v3713 = vsel %vm3684, %v3645, 0
      %v3716 = vsel %vm3684, %v3646, 0
      %v3719 = vsel %vm3684, %v3647, 0
      %v3722 = vsel %vm3684, %v3648, 0
      %v3725 = vsel %vm3684, %v3649, 0
      %v3728 = vsel %vm3684, %v3650, 0
      %v3731 = vsel %vm3684, %v3651, 0
      %v3734 = vsel %vm3684, %v3652, 0
      %v3737 = vsel %vm3684, %v3653, 0
      %v3740 = vsel %vm3684, %v3654, 0
      %v3743 = vsel %vm3684, %v3655, 0
      %v3746 = vsel %vm3684, %v3656, 0
      %v3749 = vsel %vm3684, %v3657, 0
      %v3752 = vsel %vm3684, %v3658, 0
      %v3755 = vsel %vm3684, %v3659, 0
      %v3758 = vsel %vm3684, %v3660, 0
      %v3761 = vsel %vm3684, %v3661, 0
      %v3764 = vsel %vm3684, %v3662, 0
      %v3767 = vsel %vm3684, %v3663, 0
      %v3770 = vsel %vm3684, %v3664, 0
      %v3773 = vsel %vm3684, %v3665, 0
      %v3776 = vsel %vm3684, %v3666, 0
      %v3779 = vsel %vm3684, %v3667, 0
      %3781 = vmatprep.subr.mxu0 0.0
      %3782 = vmatpush1.msra.mxu0 %v3668
      %3783 = vmatprep.subr.mxu0 0.0
      %3784 = vmatpush1.msra.mxu0 %v3669
      %3785 = vmatprep.subr.mxu0 0.0
      %3786 = vmatpush1.msra.mxu0 %v3670
      %3787 = vmatprep.subr.mxu0 0.0
      %3788 = vmatpush1.msra.mxu0 %v3671
      %3789 = vmatprep.subr.mxu0 0.0
      %3790 = vmatpush1.msra.mxu0 %v3672
      %3791 = vmatprep.subr.mxu0 0.0
      %3792 = vmatpush1.msra.mxu0 %v3673
      %3793 = vmatprep.subr.mxu0 0.0
      %3794 = vmatpush1.msra.mxu0 %v3674
      %3795 = vmatprep.subr.mxu0 0.0
      %3796 = vmatpush1.msra.mxu0 %v3675
      %3797 = vmatprep.subr.mxu0 0.0
      %3798 = vmatpush1.msra.mxu0 %v3676
      %3799 = vmatprep.subr.mxu0 0.0
      %3800 = vmatpush1.msra.mxu0 0.0
      %3801 = vmatprep.subr.mxu0 0.0
      %3802 = vmatpush1.msra.mxu0 0.0
      %3803 = vmatprep.subr.mxu0 0.0
      %3804 = vmatpush1.msra.mxu0 0.0
      %3805 = vmatprep.subr.mxu0 0.0
      %3806 = vmatpush1.msra.mxu0 0.0
      %3807 = vmatprep.subr.mxu0 0.0
      %3808 = vmatpush1.msra.mxu0 0.0
      %3809 = vmatprep.subr.mxu0 0.0
      %3810 = vmatpush1.msra.mxu0 0.0
      %3811 = vmatprep.subr.mxu0 0.0
      %3812 = vmatpush1.msra.mxu0 0.0
      %3813 = vmatprep.subr.mxu0 0.0
      %3814 = vmatpush1.msra.mxu0 0.0
      %3815 = vmatprep.subr.mxu0 0.0
      %3816 = vmatpush1.msra.mxu0 0.0
      %3817 = vmatprep.subr.mxu0 0.0
      %3818 = vmatpush1.msra.mxu0 0.0
      %3819 = vmatprep.subr.mxu0 0.0
      %3820 = vmatpush1.msra.mxu0 0.0
      %3821 = vmatprep.subr.mxu0 0.0
      %3822 = vmatpush1.msra.mxu0 0.0
      %3823 = vmatprep.subr.mxu0 0.0
      %3824 = vmatpush1.msra.mxu0 0.0
      %3825 = vmatprep.subr.mxu0 0.0
      %3826 = vmatpush1.msra.mxu0 0.0
      %3827 = vmatprep.subr.mxu0 0.0
      %3828 = vmatpush1.msra.mxu0 0.0
      %3829 = vmatprep.subr.mxu0 0.0
      %3830 = vmatpush1.msra.mxu0 0.0
      %3831 = vmatprep.subr.mxu0 0.0
      %3832 = vmatpush1.msra.mxu0 0.0
      %3833 = vmatprep.subr.mxu0 0.0
      %3834 = vmatpush1.msra.mxu0 0.0
      %3835 = vmatprep.subr.mxu0 0.0
      %3836 = vmatpush1.msra.mxu0 0.0
      %3837 = vmatprep.subr.mxu0 0.0
      %3838 = vmatpush1.msra.mxu0 0.0
      %3839 = vmatprep.subr.mxu0 0.0
      %3840 = vmatpush1.msra.mxu0 0.0
      %3841 = vmatprep.subr.mxu0 0.0
      %3842 = vmatpush1.msra.mxu0 0.0
      %3843 = vmatprep.subr.mxu0 0.0
      %3844 = vmatpush1.msra.mxu0 0.0
      %3845 = vmatprep.mubr.f32.mxu0 0.0
      %3846 = vmatmul.mubr.f32.gmra.mrb[0].mxu0 %v3686
      %v3847 = vpop.f32.mrb[0].mxu0
      %v3848 = vadd.f32 %v3682, %v3847
      %v3849 = vpop.f32.mrb[0].mxu0
      %3850 = vmatprep.mubr.f32.mxu0 0.0
      %3851 = vmatmul.mubr.f32.gmra.mrb[0].mxu0 %v3689
      %v3852 = vpop.f32.mrb[0].mxu0
      %v3853 = vadd.f32 %v3682, %v3852
      %v3854 = vpop.f32.mrb[0].mxu0
      %3855 = vmatprep.mubr.f32.mxu0 0.0
      %3856 = vmatmul.mubr.f32.gmra.mrb[0].mxu0 %v3692
      %v3857 = vpop.f32.mrb[0].mxu0
      %v3858 = vadd.f32 %v3682, %v3857
      %v3859 = vpop.f32.mrb[0].mxu0
      %3860 = vmatprep.mubr.f32.mxu0 0.0
      %3861 = vmatmul.mubr.f32.gmra.mrb[0].mxu0 %v3695
      %v3862 = vpop.f32.mrb[0].mxu0
      %v3863 = vadd.f32 %v3682, %v3862
      %v3864 = vpop.f32.mrb[0].mxu0
      %3865 = vmatprep.mubr.f32.mxu0 0.0
      %3866 = vmatmul.mubr.f32.gmra.mrb[0].mxu0 %v3698
      %v3867 = vpop.f32.mrb[0].mxu0
      %v3868 = vadd.f32 %v3682, %v3867
      %v3869 = vpop.f32.mrb[0].mxu0
      %3870 = vmatprep.mubr.f32.mxu0 0.0
      %3871 = vmatmul.mubr.f32.gmra.mrb[0].mxu0 %v3701
      %v3872 = vpop.f32.mrb[0].mxu0
      %v3873 = vadd.f32 %v3682, %v3872
      %v3874 = vpop.f32.mrb[0].mxu0
      %3875 = vmatprep.mubr.f32.mxu0 0.0
      %3876 = vmatmul.mubr.f32.gmra.mrb[0].mxu0 %v3704
      %v3877 = vpop.f32.mrb[0].mxu0
      %v3878 = vadd.f32 %v3682, %v3877
      %v3879 = vpop.f32.mrb[0].mxu0
      %3880 = vmatprep.mubr.f32.mxu0 0.0
      %3881 = vmatmul.mubr.f32.gmra.mrb[0].mxu0 %v3707
      %v3882 = vpop.f32.mrb[0].mxu0
      %v3883 = vadd.f32 %v3682, %v3882
      %v3884 = vpop.f32.mrb[0].mxu0
      %3885 = vmatprep.mubr.f32.mxu0 0.0
      %3886 = vmatmul.mubr.f32.gmra.mrb[0].mxu0 %v3710
      %v3887 = vpop.f32.mrb[0].mxu0
      %v3888 = vadd.f32 %v3682, %v3887
      %v3889 = vpop.f32.mrb[0].mxu0
      %3890 = vmatprep.mubr.f32.mxu0 0.0
      %3891 = vmatmul.mubr.f32.gmra.mrb[0].mxu0 %v3713
      %v3892 = vpop.f32.mrb[0].mxu0
      %v3893 = vadd.f32 %v3682, %v3892
      %v3894 = vpop.f32.mrb[0].mxu0
      %3895 = vmatprep.mubr.f32.mxu0 0.0
      %3896 = vmatmul.mubr.f32.gmra.mrb[0].mxu0 %v3716
      %v3897 = vpop.f32.mrb[0].mxu0
      %v3898 = vadd.f32 %v3682, %v3897
      %v3899 = vpop.f32.mrb[0].mxu0
      %3900 = vmatprep.mubr.f32.mxu0 0.0
      %3901 = vmatmul.mubr.f32.gmra.mrb[0].mxu0 %v3719
      %v3902 = vpop.f32.mrb[0].mxu0
      %v3903 = vadd.f32 %v3682, %v3902
      %v3904 = vpop.f32.mrb[0].mxu0
      %3905 = vmatprep.mubr.f32.mxu0 0.0
      %3906 = vmatmul.mubr.f32.gmra.mrb[0].mxu0 %v3722
      %v3907 = vpop.f32.mrb[0].mxu0
      %v3908 = vadd.f32 %v3682, %v3907
      %v3909 = vpop.f32.mrb[0].mxu0
      %3910 = vmatprep.mubr.f32.mxu0 0.0
      %3911 = vmatmul.mubr.f32.gmra.mrb[0].mxu0 %v3725
      %v3912 = vpop.f32.mrb[0].mxu0
      %v3913 = vadd.f32 %v3682, %v3912
      %v3914 = vpop.f32.mrb[0].mxu0
      %3915 = vmatprep.mubr.f32.mxu0 0.0
      %3916 = vmatmul.mubr.f32.gmra.mrb[0].mxu0 %v3728
      %v3917 = vpop.f32.mrb[0].mxu0
      %v3918 = vadd.f32 %v3682, %v3917
      %v3919 = vpop.f32.mrb[0].mxu0
      %3920 = vmatprep.mubr.f32.mxu0 0.0
      %3921 = vmatmul.mubr.f32.gmra.mrb[0].mxu0 %v3731
      %v3922 = vpop.f32.mrb[0].mxu0
      %v3923 = vadd.f32 %v3682, %v3922
      %v3924 = vpop.f32.mrb[0].mxu0
      %3925 = vmatprep.mubr.f32.mxu0 0.0
      %3926 = vmatmul.mubr.f32.gmra.mrb[0].mxu0 %v3734
      %v3927 = vpop.f32.mrb[0].mxu0
      %v3928 = vadd.f32 %v3682, %v3927
      %v3929 = vpop.f32.mrb[0].mxu0
      %3930 = vmatprep.mubr.f32.mxu0 0.0
      %3931 = vmatmul.mubr.f32.gmra.mrb[0].mxu0 %v3737
      %v3932 = vpop.f32.mrb[0].mxu0
      %v3933 = vadd.f32 %v3682, %v3932
      %v3934 = vpop.f32.mrb[0].mxu0
      %3935 = vmatprep.mubr.f32.mxu0 0.0
      %3936 = vmatmul.mubr.f32.gmra.mrb[0].mxu0 %v3740
      %v3937 = vpop.f32.mrb[0].mxu0
      %v3938 = vadd.f32 %v3682, %v3937
      %v3939 = vpop.f32.mrb[0].mxu0
      %3940 = vmatprep.mubr.f32.mxu0 0.0
      %3941 = vmatmul.mubr.f32.gmra.mrb[0].mxu0 %v3743
      %v3942 = vpop.f32.mrb[0].mxu0
      %v3943 = vadd.f32 %v3682, %v3942
      %v3944 = vpop.f32.mrb[0].mxu0
      %3945 = vmatprep.mubr.f32.mxu0 0.0
      %3946 = vmatmul.mubr.f32.gmra.mrb[0].mxu0 %v3746
      %v3947 = vpop.f32.mrb[0].mxu0
      %v3948 = vadd.f32 %v3682, %v3947
      %v3949 = vpop.f32.mrb[0].mxu0
      %3950 = vmatprep.mubr.f32.mxu0 0.0
      %3951 = vmatmul.mubr.f32.gmra.mrb[0].mxu0 %v3749
      %v3952 = vpop.f32.mrb[0].mxu0
      %v3953 = vadd.f32 %v3682, %v3952
      %v3954 = vpop.f32.mrb[0].mxu0
      %3955 = vmatprep.mubr.f32.mxu0 0.0
      %3956 = vmatmul.mubr.f32.gmra.mrb[0].mxu0 %v3752
      %v3957 = vpop.f32.mrb[0].mxu0
      %v3958 = vadd.f32 %v3682, %v3957
      %v3959 = vpop.f32.mrb[0].mxu0
      %3960 = vmatprep.mubr.f32.mxu0 0.0
      %3961 = vmatmul.mubr.f32.gmra.mrb[0].mxu0 %v3755
      %v3962 = vpop.f32.mrb[0].mxu0
      %v3963 = vadd.f32 %v3682, %v3962
      %v3964 = vpop.f32.mrb[0].mxu0
      %3965 = vmatprep.mubr.f32.mxu0 0.0
      %3966 = vmatmul.mubr.f32.gmra.mrb[0].mxu0 %v3758
      %v3967 = vpop.f32.mrb[0].mxu0
      %v3968 = vadd.f32 %v3682, %v3967
      %v3969 = vpop.f32.mrb[0].mxu0
      %3970 = vmatprep.mubr.f32.mxu0 0.0
      %3971 = vmatmul.mubr.f32.gmra.mrb[0].mxu0 %v3761
      %v3972 = vpop.f32.mrb[0].mxu0
      %v3973 = vadd.f32 %v3682, %v3972
      %v3974 = vpop.f32.mrb[0].mxu0
      %3975 = vmatprep.mubr.f32.mxu0 0.0
      %3976 = vmatmul.mubr.f32.gmra.mrb[0].mxu0 %v3764
      %v3977 = vpop.f32.mrb[0].mxu0
      %v3978 = vadd.f32 %v3682, %v3977
      %v3979 = vpop.f32.mrb[0].mxu0
      %3980 = vmatprep.mubr.f32.mxu0 0.0
      %3981 = vmatmul.mubr.f32.gmra.mrb[0].mxu0 %v3767
      %v3982 = vpop.f32.mrb[0].mxu0
      %v3983 = vadd.f32 %v3682, %v3982
      %v3984 = vpop.f32.mrb[0].mxu0
      %3985 = vmatprep.mubr.f32.mxu0 0.0
      %3986 = vmatmul.mubr.f32.gmra.mrb[0].mxu0 %v3770
      %v3987 = vpop.f32.mrb[0].mxu0
      %v3988 = vadd.f32 %v3682, %v3987
      %v3989 = vpop.f32.mrb[0].mxu0
      %3990 = vmatprep.mubr.f32.mxu0 0.0
      %3991 = vmatmul.mubr.f32.gmra.mrb[0].mxu0 %v3773
      %v3992 = vpop.f32.mrb[0].mxu0
      %v3993 = vadd.f32 %v3682, %v3992
      %v3994 = vpop.f32.mrb[0].mxu0
      %3995 = vmatprep.mubr.f32.mxu0 0.0
      %3996 = vmatmul.mubr.f32.gmra.mrb[0].mxu0 %v3776
      %v3997 = vpop.f32.mrb[0].mxu0
      %v3998 = vadd.f32 %v3682, %v3997
      %v3999 = vpop.f32.mrb[0].mxu0
      %4000 = vmatprep.mubr.f32.mxu0 0.0
      %4001 = vmatmul.mubr.f32.gmra.mrb[0].mxu0 %v3779
      %v4002 = vpop.f32.mrb[0].mxu0
      %v4003 = vadd.f32 %v3682, %v4002
      %v4004 = vpop.f32.mrb[0].mxu0
      %4005 = vdwg.mxu0
      %v4006 = vld [vmem:[%s297] sm:$0xff]
      %v4007 = vld [vmem:[%s297 + $0x8] sm:$0xff]
      %v4008 = vld [vmem:[%s297 + $0x10] sm:$0xff]
      %v4009 = vld [vmem:[%s297 + $0x18] sm:$0xff]
      %v4010 = vld [vmem:[%s297 + $0x20] sm:$0xff]
      %v4011 = vld [vmem:[%s297 + $0x28] sm:$0xff]
      %v4012 = vld [vmem:[%s297 + $0x30] sm:$0xff]
      %v4013 = vld [vmem:[%s297 + $0x38] sm:$0xff]
      %v4014 = vld [vmem:[%s297 + $0x40] sm:$0xff]
      %v4015 = vld [vmem:[%s297 + $0x48] sm:$0xff]
      %v4016 = vld [vmem:[%s297 + $0x50] sm:$0xff]
      %v4017 = vld [vmem:[%s297 + $0x58] sm:$0xff]
      %v4018 = vld [vmem:[%s297 + $0x60] sm:$0xff]
      %v4019 = vld [vmem:[%s297 + $0x68] sm:$0xff]
      %v4020 = vld [vmem:[%s297 + $0x70] sm:$0xff]
      %v4021 = vld [vmem:[%s297 + $0x78] sm:$0xff]
      %v4022 = vld [vmem:[%s297 + $0x80] sm:$0xff]
      %v4023 = vld [vmem:[%s297 + $0x88] sm:$0xff]
      %v4024 = vld [vmem:[%s297 + $0x90] sm:$0xff]
      %v4025 = vld [vmem:[%s297 + $0x98] sm:$0xff]
      %v4026 = vld [vmem:[%s297 + $0xa0] sm:$0xff]
      %v4027 = vld [vmem:[%s297 + $0xa8] sm:$0xff]
      %v4028 = vld [vmem:[%s297 + $0xb0] sm:$0xff]
      %v4029 = vld [vmem:[%s297 + $0xb8] sm:$0xff]
      %v4030 = vld [vmem:[%s297 + $0xc0] sm:$0xff]
      %v4031 = vld [vmem:[%s297 + $0xc8] sm:$0xff]
      %v4032 = vld [vmem:[%s297 + $0xd0] sm:$0xff]
      %v4033 = vld [vmem:[%s297 + $0xd8] sm:$0xff]
      %v4034 = vld [vmem:[%s297 + $0xe0] sm:$0xff]
      %v4035 = vld [vmem:[%s297 + $0xe8] sm:$0xff]
      %v4036 = vld [vmem:[%s297 + $0xf0] sm:$0xff]
      %v4037 = vld [vmem:[%s297 + $0xf8] sm:$0xff]
      %v4038 = vsub.f32 %v3848, %v4006
      %v4039 = vsub.f32 %v3853, %v4007
      %v4040 = vsub.f32 %v3858, %v4008
      %v4041 = vsub.f32 %v3863, %v4009
      %v4042 = vsub.f32 %v3868, %v4010
      %v4043 = vsub.f32 %v3873, %v4011
      %v4044 = vsub.f32 %v3878, %v4012
      %v4045 = vsub.f32 %v3883, %v4013
      %v4046 = vsub.f32 %v3888, %v4014
      %v4047 = vsub.f32 %v3893, %v4015
      %v4048 = vsub.f32 %v3898, %v4016
      %v4049 = vsub.f32 %v3903, %v4017
      %v4050 = vsub.f32 %v3908, %v4018
      %v4051 = vsub.f32 %v3913, %v4019
      %v4052 = vsub.f32 %v3918, %v4020
      %v4053 = vsub.f32 %v3923, %v4021
      %v4054 = vsub.f32 %v3928, %v4022
      %v4055 = vsub.f32 %v3933, %v4023
      %v4056 = vsub.f32 %v3938, %v4024
      %v4057 = vsub.f32 %v3943, %v4025
      %v4058 = vsub.f32 %v3948, %v4026
      %v4059 = vsub.f32 %v3953, %v4027
      %v4060 = vsub.f32 %v3958, %v4028
      %v4061 = vsub.f32 %v3963, %v4029
      %v4062 = vsub.f32 %v3968, %v4030
      %v4063 = vsub.f32 %v3973, %v4031
      %v4064 = vsub.f32 %v3978, %v4032
      %v4065 = vsub.f32 %v3983, %v4033
      %v4066 = vsub.f32 %v3988, %v4034
      %v4067 = vsub.f32 %v3993, %v4035
      %v4068 = vsub.f32 %v3998, %v4036
      %v4069 = vsub.f32 %v4003, %v4037
      %v4070 = vmul.f32 %v4038, %v4038
      %v4071 = vmul.f32 %v4039, %v4039
      %v4072 = vmul.f32 %v4040, %v4040
      %v4073 = vmul.f32 %v4041, %v4041
      %v4074 = vmul.f32 %v4042, %v4042
      %v4075 = vmul.f32 %v4043, %v4043
      %v4076 = vmul.f32 %v4044, %v4044
      %v4077 = vmul.f32 %v4045, %v4045
      %v4078 = vmul.f32 %v4046, %v4046
      %v4079 = vmul.f32 %v4047, %v4047
      %v4080 = vmul.f32 %v4048, %v4048
      %v4081 = vmul.f32 %v4049, %v4049
      %v4082 = vmul.f32 %v4050, %v4050
      %v4083 = vmul.f32 %v4051, %v4051
      %v4084 = vmul.f32 %v4052, %v4052
      %v4085 = vmul.f32 %v4053, %v4053
      %v4086 = vmul.f32 %v4054, %v4054
      %v4087 = vmul.f32 %v4055, %v4055
      %v4088 = vmul.f32 %v4056, %v4056
      %v4089 = vmul.f32 %v4057, %v4057
      %v4090 = vmul.f32 %v4058, %v4058
      %v4091 = vmul.f32 %v4059, %v4059
      %v4092 = vmul.f32 %v4060, %v4060
      %v4093 = vmul.f32 %v4061, %v4061
      %v4094 = vmul.f32 %v4062, %v4062
      %v4095 = vmul.f32 %v4063, %v4063
      %v4096 = vmul.f32 %v4064, %v4064
      %v4097 = vmul.f32 %v4065, %v4065
      %v4098 = vmul.f32 %v4066, %v4066
      %v4099 = vmul.f32 %v4067, %v4067
      %v4100 = vmul.f32 %v4068, %v4068
      %v4101 = vmul.f32 %v4069, %v4069
      %v4102 = vsel %vm1362, %v4070, 0.0
      %v4103 = vsel %vm1362, %v4071, 0.0
      %v4104 = vadd.f32 %v4102, %v4103
      %v4105 = vsel %vm1362, %v4072, 0.0
      %v4106 = vadd.f32 %v4104, %v4105
      %v4107 = vsel %vm1362, %v4073, 0.0
      %v4108 = vadd.f32 %v4106, %v4107
      %v4109 = vsel %vm1362, %v4074, 0.0
      %v4110 = vadd.f32 %v4108, %v4109
      %v4111 = vsel %vm1362, %v4075, 0.0
      %v4112 = vadd.f32 %v4110, %v4111
      %v4113 = vsel %vm1362, %v4076, 0.0
      %v4114 = vadd.f32 %v4112, %v4113
      %v4115 = vsel %vm1362, %v4077, 0.0
      %v4116 = vadd.f32 %v4114, %v4115
      %v4117 = vsel %vm1362, %v4078, 0.0
      %v4118 = vadd.f32 %v4116, %v4117
      %v4119 = vsel %vm1362, %v4079, 0.0
      %v4120 = vadd.f32 %v4118, %v4119
      %v4121 = vsel %vm1362, %v4080, 0.0
      %v4122 = vadd.f32 %v4120, %v4121
      %v4123 = vsel %vm1362, %v4081, 0.0
      %v4124 = vadd.f32 %v4122, %v4123
      %v4125 = vsel %vm1362, %v4082, 0.0
      %v4126 = vadd.f32 %v4124, %v4125
      %v4127 = vsel %vm1362, %v4083, 0.0
      %v4128 = vadd.f32 %v4126, %v4127
      %v4129 = vsel %vm1362, %v4084, 0.0
      %v4130 = vadd.f32 %v4128, %v4129
      %v4131 = vsel %vm1362, %v4085, 0.0
      %v4132 = vadd.f32 %v4130, %v4131
      %v4133 = vsel %vm1362, %v4086, 0.0
      %v4134 = vadd.f32 %v4132, %v4133
      %v4135 = vsel %vm1362, %v4087, 0.0
      %v4136 = vadd.f32 %v4134, %v4135
      %v4137 = vsel %vm1362, %v4088, 0.0
      %v4138 = vadd.f32 %v4136, %v4137
      %v4139 = vsel %vm1362, %v4089, 0.0
      %v4140 = vadd.f32 %v4138, %v4139
      %v4141 = vsel %vm1362, %v4090, 0.0
      %v4142 = vadd.f32 %v4140, %v4141
      %v4143 = vsel %vm1362, %v4091, 0.0
      %v4144 = vadd.f32 %v4142, %v4143
      %v4145 = vsel %vm1362, %v4092, 0.0
      %v4146 = vadd.f32 %v4144, %v4145
      %v4147 = vsel %vm1362, %v4093, 0.0
      %v4148 = vadd.f32 %v4146, %v4147
      %v4149 = vsel %vm1362, %v4094, 0.0
      %v4150 = vadd.f32 %v4148, %v4149
      %v4151 = vsel %vm1362, %v4095, 0.0
      %v4152 = vadd.f32 %v4150, %v4151
      %v4153 = vsel %vm1362, %v4096, 0.0
      %v4154 = vadd.f32 %v4152, %v4153
      %v4155 = vsel %vm1362, %v4097, 0.0
      %v4156 = vadd.f32 %v4154, %v4155
      %v4157 = vsel %vm1362, %v4098, 0.0
      %v4158 = vadd.f32 %v4156, %v4157
      %v4159 = vsel %vm1362, %v4099, 0.0
      %v4160 = vadd.f32 %v4158, %v4159
      %v4161 = vsel %vm1362, %v4100, 0.0
      %v4162 = vadd.f32 %v4160, %v4161
      %v4163 = vsel %vm1362, %v4101, 0.0
      %v4164 = vadd.f32 %v4162, %v4163
      %4165 = vadd.xlane.f32.xlu0 %v4164
      %v4166 = vpop.xlane.xlu0 %4165
      %v4167 = vrot.slane %v4166, 4
      %v4168 = vadd.f32 %v4166, %v4167
      %v4169 = vrot.slane %v4168, 2
      %v4170 = vadd.f32 %v4168, %v4169
      %v4171 = vrot.slane %v4170, 1
      %v4172 = vadd.f32 %v4170, %v4171
      %s4173 = vtos %v4172
      %v4174 = vstv %s4173
      %v4175 = vadd.f32 %v4174, 0.0
      %4176 = vst.msk [vmem:[%s300] sm:$0x1] %vm2262, %v4175
      %p4177 = scmp.lt.s32.totalorder %s19, 1
      %s4178 = scalar_select %p4177, %s19, 1
      %s4179 = scalar_lea.vmem %s6, %s4178
      %p4180 = scmp.lt.s32.totalorder %s19, 1
      %s4181 = scalar_select %p4180, %s19, 1
      %s4182 = scalar_lea.vmem %s7, %s4181
      // Predicated region
      $region45: #{model_with_loss_forward.1} parent=43 // pred_check
        %p4183 = pneg %p173
      $region46: #{model_with_loss_forward.1} parent=43 // pred_check_branch
        %4185 = sbr.rel (%p4183) target = $region48
      $region47: #{model_with_loss_forward.1} parent=43 // pred_region
        _
      $region48: #{model_with_loss_forward.1} parent=43 // pred_fallthru
        _
      // Predicated region
      $region49: #{model_with_loss_forward.1} parent=43 // pred_check
        %p4186 = pneg %p199
      $region50: #{model_with_loss_forward.1} parent=43 // pred_check_branch
        %4188 = sbr.rel (%p4186) target = $region52
      $region51: #{model_with_loss_forward.1} parent=43 // pred_region
        _
      $region52: #{model_with_loss_forward.1} parent=43 // pred_fallthru
        _
    $region44: #{model_with_loss_forward.1} parent=5 // pred_fallthru
      _
    %p4189 = scmp.le.s32.totalorder 2, %s14
    // Predicated region
    $region53: #{model_with_loss_forward.1} parent=5 // pred_check
      %p4190 = pneg %p4189
    $region54: #{model_with_loss_forward.1} parent=5 // pred_check_branch
      %4192 = sbr.rel (%p4190) target = $region56
    $region55: #{model_with_loss_forward.1} parent=5 // pred_region
      %s4193 = ssub.s32 %s14, 2
      // Predicated region
      $region57: #{model_with_loss_forward.1} parent=55 // pred_check
        %p4194 = pneg %p179
      $region58: #{model_with_loss_forward.1} parent=55 // pred_check_branch
        %4196 = sbr.rel (%p4194) target = $region60
      $region59: #{model_with_loss_forward.1} parent=55 // pred_region
        %p4197 = scmp.lt.s32.totalorder %s20, 1
        %s4198 = scalar_select %p4197, %s20, 1
        %s4199 = scalar_lea.vmem %s6, %s4198
      $region60: #{model_with_loss_forward.1} parent=55 // pred_fallthru
        _
      // Predicated region
      $region61: #{model_with_loss_forward.1} parent=55 // pred_check
        %p4200 = pneg %p205
      $region62: #{model_with_loss_forward.1} parent=55 // pred_check_branch
        %4202 = sbr.rel (%p4200) target = $region64
      $region63: #{model_with_loss_forward.1} parent=55 // pred_region
        %p4203 = scmp.lt.s32.totalorder %s20, 1
        %s4204 = scalar_select %p4203, %s20, 1
        %s4205 = scalar_lea.vmem %s7, %s4204
      $region64: #{model_with_loss_forward.1} parent=55 // pred_fallthru
        _
    $region56: #{model_with_loss_forward.1} parent=5 // pred_fallthru
      _
  $region6: #{model_with_loss_forward.1} parent=0 // loop_footer
    %s18 = sadd.s32 1, %s14
  $region7: #{model_with_loss_forward.1} parent=0 // loop_footer_branch
    %13 = sbr.rel target = $region3
  $region8: #{model_with_loss_forward.1} parent=0 // loop_exit
    _

</llo_original>
